<compile_context>
chip_gen: v5e
topology: v5e:2x2
jax: 0.10.0
libtpu: 0.0.40
codegen_flags: <defaults>
</compile_context>

<pallas_src>
import jax
import jax.numpy as jnp
import numpy as np
from jax.experimental import pallas as pl
from jax.experimental.pallas import tpu as pltpu  # noqa: F401  (kept for future tuning knobs)


def _round_up(x, m):
    return (x + m - 1) // m * m


# ----------------------------------------------------------------------------
# Gate math (traced inside the kernel).  `gates` is the full (B, 4H)
# pre-activation block in PyTorch order [i, f, g, o].
# One sigmoid pass over the whole block; the g-gate lanes are pre-scaled by 2
# and post-transformed with 2*s - 1 (tanh(x) = 2*sigmoid(2x) - 1).
# The masks `pre` / `post_off` are hoisted and computed once per kernel.
# ----------------------------------------------------------------------------
def _apply_gates(gates, c, pre, post_off):
    H = c.shape[-1]
    s = jax.nn.sigmoid(gates * pre)
    act = s * pre + post_off
    i = act[:, 0 * H:1 * H]
    f = act[:, 1 * H:2 * H]
    g = act[:, 2 * H:3 * H]
    o = act[:, 3 * H:4 * H]
    c_new = f * c + i * g
    h_new = o * jnp.tanh(c_new)
    return h_new, c_new


# ----------------------------------------------------------------------------
# Fused encoder + decoder + fc_out kernel: single invocation, no grid.
# All weights/inputs resident in VMEM; recurrent state lives in vregs.
# ----------------------------------------------------------------------------
def seq2seq_kernel(exg0_ref,                 # (Tx, B, 4H) encoder x@Wih0 + b0
                   dxg0_ref,                 # (Td, B, 4H) decoder x@Wih0 + b0
                   e_whh0_ref,               # (H, 4H)
                   e_wih1_ref,               # (H, 4H)
                   e_whh1_ref,               # (H, 4H)
                   e_b1_ref,                 # (1, 4H)
                   d_whh0_ref,               # (H, 4H)
                   d_wih1_ref,               # (H, 4H)
                   d_whh1_ref,               # (H, 4H)
                   d_b1_ref,                 # (1, 4H)
                   wfc_ref,                  # (H, Vp)
                   bfc_ref,                  # (1, Vp)
                   logits_ref):              # (Td*B, Vp) flat output slab
    Tx, B, G = exg0_ref.shape
    Td = dxg0_ref.shape[0]
    H = e_whh0_ref.shape[0]

    # ---- constants hoisted out of both time loops (computed exactly once) ---
    lane = jax.lax.broadcasted_iota(jnp.int32, (B, G), 1)
    is_g = (lane >= 2 * H) & (lane < 3 * H)
    pre = jnp.where(is_g, 2.0, 1.0).astype(jnp.float32)       # g-lane pre-scale
    post_off = jnp.where(is_g, -1.0, 0.0).astype(jnp.float32)  # g-lane offset

    e_whh0 = e_whh0_ref[...]
    e_wih1 = e_wih1_ref[...]
    e_whh1 = e_whh1_ref[...]
    e_b1 = jnp.broadcast_to(e_b1_ref[...], (B, G))
    d_whh0 = d_whh0_ref[...]
    d_wih1 = d_wih1_ref[...]
    d_whh1 = d_whh1_ref[...]
    d_b1 = jnp.broadcast_to(d_b1_ref[...], (B, G))

    h0 = jnp.zeros((B, H), jnp.float32)
    c0 = jnp.zeros((B, H), jnp.float32)
    h1 = jnp.zeros((B, H), jnp.float32)
    c1 = jnp.zeros((B, H), jnp.float32)

    # --------------------------- encoder -------------------------------------
    # Only the truly recurrent matmuls are inside the loop (input projection
    # was hoisted to the wrapper).  Tx is tiny and static -> full unroll.
    for t in range(Tx):
        g0 = exg0_ref[t] + jnp.dot(h0, e_whh0, preferred_element_type=jnp.float32)
        h0, c0 = _apply_gates(g0, c0, pre, post_off)
        # inter-layer dropout (p=0.2) is identity in eval mode
        g1 = (jnp.dot(h0, e_wih1, preferred_element_type=jnp.float32)
              + jnp.dot(h1, e_whh1, preferred_element_type=jnp.float32) + e_b1)
        h1, c1 = _apply_gates(g1, c1, pre, post_off)

    # --------------------------- decoder -------------------------------------
    # Encoder-final state flows directly into the decoder in vregs.
    h1_steps = []
    for t in range(Td):
        g0 = dxg0_ref[t] + jnp.dot(h0, d_whh0, preferred_element_type=jnp.float32)
        h0, c0 = _apply_gates(g0, c0, pre, post_off)
        g1 = (jnp.dot(h0, d_wih1, preferred_element_type=jnp.float32)
              + jnp.dot(h1, d_whh1, preferred_element_type=jnp.float32) + d_b1)
        h1, c1 = _apply_gates(g1, c1, pre, post_off)
        h1_steps.append(h1)

    # --------------------------- fc_out --------------------------------------
    # One batched GEMM over all decode steps; single lane-dense store.
    h1_all = jnp.concatenate(h1_steps, axis=0)                       # (Td*B, H)
    logits = jnp.dot(h1_all, wfc_ref[...], preferred_element_type=jnp.float32)
    logits_ref[...] = logits + bfc_ref[...]


def seq2seq_pallas(exg0, dxg0, e_whh0, e_wih1, e_whh1, e_b1,
                   d_whh0, d_wih1, d_whh1, d_b1, wfc, bfc):
    Td, B, _ = dxg0.shape
    Vp = wfc.shape[1]
    return pl.pallas_call(
        seq2seq_kernel,
        out_shape=jax.ShapeDtypeStruct((Td * B, Vp), jnp.float32),
    )(exg0, dxg0, e_whh0, e_wih1, e_whh1, e_b1,
      d_whh0, d_wih1, d_whh1, d_b1, wfc, bfc)


# ----------------------------------------------------------------------------
# Full Seq2SeqModel.forward
# ----------------------------------------------------------------------------
def seq2seq_forward(params, x_tokens, y_tokens):
    enc, dec = params["encoder"], params["decoder"]
    B, Ty = y_tokens.shape
    V = dec["fc_w_t"].shape[1]

    # Pad batch to a full sublane group (8) and vocab to a full lane tile (128)
    # so vregs are dense and the output store is an unmasked vst.
    Bp = _round_up(B, 8)
    Vp = _round_up(V, 128)

    xp = jnp.pad(x_tokens, ((0, Bp - B), (0, 0)))
    yp = jnp.pad(y_tokens, ((0, Bp - B), (0, 0)))

    # ---- hoisted layer-0 input projections (XLA glue), directly in (T,B,4H) --
    emb = jnp.take(enc["embedding"], xp, axis=0).astype(jnp.float32)        # (Bp,Tx,E)
    exg0 = jnp.einsum("bte,eg->tbg", emb, enc["wih0_t"]) + enc["b0"]        # (Tx,Bp,4H)

    dec_tokens = yp[:, :Ty - 1]                                             # teacher forcing
    demb = jnp.take(dec["embedding"], dec_tokens, axis=0).astype(jnp.float32)
    dxg0 = jnp.einsum("bte,eg->tbg", demb, dec["wih0_t"]) + dec["b0"]       # (Ty-1,Bp,4H)

    wfc = jnp.pad(dec["fc_w_t"], ((0, 0), (0, Vp - V)))
    bfc = jnp.pad(dec["fc_b"], ((0, 0), (0, Vp - V)))

    flat = seq2seq_pallas(exg0, dxg0,
                          enc["whh0_t"], enc["wih1_t"], enc["whh1_t"], enc["b1"],
                          dec["whh0_t"], dec["wih1_t"], dec["whh1_t"], dec["b1"],
                          wfc, bfc)                                         # (Td*Bp, Vp)

    logits = flat.reshape(Ty - 1, Bp, Vp)[:, :B, :V]                        # (Ty-1,B,V)
    preds = jnp.concatenate(
        [jnp.zeros((B, 1, V), jnp.float32), jnp.transpose(logits, (1, 0, 2))], axis=1)
    return preds                                                            # (B,Ty,V)


seq2seq_forward_jit = jax.jit(seq2seq_forward)


# ----------------------------------------------------------------------------
# Pure-JAX reference for verification
# ----------------------------------------------------------------------------
def _ref_cell(x, h, c, wih_t, whh_t, b):
    H = h.shape[-1]
    g = x @ wih_t + h @ whh_t + b
    i = jax.nn.sigmoid(g[:, :H])
    f = jax.nn.sigmoid(g[:, H:2 * H])
    gg = jnp.tanh(g[:, 2 * H:3 * H])
    o = jax.nn.sigmoid(g[:, 3 * H:])
    c_new = f * c + i * gg
    return o * jnp.tanh(c_new), c_new


def seq2seq_reference(params, x_tokens, y_tokens):
    enc, dec = params["encoder"], params["decoder"]
    B, Ty = y_tokens.shape
    H = enc["whh0_t"].shape[0]
    V = dec["fc_w_t"].shape[1]

    emb = jnp.take(enc["embedding"], x_tokens, axis=0)
    h0 = c0 = h1 = c1 = jnp.zeros((B, H), jnp.float32)
    for t in range(x_tokens.shape[1]):
        h0, c0 = _ref_cell(emb[:, t], h0, c0, enc["wih0_t"], enc["whh0_t"], enc["b0"])
        h1, c1 = _ref_cell(h0, h1, c1, enc["wih1_t"], enc["whh1_t"], enc["b1"])

    preds = [jnp.zeros((B, V), jnp.float32)]
    target = y_tokens[:, 0]
    for i in range(1, Ty):
        x_emb = jnp.take(dec["embedding"], target, axis=0)
        h0, c0 = _ref_cell(x_emb, h0, c0, dec["wih0_t"], dec["whh0_t"], dec["b0"])
        h1, c1 = _ref_cell(h0, h1, c1, dec["wih1_t"], dec["whh1_t"], dec["b1"])
        preds.append(h1 @ dec["fc_w_t"] + dec["fc_b"])
        target = y_tokens[:, i]
    return jnp.stack(preds, axis=1)


# ----------------------------------------------------------------------------
# Deterministic parameter construction
# ----------------------------------------------------------------------------
def init_params(key, vocab_size, embedding_dim, hidden_dim):
    def u(k, shape, scale):
        return jax.random.uniform(k, shape, jnp.float32, -scale, scale)

    scale = 1.0 / np.sqrt(hidden_dim)
    keys = jax.random.split(key, 32)
    ki = iter(keys)

    def lstm_stack(in_dim):
        # Weights stored pre-transposed; biases are the fused b_ih + b_hh,
        # PyTorch gate order [i, f, g, o].
        return dict(
            wih0_t=u(next(ki), (in_dim, 4 * hidden_dim), scale),
            whh0_t=u(next(ki), (hidden_dim, 4 * hidden_dim), scale),
            b0=u(next(ki), (1, 4 * hidden_dim), scale),
            wih1_t=u(next(ki), (hidden_dim, 4 * hidden_dim), scale),
            whh1_t=u(next(ki), (hidden_dim, 4 * hidden_dim), scale),
            b1=u(next(ki), (1, 4 * hidden_dim), scale),
        )

    encoder = dict(embedding=u(next(ki), (vocab_size, embedding_dim), 1.0),
                   **lstm_stack(embedding_dim))
    decoder = dict(embedding=u(next(ki), (vocab_size, embedding_dim), 1.0),
                   **lstm_stack(embedding_dim),
                   fc_w_t=u(next(ki), (hidden_dim, vocab_size), scale),
                   fc_b=u(next(ki), (1, vocab_size), scale))
    return dict(encoder=encoder, decoder=decoder)


# ----------------------------------------------------------------------------
if __name__ == "__main__":
    VOCAB, EMB, HID = 32, 32, 32   # vocab==hidden keeps the module's own assert happy
    B, TX, TY = 2, 8, 8

    key = jax.random.PRNGKey(0)
    kp, kx, ky = jax.random.split(key, 3)
    params = init_params(kp, VOCAB, EMB, HID)

    x_tokens = jax.random.randint(kx, (B, TX), 0, VOCAB, dtype=jnp.int32)
    y_tokens = jax.random.randint(ky, (B, TY), 0, VOCAB, dtype=jnp.int32)

    out = jax.block_until_ready(seq2seq_forward_jit(params, x_tokens, y_tokens))
    ref = jax.block_until_ready(seq2seq_reference(params, x_tokens, y_tokens))

    assert out.shape == (B, TY, VOCAB), out.shape
    np.testing.assert_allclose(np.asarray(out), np.asarray(ref), rtol=1e-4, atol=1e-4)
    print("KERNEL_OK")
</pallas_src>

<mosaic_0001>
module attributes {stable_mosaic.version = 11 : i64} {
  func.func @seq2seq_kernel(%arg0: memref<8x8x128xf32, #tpu.memory_space<vmem>>, %arg1: memref<7x8x128xf32, #tpu.memory_space<vmem>>, %arg2: memref<32x128xf32, #tpu.memory_space<vmem>>, %arg3: memref<32x128xf32, #tpu.memory_space<vmem>>, %arg4: memref<32x128xf32, #tpu.memory_space<vmem>>, %arg5: memref<1x128xf32, #tpu.memory_space<vmem>>, %arg6: memref<32x128xf32, #tpu.memory_space<vmem>>, %arg7: memref<32x128xf32, #tpu.memory_space<vmem>>, %arg8: memref<32x128xf32, #tpu.memory_space<vmem>>, %arg9: memref<1x128xf32, #tpu.memory_space<vmem>>, %arg10: memref<32x128xf32, #tpu.memory_space<vmem>>, %arg11: memref<1x128xf32, #tpu.memory_space<vmem>>, %arg12: memref<56x128xf32, #tpu.memory_space<vmem>>) attributes {dimension_semantics = [], scalar_prefetch = 0 : i64, scratch_operands = 0 : i64, tpu.core_type = #tpu.core_type<tc>} {
    %0 = tpu.iota {dimensions = array<i32: 1>} : vector<8x128xi32>
    %c64_i32 = arith.constant 64 : i32
    %1 = vector.broadcast %c64_i32 : i32 to vector<8x128xi32>
    %2 = arith.cmpi sge, %0, %1 : vector<8x128xi32>
    %c96_i32 = arith.constant 96 : i32
    %3 = vector.broadcast %c96_i32 : i32 to vector<8x128xi32>
    %4 = arith.cmpi slt, %0, %3 : vector<8x128xi32>
    %5 = arith.andi %2, %4 : vector<8x128xi1>
    %cst = arith.constant 2.000000e+00 : f32
    %cst_0 = arith.constant 1.000000e+00 : f32
    %6 = vector.broadcast %cst : f32 to vector<8x128xf32>
    %7 = vector.broadcast %cst_0 : f32 to vector<8x128xf32>
    %8 = arith.select %5, %6, %7 : vector<8x128xi1>, vector<8x128xf32>
    %cst_1 = arith.constant -1.000000e+00 : f32
    %cst_2 = arith.constant 0.000000e+00 : f32
    %9 = vector.broadcast %cst_1 : f32 to vector<8x128xf32>
    %10 = vector.broadcast %cst_2 : f32 to vector<8x128xf32>
    %11 = arith.select %5, %9, %10 : vector<8x128xi1>, vector<8x128xf32>
    %c0 = arith.constant 0 : index
    %c0_3 = arith.constant 0 : index
    %12 = vector.load %arg2[%c0, %c0_3] : memref<32x128xf32, #tpu.memory_space<vmem>>, vector<32x128xf32>
    %c0_4 = arith.constant 0 : index
    %c0_5 = arith.constant 0 : index
    %13 = vector.load %arg3[%c0_4, %c0_5] : memref<32x128xf32, #tpu.memory_space<vmem>>, vector<32x128xf32>
    %c0_6 = arith.constant 0 : index
    %c0_7 = arith.constant 0 : index
    %14 = vector.load %arg4[%c0_6, %c0_7] : memref<32x128xf32, #tpu.memory_space<vmem>>, vector<32x128xf32>
    %c0_8 = arith.constant 0 : index
    %c0_9 = arith.constant 0 : index
    %15 = vector.load %arg5[%c0_8, %c0_9] : memref<1x128xf32, #tpu.memory_space<vmem>>, vector<1x128xf32>
    %16 = vector.shape_cast %15 : vector<1x128xf32> to vector<1x128xf32>
    %17 = vector.broadcast %16 : vector<1x128xf32> to vector<8x128xf32>
    %c0_10 = arith.constant 0 : index
    %c0_11 = arith.constant 0 : index
    %18 = vector.load %arg6[%c0_10, %c0_11] : memref<32x128xf32, #tpu.memory_space<vmem>>, vector<32x128xf32>
    %c0_12 = arith.constant 0 : index
    %c0_13 = arith.constant 0 : index
    %19 = vector.load %arg7[%c0_12, %c0_13] : memref<32x128xf32, #tpu.memory_space<vmem>>, vector<32x128xf32>
    %c0_14 = arith.constant 0 : index
    %c0_15 = arith.constant 0 : index
    %20 = vector.load %arg8[%c0_14, %c0_15] : memref<32x128xf32, #tpu.memory_space<vmem>>, vector<32x128xf32>
    %c0_16 = arith.constant 0 : index
    %c0_17 = arith.constant 0 : index
    %21 = vector.load %arg9[%c0_16, %c0_17] : memref<1x128xf32, #tpu.memory_space<vmem>>, vector<1x128xf32>
    %22 = vector.shape_cast %21 : vector<1x128xf32> to vector<1x128xf32>
    %23 = vector.broadcast %22 : vector<1x128xf32> to vector<8x128xf32>
    %cst_18 = arith.constant 0.000000e+00 : f32
    %24 = vector.broadcast %cst_18 : f32 to vector<8x32xf32>
    %cst_19 = arith.constant 0.000000e+00 : f32
    %25 = vector.broadcast %cst_19 : f32 to vector<8x32xf32>
    %cst_20 = arith.constant 0.000000e+00 : f32
    %26 = vector.broadcast %cst_20 : f32 to vector<8x32xf32>
    %cst_21 = arith.constant 0.000000e+00 : f32
    %27 = vector.broadcast %cst_21 : f32 to vector<8x32xf32>
    %c0_22 = arith.constant 0 : index
    %c0_23 = arith.constant 0 : index
    %c0_24 = arith.constant 0 : index
    %28 = vector.load %arg0[%c0_22, %c0_23, %c0_24] : memref<8x8x128xf32, #tpu.memory_space<vmem>>, vector<1x8x128xf32>
    %29 = vector.shape_cast %28 : vector<1x8x128xf32> to vector<8x128xf32>
    %cst_25 = arith.constant dense<0.000000e+00> : vector<8x128xf32>
    %30 = tpu.matmul %24, %12, %cst_25 {dimension_numbers = #tpu.dot_dimension_numbers<[1], [0], [0], [1], [0, 0, 1, 1], [], []>} : vector<8x32xf32>, vector<32x128xf32>, vector<8x128xf32> -> vector<8x128xf32>
    %31 = arith.addf %29, %30 : vector<8x128xf32>
    %32 = arith.mulf %31, %8 : vector<8x128xf32>
    %33 = arith.negf %32 : vector<8x128xf32>
    %34 = math.exp %33 : vector<8x128xf32>
    %cst_26 = arith.constant 1.000000e+00 : f32
    %35 = vector.broadcast %cst_26 : f32 to vector<8x128xf32>
    %36 = arith.addf %35, %34 : vector<8x128xf32>
    %37 = arith.divf %35, %36 : vector<8x128xf32>
    %38 = arith.mulf %37, %8 : vector<8x128xf32>
    %39 = arith.addf %38, %11 : vector<8x128xf32>
    %40 = vector.extract_strided_slice %39 {offsets = [0, 0], sizes = [8, 32], strides = [1, 1]} : vector<8x128xf32> to vector<8x32xf32>
    %41 = vector.extract_strided_slice %39 {offsets = [0, 32], sizes = [8, 32], strides = [1, 1]} : vector<8x128xf32> to vector<8x32xf32>
    %42 = vector.extract_strided_slice %39 {offsets = [0, 64], sizes = [8, 32], strides = [1, 1]} : vector<8x128xf32> to vector<8x32xf32>
    %43 = vector.extract_strided_slice %39 {offsets = [0, 96], sizes = [8, 32], strides = [1, 1]} : vector<8x128xf32> to vector<8x32xf32>
    %44 = arith.mulf %41, %25 : vector<8x32xf32>
    %45 = arith.mulf %40, %42 : vector<8x32xf32>
    %46 = arith.addf %44, %45 : vector<8x32xf32>
    %47 = math.tanh %46 : vector<8x32xf32>
    %48 = arith.mulf %43, %47 : vector<8x32xf32>
    %cst_27 = arith.constant dense<0.000000e+00> : vector<8x128xf32>
    %49 = tpu.matmul %48, %13, %cst_27 {dimension_numbers = #tpu.dot_dimension_numbers<[1], [0], [0], [1], [0, 0, 1, 1], [], []>} : vector<8x32xf32>, vector<32x128xf32>, vector<8x128xf32> -> vector<8x128xf32>
    %cst_28 = arith.constant dense<0.000000e+00> : vector<8x128xf32>
    %50 = tpu.matmul %26, %14, %cst_28 {dimension_numbers = #tpu.dot_dimension_numbers<[1], [0], [0], [1], [0, 0, 1, 1], [], []>} : vector<8x32xf32>, vector<32x128xf32>, vector<8x128xf32> -> vector<8x128xf32>
    %51 = arith.addf %49, %50 : vector<8x128xf32>
    %52 = arith.addf %51, %17 : vector<8x128xf32>
    %53 = arith.mulf %52, %8 : vector<8x128xf32>
    %54 = arith.negf %53 : vector<8x128xf32>
    %55 = math.exp %54 : vector<8x128xf32>
    %cst_29 = arith.constant 1.000000e+00 : f32
    %56 = vector.broadcast %cst_29 : f32 to vector<8x128xf32>
    %57 = arith.addf %56, %55 : vector<8x128xf32>
    %58 = arith.divf %56, %57 : vector<8x128xf32>
    %59 = arith.mulf %58, %8 : vector<8x128xf32>
    %60 = arith.addf %59, %11 : vector<8x128xf32>
    %61 = vector.extract_strided_slice %60 {offsets = [0, 0], sizes = [8, 32], strides = [1, 1]} : vector<8x128xf32> to vector<8x32xf32>
    %62 = vector.extract_strided_slice %60 {offsets = [0, 32], sizes = [8, 32], strides = [1, 1]} : vector<8x128xf32> to vector<8x32xf32>
    %63 = vector.extract_strided_slice %60 {offsets = [0, 64], sizes = [8, 32], strides = [1, 1]} : vector<8x128xf32> to vector<8x32xf32>
    %64 = vector.extract_strided_slice %60 {offsets = [0, 96], sizes = [8, 32], strides = [1, 1]} : vector<8x128xf32> to vector<8x32xf32>
    %65 = arith.mulf %62, %27 : vector<8x32xf32>
    %66 = arith.mulf %61, %63 : vector<8x32xf32>
    %67 = arith.addf %65, %66 : vector<8x32xf32>
    %68 = math.tanh %67 : vector<8x32xf32>
    %69 = arith.mulf %64, %68 : vector<8x32xf32>
    %c1 = arith.constant 1 : index
    %c0_30 = arith.constant 0 : index
    %c0_31 = arith.constant 0 : index
    %70 = vector.load %arg0[%c1, %c0_30, %c0_31] : memref<8x8x128xf32, #tpu.memory_space<vmem>>, vector<1x8x128xf32>
    %71 = vector.shape_cast %70 : vector<1x8x128xf32> to vector<8x128xf32>
    %cst_32 = arith.constant dense<0.000000e+00> : vector<8x128xf32>
    %72 = tpu.matmul %48, %12, %cst_32 {dimension_numbers = #tpu.dot_dimension_numbers<[1], [0], [0], [1], [0, 0, 1, 1], [], []>} : vector<8x32xf32>, vector<32x128xf32>, vector<8x128xf32> -> vector<8x128xf32>
    %73 = arith.addf %71, %72 : vector<8x128xf32>
    %74 = arith.mulf %73, %8 : vector<8x128xf32>
    %75 = arith.negf %74 : vector<8x128xf32>
    %76 = math.exp %75 : vector<8x128xf32>
    %cst_33 = arith.constant 1.000000e+00 : f32
    %77 = vector.broadcast %cst_33 : f32 to vector<8x128xf32>
    %78 = arith.addf %77, %76 : vector<8x128xf32>
    %79 = arith.divf %77, %78 : vector<8x128xf32>
    %80 = arith.mulf %79, %8 : vector<8x128xf32>
    %81 = arith.addf %80, %11 : vector<8x128xf32>
    %82 = vector.extract_strided_slice %81 {offsets = [0, 0], sizes = [8, 32], strides = [1, 1]} : vector<8x128xf32> to vector<8x32xf32>
    %83 = vector.extract_strided_slice %81 {offsets = [0, 32], sizes = [8, 32], strides = [1, 1]} : vector<8x128xf32> to vector<8x32xf32>
    %84 = vector.extract_strided_slice %81 {offsets = [0, 64], sizes = [8, 32], strides = [1, 1]} : vector<8x128xf32> to vector<8x32xf32>
    %85 = vector.extract_strided_slice %81 {offsets = [0, 96], sizes = [8, 32], strides = [1, 1]} : vector<8x128xf32> to vector<8x32xf32>
    %86 = arith.mulf %83, %46 : vector<8x32xf32>
    %87 = arith.mulf %82, %84 : vector<8x32xf32>
    %88 = arith.addf %86, %87 : vector<8x32xf32>
    %89 = math.tanh %88 : vector<8x32xf32>
    %90 = arith.mulf %85, %89 : vector<8x32xf32>
    %cst_34 = arith.constant dense<0.000000e+00> : vector<8x128xf32>
    %91 = tpu.matmul %90, %13, %cst_34 {dimension_numbers = #tpu.dot_dimension_numbers<[1], [0], [0], [1], [0, 0, 1, 1], [], []>} : vector<8x32xf32>, vector<32x128xf32>, vector<8x128xf32> -> vector<8x128xf32>
    %cst_35 = arith.constant dense<0.000000e+00> : vector<8x128xf32>
    %92 = tpu.matmul %69, %14, %cst_35 {dimension_numbers = #tpu.dot_dimension_numbers<[1], [0], [0], [1], [0, 0, 1, 1], [], []>} : vector<8x32xf32>, vector<32x128xf32>, vector<8x128xf32> -> vector<8x128xf32>
    %93 = arith.addf %91, %92 : vector<8x128xf32>
    %94 = arith.addf %93, %17 : vector<8x128xf32>
    %95 = arith.mulf %94, %8 : vector<8x128xf32>
    %96 = arith.negf %95 : vector<8x128xf32>
    %97 = math.exp %96 : vector<8x128xf32>
    %cst_36 = arith.constant 1.000000e+00 : f32
    %98 = vector.broadcast %cst_36 : f32 to vector<8x128xf32>
    %99 = arith.addf %98, %97 : vector<8x128xf32>
    %100 = arith.divf %98, %99 : vector<8x128xf32>
    %101 = arith.mulf %100, %8 : vector<8x128xf32>
    %102 = arith.addf %101, %11 : vector<8x128xf32>
    %103 = vector.extract_strided_slice %102 {offsets = [0, 0], sizes = [8, 32], strides = [1, 1]} : vector<8x128xf32> to vector<8x32xf32>
    %104 = vector.extract_strided_slice %102 {offsets = [0, 32], sizes = [8, 32], strides = [1, 1]} : vector<8x128xf32> to vector<8x32xf32>
    %105 = vector.extract_strided_slice %102 {offsets = [0, 64], sizes = [8, 32], strides = [1, 1]} : vector<8x128xf32> to vector<8x32xf32>
    %106 = vector.extract_strided_slice %102 {offsets = [0, 96], sizes = [8, 32], strides = [1, 1]} : vector<8x128xf32> to vector<8x32xf32>
    %107 = arith.mulf %104, %67 : vector<8x32xf32>
    %108 = arith.mulf %103, %105 : vector<8x32xf32>
    %109 = arith.addf %107, %108 : vector<8x32xf32>
    %110 = math.tanh %109 : vector<8x32xf32>
    %111 = arith.mulf %106, %110 : vector<8x32xf32>
    %c2 = arith.constant 2 : index
    %c0_37 = arith.constant 0 : index
    %c0_38 = arith.constant 0 : index
    %112 = vector.load %arg0[%c2, %c0_37, %c0_38] : memref<8x8x128xf32, #tpu.memory_space<vmem>>, vector<1x8x128xf32>
    %113 = vector.shape_cast %112 : vector<1x8x128xf32> to vector<8x128xf32>
    %cst_39 = arith.constant dense<0.000000e+00> : vector<8x128xf32>
    %114 = tpu.matmul %90, %12, %cst_39 {dimension_numbers = #tpu.dot_dimension_numbers<[1], [0], [0], [1], [0, 0, 1, 1], [], []>} : vector<8x32xf32>, vector<32x128xf32>, vector<8x128xf32> -> vector<8x128xf32>
    %115 = arith.addf %113, %114 : vector<8x128xf32>
    %116 = arith.mulf %115, %8 : vector<8x128xf32>
    %117 = arith.negf %116 : vector<8x128xf32>
    %118 = math.exp %117 : vector<8x128xf32>
    %cst_40 = arith.constant 1.000000e+00 : f32
    %119 = vector.broadcast %cst_40 : f32 to vector<8x128xf32>
    %120 = arith.addf %119, %118 : vector<8x128xf32>
    %121 = arith.divf %119, %120 : vector<8x128xf32>
    %122 = arith.mulf %121, %8 : vector<8x128xf32>
    %123 = arith.addf %122, %11 : vector<8x128xf32>
    %124 = vector.extract_strided_slice %123 {offsets = [0, 0], sizes = [8, 32], strides = [1, 1]} : vector<8x128xf32> to vector<8x32xf32>
    %125 = vector.extract_strided_slice %123 {offsets = [0, 32], sizes = [8, 32], strides = [1, 1]} : vector<8x128xf32> to vector<8x32xf32>
    %126 = vector.extract_strided_slice %123 {offsets = [0, 64], sizes = [8, 32], strides = [1, 1]} : vector<8x128xf32> to vector<8x32xf32>
    %127 = vector.extract_strided_slice %123 {offsets = [0, 96], sizes = [8, 32], strides = [1, 1]} : vector<8x128xf32> to vector<8x32xf32>
    %128 = arith.mulf %125, %88 : vector<8x32xf32>
    %129 = arith.mulf %124, %126 : vector<8x32xf32>
    %130 = arith.addf %128, %129 : vector<8x32xf32>
    %131 = math.tanh %130 : vector<8x32xf32>
    %132 = arith.mulf %127, %131 : vector<8x32xf32>
    %cst_41 = arith.constant dense<0.000000e+00> : vector<8x128xf32>
    %133 = tpu.matmul %132, %13, %cst_41 {dimension_numbers = #tpu.dot_dimension_numbers<[1], [0], [0], [1], [0, 0, 1, 1], [], []>} : vector<8x32xf32>, vector<32x128xf32>, vector<8x128xf32> -> vector<8x128xf32>
    %cst_42 = arith.constant dense<0.000000e+00> : vector<8x128xf32>
    %134 = tpu.matmul %111, %14, %cst_42 {dimension_numbers = #tpu.dot_dimension_numbers<[1], [0], [0], [1], [0, 0, 1, 1], [], []>} : vector<8x32xf32>, vector<32x128xf32>, vector<8x128xf32> -> vector<8x128xf32>
    %135 = arith.addf %133, %134 : vector<8x128xf32>
    %136 = arith.addf %135, %17 : vector<8x128xf32>
    %137 = arith.mulf %136, %8 : vector<8x128xf32>
    %138 = arith.negf %137 : vector<8x128xf32>
    %139 = math.exp %138 : vector<8x128xf32>
    %cst_43 = arith.constant 1.000000e+00 : f32
    %140 = vector.broadcast %cst_43 : f32 to vector<8x128xf32>
    %141 = arith.addf %140, %139 : vector<8x128xf32>
    %142 = arith.divf %140, %141 : vector<8x128xf32>
    %143 = arith.mulf %142, %8 : vector<8x128xf32>
    %144 = arith.addf %143, %11 : vector<8x128xf32>
    %145 = vector.extract_strided_slice %144 {offsets = [0, 0], sizes = [8, 32], strides = [1, 1]} : vector<8x128xf32> to vector<8x32xf32>
    %146 = vector.extract_strided_slice %144 {offsets = [0, 32], sizes = [8, 32], strides = [1, 1]} : vector<8x128xf32> to vector<8x32xf32>
    %147 = vector.extract_strided_slice %144 {offsets = [0, 64], sizes = [8, 32], strides = [1, 1]} : vector<8x128xf32> to vector<8x32xf32>
    %148 = vector.extract_strided_slice %144 {offsets = [0, 96], sizes = [8, 32], strides = [1, 1]} : vector<8x128xf32> to vector<8x32xf32>
    %149 = arith.mulf %146, %109 : vector<8x32xf32>
    %150 = arith.mulf %145, %147 : vector<8x32xf32>
    %151 = arith.addf %149, %150 : vector<8x32xf32>
    %152 = math.tanh %151 : vector<8x32xf32>
    %153 = arith.mulf %148, %152 : vector<8x32xf32>
    %c3 = arith.constant 3 : index
    %c0_44 = arith.constant 0 : index
    %c0_45 = arith.constant 0 : index
    %154 = vector.load %arg0[%c3, %c0_44, %c0_45] : memref<8x8x128xf32, #tpu.memory_space<vmem>>, vector<1x8x128xf32>
    %155 = vector.shape_cast %154 : vector<1x8x128xf32> to vector<8x128xf32>
    %cst_46 = arith.constant dense<0.000000e+00> : vector<8x128xf32>
    %156 = tpu.matmul %132, %12, %cst_46 {dimension_numbers = #tpu.dot_dimension_numbers<[1], [0], [0], [1], [0, 0, 1, 1], [], []>} : vector<8x32xf32>, vector<32x128xf32>, vector<8x128xf32> -> vector<8x128xf32>
    %157 = arith.addf %155, %156 : vector<8x128xf32>
    %158 = arith.mulf %157, %8 : vector<8x128xf32>
    %159 = arith.negf %158 : vector<8x128xf32>
    %160 = math.exp %159 : vector<8x128xf32>
    %cst_47 = arith.constant 1.000000e+00 : f32
    %161 = vector.broadcast %cst_47 : f32 to vector<8x128xf32>
    %162 = arith.addf %161, %160 : vector<8x128xf32>
    %163 = arith.divf %161, %162 : vector<8x128xf32>
    %164 = arith.mulf %163, %8 : vector<8x128xf32>
    %165 = arith.addf %164, %11 : vector<8x128xf32>
    %166 = vector.extract_strided_slice %165 {offsets = [0, 0], sizes = [8, 32], strides = [1, 1]} : vector<8x128xf32> to vector<8x32xf32>
    %167 = vector.extract_strided_slice %165 {offsets = [0, 32], sizes = [8, 32], strides = [1, 1]} : vector<8x128xf32> to vector<8x32xf32>
    %168 = vector.extract_strided_slice %165 {offsets = [0, 64], sizes = [8, 32], strides = [1, 1]} : vector<8x128xf32> to vector<8x32xf32>
    %169 = vector.extract_strided_slice %165 {offsets = [0, 96], sizes = [8, 32], strides = [1, 1]} : vector<8x128xf32> to vector<8x32xf32>
    %170 = arith.mulf %167, %130 : vector<8x32xf32>
    %171 = arith.mulf %166, %168 : vector<8x32xf32>
    %172 = arith.addf %170, %171 : vector<8x32xf32>
    %173 = math.tanh %172 : vector<8x32xf32>
    %174 = arith.mulf %169, %173 : vector<8x32xf32>
    %cst_48 = arith.constant dense<0.000000e+00> : vector<8x128xf32>
    %175 = tpu.matmul %174, %13, %cst_48 {dimension_numbers = #tpu.dot_dimension_numbers<[1], [0], [0], [1], [0, 0, 1, 1], [], []>} : vector<8x32xf32>, vector<32x128xf32>, vector<8x128xf32> -> vector<8x128xf32>
    %cst_49 = arith.constant dense<0.000000e+00> : vector<8x128xf32>
    %176 = tpu.matmul %153, %14, %cst_49 {dimension_numbers = #tpu.dot_dimension_numbers<[1], [0], [0], [1], [0, 0, 1, 1], [], []>} : vector<8x32xf32>, vector<32x128xf32>, vector<8x128xf32> -> vector<8x128xf32>
    %177 = arith.addf %175, %176 : vector<8x128xf32>
    %178 = arith.addf %177, %17 : vector<8x128xf32>
    %179 = arith.mulf %178, %8 : vector<8x128xf32>
    %180 = arith.negf %179 : vector<8x128xf32>
    %181 = math.exp %180 : vector<8x128xf32>
    %cst_50 = arith.constant 1.000000e+00 : f32
    %182 = vector.broadcast %cst_50 : f32 to vector<8x128xf32>
    %183 = arith.addf %182, %181 : vector<8x128xf32>
    %184 = arith.divf %182, %183 : vector<8x128xf32>
    %185 = arith.mulf %184, %8 : vector<8x128xf32>
    %186 = arith.addf %185, %11 : vector<8x128xf32>
    %187 = vector.extract_strided_slice %186 {offsets = [0, 0], sizes = [8, 32], strides = [1, 1]} : vector<8x128xf32> to vector<8x32xf32>
    %188 = vector.extract_strided_slice %186 {offsets = [0, 32], sizes = [8, 32], strides = [1, 1]} : vector<8x128xf32> to vector<8x32xf32>
    %189 = vector.extract_strided_slice %186 {offsets = [0, 64], sizes = [8, 32], strides = [1, 1]} : vector<8x128xf32> to vector<8x32xf32>
    %190 = vector.extract_strided_slice %186 {offsets = [0, 96], sizes = [8, 32], strides = [1, 1]} : vector<8x128xf32> to vector<8x32xf32>
    %191 = arith.mulf %188, %151 : vector<8x32xf32>
    %192 = arith.mulf %187, %189 : vector<8x32xf32>
    %193 = arith.addf %191, %192 : vector<8x32xf32>
    %194 = math.tanh %193 : vector<8x32xf32>
    %195 = arith.mulf %190, %194 : vector<8x32xf32>
    %c4 = arith.constant 4 : index
    %c0_51 = arith.constant 0 : index
    %c0_52 = arith.constant 0 : index
    %196 = vector.load %arg0[%c4, %c0_51, %c0_52] : memref<8x8x128xf32, #tpu.memory_space<vmem>>, vector<1x8x128xf32>
    %197 = vector.shape_cast %196 : vector<1x8x128xf32> to vector<8x128xf32>
    %cst_53 = arith.constant dense<0.000000e+00> : vector<8x128xf32>
    %198 = tpu.matmul %174, %12, %cst_53 {dimension_numbers = #tpu.dot_dimension_numbers<[1], [0], [0], [1], [0, 0, 1, 1], [], []>} : vector<8x32xf32>, vector<32x128xf32>, vector<8x128xf32> -> vector<8x128xf32>
    %199 = arith.addf %197, %198 : vector<8x128xf32>
    %200 = arith.mulf %199, %8 : vector<8x128xf32>
    %201 = arith.negf %200 : vector<8x128xf32>
    %202 = math.exp %201 : vector<8x128xf32>
    %cst_54 = arith.constant 1.000000e+00 : f32
    %203 = vector.broadcast %cst_54 : f32 to vector<8x128xf32>
    %204 = arith.addf %203, %202 : vector<8x128xf32>
    %205 = arith.divf %203, %204 : vector<8x128xf32>
    %206 = arith.mulf %205, %8 : vector<8x128xf32>
    %207 = arith.addf %206, %11 : vector<8x128xf32>
    %208 = vector.extract_strided_slice %207 {offsets = [0, 0], sizes = [8, 32], strides = [1, 1]} : vector<8x128xf32> to vector<8x32xf32>
    %209 = vector.extract_strided_slice %207 {offsets = [0, 32], sizes = [8, 32], strides = [1, 1]} : vector<8x128xf32> to vector<8x32xf32>
    %210 = vector.extract_strided_slice %207 {offsets = [0, 64], sizes = [8, 32], strides = [1, 1]} : vector<8x128xf32> to vector<8x32xf32>
    %211 = vector.extract_strided_slice %207 {offsets = [0, 96], sizes = [8, 32], strides = [1, 1]} : vector<8x128xf32> to vector<8x32xf32>
    %212 = arith.mulf %209, %172 : vector<8x32xf32>
    %213 = arith.mulf %208, %210 : vector<8x32xf32>
    %214 = arith.addf %212, %213 : vector<8x32xf32>
    %215 = math.tanh %214 : vector<8x32xf32>
    %216 = arith.mulf %211, %215 : vector<8x32xf32>
    %cst_55 = arith.constant dense<0.000000e+00> : vector<8x128xf32>
    %217 = tpu.matmul %216, %13, %cst_55 {dimension_numbers = #tpu.dot_dimension_numbers<[1], [0], [0], [1], [0, 0, 1, 1], [], []>} : vector<8x32xf32>, vector<32x128xf32>, vector<8x128xf32> -> vector<8x128xf32>
    %cst_56 = arith.constant dense<0.000000e+00> : vector<8x128xf32>
    %218 = tpu.matmul %195, %14, %cst_56 {dimension_numbers = #tpu.dot_dimension_numbers<[1], [0], [0], [1], [0, 0, 1, 1], [], []>} : vector<8x32xf32>, vector<32x128xf32>, vector<8x128xf32> -> vector<8x128xf32>
    %219 = arith.addf %217, %218 : vector<8x128xf32>
    %220 = arith.addf %219, %17 : vector<8x128xf32>
    %221 = arith.mulf %220, %8 : vector<8x128xf32>
    %222 = arith.negf %221 : vector<8x128xf32>
    %223 = math.exp %222 : vector<8x128xf32>
    %cst_57 = arith.constant 1.000000e+00 : f32
    %224 = vector.broadcast %cst_57 : f32 to vector<8x128xf32>
    %225 = arith.addf %224, %223 : vector<8x128xf32>
    %226 = arith.divf %224, %225 : vector<8x128xf32>
    %227 = arith.mulf %226, %8 : vector<8x128xf32>
    %228 = arith.addf %227, %11 : vector<8x128xf32>
    %229 = vector.extract_strided_slice %228 {offsets = [0, 0], sizes = [8, 32], strides = [1, 1]} : vector<8x128xf32> to vector<8x32xf32>
    %230 = vector.extract_strided_slice %228 {offsets = [0, 32], sizes = [8, 32], strides = [1, 1]} : vector<8x128xf32> to vector<8x32xf32>
    %231 = vector.extract_strided_slice %228 {offsets = [0, 64], sizes = [8, 32], strides = [1, 1]} : vector<8x128xf32> to vector<8x32xf32>
    %232 = vector.extract_strided_slice %228 {offsets = [0, 96], sizes = [8, 32], strides = [1, 1]} : vector<8x128xf32> to vector<8x32xf32>
    %233 = arith.mulf %230, %193 : vector<8x32xf32>
    %234 = arith.mulf %229, %231 : vector<8x32xf32>
    %235 = arith.addf %233, %234 : vector<8x32xf32>
    %236 = math.tanh %235 : vector<8x32xf32>
    %237 = arith.mulf %232, %236 : vector<8x32xf32>
    %c5 = arith.constant 5 : index
    %c0_58 = arith.constant 0 : index
    %c0_59 = arith.constant 0 : index
    %238 = vector.load %arg0[%c5, %c0_58, %c0_59] : memref<8x8x128xf32, #tpu.memory_space<vmem>>, vector<1x8x128xf32>
    %239 = vector.shape_cast %238 : vector<1x8x128xf32> to vector<8x128xf32>
    %cst_60 = arith.constant dense<0.000000e+00> : vector<8x128xf32>
    %240 = tpu.matmul %216, %12, %cst_60 {dimension_numbers = #tpu.dot_dimension_numbers<[1], [0], [0], [1], [0, 0, 1, 1], [], []>} : vector<8x32xf32>, vector<32x128xf32>, vector<8x128xf32> -> vector<8x128xf32>
    %241 = arith.addf %239, %240 : vector<8x128xf32>
    %242 = arith.mulf %241, %8 : vector<8x128xf32>
    %243 = arith.negf %242 : vector<8x128xf32>
    %244 = math.exp %243 : vector<8x128xf32>
    %cst_61 = arith.constant 1.000000e+00 : f32
    %245 = vector.broadcast %cst_61 : f32 to vector<8x128xf32>
    %246 = arith.addf %245, %244 : vector<8x128xf32>
    %247 = arith.divf %245, %246 : vector<8x128xf32>
    %248 = arith.mulf %247, %8 : vector<8x128xf32>
    %249 = arith.addf %248, %11 : vector<8x128xf32>
    %250 = vector.extract_strided_slice %249 {offsets = [0, 0], sizes = [8, 32], strides = [1, 1]} : vector<8x128xf32> to vector<8x32xf32>
    %251 = vector.extract_strided_slice %249 {offsets = [0, 32], sizes = [8, 32], strides = [1, 1]} : vector<8x128xf32> to vector<8x32xf32>
    %252 = vector.extract_strided_slice %249 {offsets = [0, 64], sizes = [8, 32], strides = [1, 1]} : vector<8x128xf32> to vector<8x32xf32>
    %253 = vector.extract_strided_slice %249 {offsets = [0, 96], sizes = [8, 32], strides = [1, 1]} : vector<8x128xf32> to vector<8x32xf32>
    %254 = arith.mulf %251, %214 : vector<8x32xf32>
    %255 = arith.mulf %250, %252 : vector<8x32xf32>
    %256 = arith.addf %254, %255 : vector<8x32xf32>
    %257 = math.tanh %256 : vector<8x32xf32>
    %258 = arith.mulf %253, %257 : vector<8x32xf32>
    %cst_62 = arith.constant dense<0.000000e+00> : vector<8x128xf32>
    %259 = tpu.matmul %258, %13, %cst_62 {dimension_numbers = #tpu.dot_dimension_numbers<[1], [0], [0], [1], [0, 0, 1, 1], [], []>} : vector<8x32xf32>, vector<32x128xf32>, vector<8x128xf32> -> vector<8x128xf32>
    %cst_63 = arith.constant dense<0.000000e+00> : vector<8x128xf32>
    %260 = tpu.matmul %237, %14, %cst_63 {dimension_numbers = #tpu.dot_dimension_numbers<[1], [0], [0], [1], [0, 0, 1, 1], [], []>} : vector<8x32xf32>, vector<32x128xf32>, vector<8x128xf32> -> vector<8x128xf32>
    %261 = arith.addf %259, %260 : vector<8x128xf32>
    %262 = arith.addf %261, %17 : vector<8x128xf32>
    %263 = arith.mulf %262, %8 : vector<8x128xf32>
    %264 = arith.negf %263 : vector<8x128xf32>
    %265 = math.exp %264 : vector<8x128xf32>
    %cst_64 = arith.constant 1.000000e+00 : f32
    %266 = vector.broadcast %cst_64 : f32 to vector<8x128xf32>
    %267 = arith.addf %266, %265 : vector<8x128xf32>
    %268 = arith.divf %266, %267 : vector<8x128xf32>
    %269 = arith.mulf %268, %8 : vector<8x128xf32>
    %270 = arith.addf %269, %11 : vector<8x128xf32>
    %271 = vector.extract_strided_slice %270 {offsets = [0, 0], sizes = [8, 32], strides = [1, 1]} : vector<8x128xf32> to vector<8x32xf32>
    %272 = vector.extract_strided_slice %270 {offsets = [0, 32], sizes = [8, 32], strides = [1, 1]} : vector<8x128xf32> to vector<8x32xf32>
    %273 = vector.extract_strided_slice %270 {offsets = [0, 64], sizes = [8, 32], strides = [1, 1]} : vector<8x128xf32> to vector<8x32xf32>
    %274 = vector.extract_strided_slice %270 {offsets = [0, 96], sizes = [8, 32], strides = [1, 1]} : vector<8x128xf32> to vector<8x32xf32>
    %275 = arith.mulf %272, %235 : vector<8x32xf32>
    %276 = arith.mulf %271, %273 : vector<8x32xf32>
    %277 = arith.addf %275, %276 : vector<8x32xf32>
    %278 = math.tanh %277 : vector<8x32xf32>
    %279 = arith.mulf %274, %278 : vector<8x32xf32>
    %c6 = arith.constant 6 : index
    %c0_65 = arith.constant 0 : index
    %c0_66 = arith.constant 0 : index
    %280 = vector.load %arg0[%c6, %c0_65, %c0_66] : memref<8x8x128xf32, #tpu.memory_space<vmem>>, vector<1x8x128xf32>
    %281 = vector.shape_cast %280 : vector<1x8x128xf32> to vector<8x128xf32>
    %cst_67 = arith.constant dense<0.000000e+00> : vector<8x128xf32>
    %282 = tpu.matmul %258, %12, %cst_67 {dimension_numbers = #tpu.dot_dimension_numbers<[1], [0], [0], [1], [0, 0, 1, 1], [], []>} : vector<8x32xf32>, vector<32x128xf32>, vector<8x128xf32> -> vector<8x128xf32>
    %283 = arith.addf %281, %282 : vector<8x128xf32>
    %284 = arith.mulf %283, %8 : vector<8x128xf32>
    %285 = arith.negf %284 : vector<8x128xf32>
    %286 = math.exp %285 : vector<8x128xf32>
    %cst_68 = arith.constant 1.000000e+00 : f32
    %287 = vector.broadcast %cst_68 : f32 to vector<8x128xf32>
    %288 = arith.addf %287, %286 : vector<8x128xf32>
    %289 = arith.divf %287, %288 : vector<8x128xf32>
    %290 = arith.mulf %289, %8 : vector<8x128xf32>
    %291 = arith.addf %290, %11 : vector<8x128xf32>
    %292 = vector.extract_strided_slice %291 {offsets = [0, 0], sizes = [8, 32], strides = [1, 1]} : vector<8x128xf32> to vector<8x32xf32>
    %293 = vector.extract_strided_slice %291 {offsets = [0, 32], sizes = [8, 32], strides = [1, 1]} : vector<8x128xf32> to vector<8x32xf32>
    %294 = vector.extract_strided_slice %291 {offsets = [0, 64], sizes = [8, 32], strides = [1, 1]} : vector<8x128xf32> to vector<8x32xf32>
    %295 = vector.extract_strided_slice %291 {offsets = [0, 96], sizes = [8, 32], strides = [1, 1]} : vector<8x128xf32> to vector<8x32xf32>
    %296 = arith.mulf %293, %256 : vector<8x32xf32>
    %297 = arith.mulf %292, %294 : vector<8x32xf32>
    %298 = arith.addf %296, %297 : vector<8x32xf32>
    %299 = math.tanh %298 : vector<8x32xf32>
    %300 = arith.mulf %295, %299 : vector<8x32xf32>
    %cst_69 = arith.constant dense<0.000000e+00> : vector<8x128xf32>
    %301 = tpu.matmul %300, %13, %cst_69 {dimension_numbers = #tpu.dot_dimension_numbers<[1], [0], [0], [1], [0, 0, 1, 1], [], []>} : vector<8x32xf32>, vector<32x128xf32>, vector<8x128xf32> -> vector<8x128xf32>
    %cst_70 = arith.constant dense<0.000000e+00> : vector<8x128xf32>
    %302 = tpu.matmul %279, %14, %cst_70 {dimension_numbers = #tpu.dot_dimension_numbers<[1], [0], [0], [1], [0, 0, 1, 1], [], []>} : vector<8x32xf32>, vector<32x128xf32>, vector<8x128xf32> -> vector<8x128xf32>
    %303 = arith.addf %301, %302 : vector<8x128xf32>
    %304 = arith.addf %303, %17 : vector<8x128xf32>
    %305 = arith.mulf %304, %8 : vector<8x128xf32>
    %306 = arith.negf %305 : vector<8x128xf32>
    %307 = math.exp %306 : vector<8x128xf32>
    %cst_71 = arith.constant 1.000000e+00 : f32
    %308 = vector.broadcast %cst_71 : f32 to vector<8x128xf32>
    %309 = arith.addf %308, %307 : vector<8x128xf32>
    %310 = arith.divf %308, %309 : vector<8x128xf32>
    %311 = arith.mulf %310, %8 : vector<8x128xf32>
    %312 = arith.addf %311, %11 : vector<8x128xf32>
    %313 = vector.extract_strided_slice %312 {offsets = [0, 0], sizes = [8, 32], strides = [1, 1]} : vector<8x128xf32> to vector<8x32xf32>
    %314 = vector.extract_strided_slice %312 {offsets = [0, 32], sizes = [8, 32], strides = [1, 1]} : vector<8x128xf32> to vector<8x32xf32>
    %315 = vector.extract_strided_slice %312 {offsets = [0, 64], sizes = [8, 32], strides = [1, 1]} : vector<8x128xf32> to vector<8x32xf32>
    %316 = vector.extract_strided_slice %312 {offsets = [0, 96], sizes = [8, 32], strides = [1, 1]} : vector<8x128xf32> to vector<8x32xf32>
    %317 = arith.mulf %314, %277 : vector<8x32xf32>
    %318 = arith.mulf %313, %315 : vector<8x32xf32>
    %319 = arith.addf %317, %318 : vector<8x32xf32>
    %320 = math.tanh %319 : vector<8x32xf32>
    %321 = arith.mulf %316, %320 : vector<8x32xf32>
    %c7 = arith.constant 7 : index
    %c0_72 = arith.constant 0 : index
    %c0_73 = arith.constant 0 : index
    %322 = vector.load %arg0[%c7, %c0_72, %c0_73] : memref<8x8x128xf32, #tpu.memory_space<vmem>>, vector<1x8x128xf32>
    %323 = vector.shape_cast %322 : vector<1x8x128xf32> to vector<8x128xf32>
    %cst_74 = arith.constant dense<0.000000e+00> : vector<8x128xf32>
    %324 = tpu.matmul %300, %12, %cst_74 {dimension_numbers = #tpu.dot_dimension_numbers<[1], [0], [0], [1], [0, 0, 1, 1], [], []>} : vector<8x32xf32>, vector<32x128xf32>, vector<8x128xf32> -> vector<8x128xf32>
    %325 = arith.addf %323, %324 : vector<8x128xf32>
    %326 = arith.mulf %325, %8 : vector<8x128xf32>
    %327 = arith.negf %326 : vector<8x128xf32>
    %328 = math.exp %327 : vector<8x128xf32>
    %cst_75 = arith.constant 1.000000e+00 : f32
    %329 = vector.broadcast %cst_75 : f32 to vector<8x128xf32>
    %330 = arith.addf %329, %328 : vector<8x128xf32>
    %331 = arith.divf %329, %330 : vector<8x128xf32>
    %332 = arith.mulf %331, %8 : vector<8x128xf32>
    %333 = arith.addf %332, %11 : vector<8x128xf32>
    %334 = vector.extract_strided_slice %333 {offsets = [0, 0], sizes = [8, 32], strides = [1, 1]} : vector<8x128xf32> to vector<8x32xf32>
    %335 = vector.extract_strided_slice %333 {offsets = [0, 32], sizes = [8, 32], strides = [1, 1]} : vector<8x128xf32> to vector<8x32xf32>
    %336 = vector.extract_strided_slice %333 {offsets = [0, 64], sizes = [8, 32], strides = [1, 1]} : vector<8x128xf32> to vector<8x32xf32>
    %337 = vector.extract_strided_slice %333 {offsets = [0, 96], sizes = [8, 32], strides = [1, 1]} : vector<8x128xf32> to vector<8x32xf32>
    %338 = arith.mulf %335, %298 : vector<8x32xf32>
    %339 = arith.mulf %334, %336 : vector<8x32xf32>
    %340 = arith.addf %338, %339 : vector<8x32xf32>
    %341 = math.tanh %340 : vector<8x32xf32>
    %342 = arith.mulf %337, %341 : vector<8x32xf32>
    %cst_76 = arith.constant dense<0.000000e+00> : vector<8x128xf32>
    %343 = tpu.matmul %342, %13, %cst_76 {dimension_numbers = #tpu.dot_dimension_numbers<[1], [0], [0], [1], [0, 0, 1, 1], [], []>} : vector<8x32xf32>, vector<32x128xf32>, vector<8x128xf32> -> vector<8x128xf32>
    %cst_77 = arith.constant dense<0.000000e+00> : vector<8x128xf32>
    %344 = tpu.matmul %321, %14, %cst_77 {dimension_numbers = #tpu.dot_dimension_numbers<[1], [0], [0], [1], [0, 0, 1, 1], [], []>} : vector<8x32xf32>, vector<32x128xf32>, vector<8x128xf32> -> vector<8x128xf32>
    %345 = arith.addf %343, %344 : vector<8x128xf32>
    %346 = arith.addf %345, %17 : vector<8x128xf32>
    %347 = arith.mulf %346, %8 : vector<8x128xf32>
    %348 = arith.negf %347 : vector<8x128xf32>
    %349 = math.exp %348 : vector<8x128xf32>
    %cst_78 = arith.constant 1.000000e+00 : f32
    %350 = vector.broadcast %cst_78 : f32 to vector<8x128xf32>
    %351 = arith.addf %350, %349 : vector<8x128xf32>
    %352 = arith.divf %350, %351 : vector<8x128xf32>
    %353 = arith.mulf %352, %8 : vector<8x128xf32>
    %354 = arith.addf %353, %11 : vector<8x128xf32>
    %355 = vector.extract_strided_slice %354 {offsets = [0, 0], sizes = [8, 32], strides = [1, 1]} : vector<8x128xf32> to vector<8x32xf32>
    %356 = vector.extract_strided_slice %354 {offsets = [0, 32], sizes = [8, 32], strides = [1, 1]} : vector<8x128xf32> to vector<8x32xf32>
    %357 = vector.extract_strided_slice %354 {offsets = [0, 64], sizes = [8, 32], strides = [1, 1]} : vector<8x128xf32> to vector<8x32xf32>
    %358 = vector.extract_strided_slice %354 {offsets = [0, 96], sizes = [8, 32], strides = [1, 1]} : vector<8x128xf32> to vector<8x32xf32>
    %359 = arith.mulf %356, %319 : vector<8x32xf32>
    %360 = arith.mulf %355, %357 : vector<8x32xf32>
    %361 = arith.addf %359, %360 : vector<8x32xf32>
    %362 = math.tanh %361 : vector<8x32xf32>
    %363 = arith.mulf %358, %362 : vector<8x32xf32>
    %c0_79 = arith.constant 0 : index
    %c0_80 = arith.constant 0 : index
    %c0_81 = arith.constant 0 : index
    %364 = vector.load %arg1[%c0_79, %c0_80, %c0_81] : memref<7x8x128xf32, #tpu.memory_space<vmem>>, vector<1x8x128xf32>
    %365 = vector.shape_cast %364 : vector<1x8x128xf32> to vector<8x128xf32>
    %cst_82 = arith.constant dense<0.000000e+00> : vector<8x128xf32>
    %366 = tpu.matmul %342, %18, %cst_82 {dimension_numbers = #tpu.dot_dimension_numbers<[1], [0], [0], [1], [0, 0, 1, 1], [], []>} : vector<8x32xf32>, vector<32x128xf32>, vector<8x128xf32> -> vector<8x128xf32>
    %367 = arith.addf %365, %366 : vector<8x128xf32>
    %368 = arith.mulf %367, %8 : vector<8x128xf32>
    %369 = arith.negf %368 : vector<8x128xf32>
    %370 = math.exp %369 : vector<8x128xf32>
    %cst_83 = arith.constant 1.000000e+00 : f32
    %371 = vector.broadcast %cst_83 : f32 to vector<8x128xf32>
    %372 = arith.addf %371, %370 : vector<8x128xf32>
    %373 = arith.divf %371, %372 : vector<8x128xf32>
    %374 = arith.mulf %373, %8 : vector<8x128xf32>
    %375 = arith.addf %374, %11 : vector<8x128xf32>
    %376 = vector.extract_strided_slice %375 {offsets = [0, 0], sizes = [8, 32], strides = [1, 1]} : vector<8x128xf32> to vector<8x32xf32>
    %377 = vector.extract_strided_slice %375 {offsets = [0, 32], sizes = [8, 32], strides = [1, 1]} : vector<8x128xf32> to vector<8x32xf32>
    %378 = vector.extract_strided_slice %375 {offsets = [0, 64], sizes = [8, 32], strides = [1, 1]} : vector<8x128xf32> to vector<8x32xf32>
    %379 = vector.extract_strided_slice %375 {offsets = [0, 96], sizes = [8, 32], strides = [1, 1]} : vector<8x128xf32> to vector<8x32xf32>
    %380 = arith.mulf %377, %340 : vector<8x32xf32>
    %381 = arith.mulf %376, %378 : vector<8x32xf32>
    %382 = arith.addf %380, %381 : vector<8x32xf32>
    %383 = math.tanh %382 : vector<8x32xf32>
    %384 = arith.mulf %379, %383 : vector<8x32xf32>
    %cst_84 = arith.constant dense<0.000000e+00> : vector<8x128xf32>
    %385 = tpu.matmul %384, %19, %cst_84 {dimension_numbers = #tpu.dot_dimension_numbers<[1], [0], [0], [1], [0, 0, 1, 1], [], []>} : vector<8x32xf32>, vector<32x128xf32>, vector<8x128xf32> -> vector<8x128xf32>
    %cst_85 = arith.constant dense<0.000000e+00> : vector<8x128xf32>
    %386 = tpu.matmul %363, %20, %cst_85 {dimension_numbers = #tpu.dot_dimension_numbers<[1], [0], [0], [1], [0, 0, 1, 1], [], []>} : vector<8x32xf32>, vector<32x128xf32>, vector<8x128xf32> -> vector<8x128xf32>
    %387 = arith.addf %385, %386 : vector<8x128xf32>
    %388 = arith.addf %387, %23 : vector<8x128xf32>
    %389 = arith.mulf %388, %8 : vector<8x128xf32>
    %390 = arith.negf %389 : vector<8x128xf32>
    %391 = math.exp %390 : vector<8x128xf32>
    %cst_86 = arith.constant 1.000000e+00 : f32
    %392 = vector.broadcast %cst_86 : f32 to vector<8x128xf32>
    %393 = arith.addf %392, %391 : vector<8x128xf32>
    %394 = arith.divf %392, %393 : vector<8x128xf32>
    %395 = arith.mulf %394, %8 : vector<8x128xf32>
    %396 = arith.addf %395, %11 : vector<8x128xf32>
    %397 = vector.extract_strided_slice %396 {offsets = [0, 0], sizes = [8, 32], strides = [1, 1]} : vector<8x128xf32> to vector<8x32xf32>
    %398 = vector.extract_strided_slice %396 {offsets = [0, 32], sizes = [8, 32], strides = [1, 1]} : vector<8x128xf32> to vector<8x32xf32>
    %399 = vector.extract_strided_slice %396 {offsets = [0, 64], sizes = [8, 32], strides = [1, 1]} : vector<8x128xf32> to vector<8x32xf32>
    %400 = vector.extract_strided_slice %396 {offsets = [0, 96], sizes = [8, 32], strides = [1, 1]} : vector<8x128xf32> to vector<8x32xf32>
    %401 = arith.mulf %398, %361 : vector<8x32xf32>
    %402 = arith.mulf %397, %399 : vector<8x32xf32>
    %403 = arith.addf %401, %402 : vector<8x32xf32>
    %404 = math.tanh %403 : vector<8x32xf32>
    %405 = arith.mulf %400, %404 : vector<8x32xf32>
    %c1_87 = arith.constant 1 : index
    %c0_88 = arith.constant 0 : index
    %c0_89 = arith.constant 0 : index
    %406 = vector.load %arg1[%c1_87, %c0_88, %c0_89] : memref<7x8x128xf32, #tpu.memory_space<vmem>>, vector<1x8x128xf32>
    %407 = vector.shape_cast %406 : vector<1x8x128xf32> to vector<8x128xf32>
    %cst_90 = arith.constant dense<0.000000e+00> : vector<8x128xf32>
    %408 = tpu.matmul %384, %18, %cst_90 {dimension_numbers = #tpu.dot_dimension_numbers<[1], [0], [0], [1], [0, 0, 1, 1], [], []>} : vector<8x32xf32>, vector<32x128xf32>, vector<8x128xf32> -> vector<8x128xf32>
    %409 = arith.addf %407, %408 : vector<8x128xf32>
    %410 = arith.mulf %409, %8 : vector<8x128xf32>
    %411 = arith.negf %410 : vector<8x128xf32>
    %412 = math.exp %411 : vector<8x128xf32>
    %cst_91 = arith.constant 1.000000e+00 : f32
    %413 = vector.broadcast %cst_91 : f32 to vector<8x128xf32>
    %414 = arith.addf %413, %412 : vector<8x128xf32>
    %415 = arith.divf %413, %414 : vector<8x128xf32>
    %416 = arith.mulf %415, %8 : vector<8x128xf32>
    %417 = arith.addf %416, %11 : vector<8x128xf32>
    %418 = vector.extract_strided_slice %417 {offsets = [0, 0], sizes = [8, 32], strides = [1, 1]} : vector<8x128xf32> to vector<8x32xf32>
    %419 = vector.extract_strided_slice %417 {offsets = [0, 32], sizes = [8, 32], strides = [1, 1]} : vector<8x128xf32> to vector<8x32xf32>
    %420 = vector.extract_strided_slice %417 {offsets = [0, 64], sizes = [8, 32], strides = [1, 1]} : vector<8x128xf32> to vector<8x32xf32>
    %421 = vector.extract_strided_slice %417 {offsets = [0, 96], sizes = [8, 32], strides = [1, 1]} : vector<8x128xf32> to vector<8x32xf32>
    %422 = arith.mulf %419, %382 : vector<8x32xf32>
    %423 = arith.mulf %418, %420 : vector<8x32xf32>
    %424 = arith.addf %422, %423 : vector<8x32xf32>
    %425 = math.tanh %424 : vector<8x32xf32>
    %426 = arith.mulf %421, %425 : vector<8x32xf32>
    %cst_92 = arith.constant dense<0.000000e+00> : vector<8x128xf32>
    %427 = tpu.matmul %426, %19, %cst_92 {dimension_numbers = #tpu.dot_dimension_numbers<[1], [0], [0], [1], [0, 0, 1, 1], [], []>} : vector<8x32xf32>, vector<32x128xf32>, vector<8x128xf32> -> vector<8x128xf32>
    %cst_93 = arith.constant dense<0.000000e+00> : vector<8x128xf32>
    %428 = tpu.matmul %405, %20, %cst_93 {dimension_numbers = #tpu.dot_dimension_numbers<[1], [0], [0], [1], [0, 0, 1, 1], [], []>} : vector<8x32xf32>, vector<32x128xf32>, vector<8x128xf32> -> vector<8x128xf32>
    %429 = arith.addf %427, %428 : vector<8x128xf32>
    %430 = arith.addf %429, %23 : vector<8x128xf32>
    %431 = arith.mulf %430, %8 : vector<8x128xf32>
    %432 = arith.negf %431 : vector<8x128xf32>
    %433 = math.exp %432 : vector<8x128xf32>
    %cst_94 = arith.constant 1.000000e+00 : f32
    %434 = vector.broadcast %cst_94 : f32 to vector<8x128xf32>
    %435 = arith.addf %434, %433 : vector<8x128xf32>
    %436 = arith.divf %434, %435 : vector<8x128xf32>
    %437 = arith.mulf %436, %8 : vector<8x128xf32>
    %438 = arith.addf %437, %11 : vector<8x128xf32>
    %439 = vector.extract_strided_slice %438 {offsets = [0, 0], sizes = [8, 32], strides = [1, 1]} : vector<8x128xf32> to vector<8x32xf32>
    %440 = vector.extract_strided_slice %438 {offsets = [0, 32], sizes = [8, 32], strides = [1, 1]} : vector<8x128xf32> to vector<8x32xf32>
    %441 = vector.extract_strided_slice %438 {offsets = [0, 64], sizes = [8, 32], strides = [1, 1]} : vector<8x128xf32> to vector<8x32xf32>
    %442 = vector.extract_strided_slice %438 {offsets = [0, 96], sizes = [8, 32], strides = [1, 1]} : vector<8x128xf32> to vector<8x32xf32>
    %443 = arith.mulf %440, %403 : vector<8x32xf32>
    %444 = arith.mulf %439, %441 : vector<8x32xf32>
    %445 = arith.addf %443, %444 : vector<8x32xf32>
    %446 = math.tanh %445 : vector<8x32xf32>
    %447 = arith.mulf %442, %446 : vector<8x32xf32>
    %c2_95 = arith.constant 2 : index
    %c0_96 = arith.constant 0 : index
    %c0_97 = arith.constant 0 : index
    %448 = vector.load %arg1[%c2_95, %c0_96, %c0_97] : memref<7x8x128xf32, #tpu.memory_space<vmem>>, vector<1x8x128xf32>
    %449 = vector.shape_cast %448 : vector<1x8x128xf32> to vector<8x128xf32>
    %cst_98 = arith.constant dense<0.000000e+00> : vector<8x128xf32>
    %450 = tpu.matmul %426, %18, %cst_98 {dimension_numbers = #tpu.dot_dimension_numbers<[1], [0], [0], [1], [0, 0, 1, 1], [], []>} : vector<8x32xf32>, vector<32x128xf32>, vector<8x128xf32> -> vector<8x128xf32>
    %451 = arith.addf %449, %450 : vector<8x128xf32>
    %452 = arith.mulf %451, %8 : vector<8x128xf32>
    %453 = arith.negf %452 : vector<8x128xf32>
    %454 = math.exp %453 : vector<8x128xf32>
    %cst_99 = arith.constant 1.000000e+00 : f32
    %455 = vector.broadcast %cst_99 : f32 to vector<8x128xf32>
    %456 = arith.addf %455, %454 : vector<8x128xf32>
    %457 = arith.divf %455, %456 : vector<8x128xf32>
    %458 = arith.mulf %457, %8 : vector<8x128xf32>
    %459 = arith.addf %458, %11 : vector<8x128xf32>
    %460 = vector.extract_strided_slice %459 {offsets = [0, 0], sizes = [8, 32], strides = [1, 1]} : vector<8x128xf32> to vector<8x32xf32>
    %461 = vector.extract_strided_slice %459 {offsets = [0, 32], sizes = [8, 32], strides = [1, 1]} : vector<8x128xf32> to vector<8x32xf32>
    %462 = vector.extract_strided_slice %459 {offsets = [0, 64], sizes = [8, 32], strides = [1, 1]} : vector<8x128xf32> to vector<8x32xf32>
    %463 = vector.extract_strided_slice %459 {offsets = [0, 96], sizes = [8, 32], strides = [1, 1]} : vector<8x128xf32> to vector<8x32xf32>
    %464 = arith.mulf %461, %424 : vector<8x32xf32>
    %465 = arith.mulf %460, %462 : vector<8x32xf32>
    %466 = arith.addf %464, %465 : vector<8x32xf32>
    %467 = math.tanh %466 : vector<8x32xf32>
    %468 = arith.mulf %463, %467 : vector<8x32xf32>
    %cst_100 = arith.constant dense<0.000000e+00> : vector<8x128xf32>
    %469 = tpu.matmul %468, %19, %cst_100 {dimension_numbers = #tpu.dot_dimension_numbers<[1], [0], [0], [1], [0, 0, 1, 1], [], []>} : vector<8x32xf32>, vector<32x128xf32>, vector<8x128xf32> -> vector<8x128xf32>
    %cst_101 = arith.constant dense<0.000000e+00> : vector<8x128xf32>
    %470 = tpu.matmul %447, %20, %cst_101 {dimension_numbers = #tpu.dot_dimension_numbers<[1], [0], [0], [1], [0, 0, 1, 1], [], []>} : vector<8x32xf32>, vector<32x128xf32>, vector<8x128xf32> -> vector<8x128xf32>
    %471 = arith.addf %469, %470 : vector<8x128xf32>
    %472 = arith.addf %471, %23 : vector<8x128xf32>
    %473 = arith.mulf %472, %8 : vector<8x128xf32>
    %474 = arith.negf %473 : vector<8x128xf32>
    %475 = math.exp %474 : vector<8x128xf32>
    %cst_102 = arith.constant 1.000000e+00 : f32
    %476 = vector.broadcast %cst_102 : f32 to vector<8x128xf32>
    %477 = arith.addf %476, %475 : vector<8x128xf32>
    %478 = arith.divf %476, %477 : vector<8x128xf32>
    %479 = arith.mulf %478, %8 : vector<8x128xf32>
    %480 = arith.addf %479, %11 : vector<8x128xf32>
    %481 = vector.extract_strided_slice %480 {offsets = [0, 0], sizes = [8, 32], strides = [1, 1]} : vector<8x128xf32> to vector<8x32xf32>
    %482 = vector.extract_strided_slice %480 {offsets = [0, 32], sizes = [8, 32], strides = [1, 1]} : vector<8x128xf32> to vector<8x32xf32>
    %483 = vector.extract_strided_slice %480 {offsets = [0, 64], sizes = [8, 32], strides = [1, 1]} : vector<8x128xf32> to vector<8x32xf32>
    %484 = vector.extract_strided_slice %480 {offsets = [0, 96], sizes = [8, 32], strides = [1, 1]} : vector<8x128xf32> to vector<8x32xf32>
    %485 = arith.mulf %482, %445 : vector<8x32xf32>
    %486 = arith.mulf %481, %483 : vector<8x32xf32>
    %487 = arith.addf %485, %486 : vector<8x32xf32>
    %488 = math.tanh %487 : vector<8x32xf32>
    %489 = arith.mulf %484, %488 : vector<8x32xf32>
    %c3_103 = arith.constant 3 : index
    %c0_104 = arith.constant 0 : index
    %c0_105 = arith.constant 0 : index
    %490 = vector.load %arg1[%c3_103, %c0_104, %c0_105] : memref<7x8x128xf32, #tpu.memory_space<vmem>>, vector<1x8x128xf32>
    %491 = vector.shape_cast %490 : vector<1x8x128xf32> to vector<8x128xf32>
    %cst_106 = arith.constant dense<0.000000e+00> : vector<8x128xf32>
    %492 = tpu.matmul %468, %18, %cst_106 {dimension_numbers = #tpu.dot_dimension_numbers<[1], [0], [0], [1], [0, 0, 1, 1], [], []>} : vector<8x32xf32>, vector<32x128xf32>, vector<8x128xf32> -> vector<8x128xf32>
    %493 = arith.addf %491, %492 : vector<8x128xf32>
    %494 = arith.mulf %493, %8 : vector<8x128xf32>
    %495 = arith.negf %494 : vector<8x128xf32>
    %496 = math.exp %495 : vector<8x128xf32>
    %cst_107 = arith.constant 1.000000e+00 : f32
    %497 = vector.broadcast %cst_107 : f32 to vector<8x128xf32>
    %498 = arith.addf %497, %496 : vector<8x128xf32>
    %499 = arith.divf %497, %498 : vector<8x128xf32>
    %500 = arith.mulf %499, %8 : vector<8x128xf32>
    %501 = arith.addf %500, %11 : vector<8x128xf32>
    %502 = vector.extract_strided_slice %501 {offsets = [0, 0], sizes = [8, 32], strides = [1, 1]} : vector<8x128xf32> to vector<8x32xf32>
    %503 = vector.extract_strided_slice %501 {offsets = [0, 32], sizes = [8, 32], strides = [1, 1]} : vector<8x128xf32> to vector<8x32xf32>
    %504 = vector.extract_strided_slice %501 {offsets = [0, 64], sizes = [8, 32], strides = [1, 1]} : vector<8x128xf32> to vector<8x32xf32>
    %505 = vector.extract_strided_slice %501 {offsets = [0, 96], sizes = [8, 32], strides = [1, 1]} : vector<8x128xf32> to vector<8x32xf32>
    %506 = arith.mulf %503, %466 : vector<8x32xf32>
    %507 = arith.mulf %502, %504 : vector<8x32xf32>
    %508 = arith.addf %506, %507 : vector<8x32xf32>
    %509 = math.tanh %508 : vector<8x32xf32>
    %510 = arith.mulf %505, %509 : vector<8x32xf32>
    %cst_108 = arith.constant dense<0.000000e+00> : vector<8x128xf32>
    %511 = tpu.matmul %510, %19, %cst_108 {dimension_numbers = #tpu.dot_dimension_numbers<[1], [0], [0], [1], [0, 0, 1, 1], [], []>} : vector<8x32xf32>, vector<32x128xf32>, vector<8x128xf32> -> vector<8x128xf32>
    %cst_109 = arith.constant dense<0.000000e+00> : vector<8x128xf32>
    %512 = tpu.matmul %489, %20, %cst_109 {dimension_numbers = #tpu.dot_dimension_numbers<[1], [0], [0], [1], [0, 0, 1, 1], [], []>} : vector<8x32xf32>, vector<32x128xf32>, vector<8x128xf32> -> vector<8x128xf32>
    %513 = arith.addf %511, %512 : vector<8x128xf32>
    %514 = arith.addf %513, %23 : vector<8x128xf32>
    %515 = arith.mulf %514, %8 : vector<8x128xf32>
    %516 = arith.negf %515 : vector<8x128xf32>
    %517 = math.exp %516 : vector<8x128xf32>
    %cst_110 = arith.constant 1.000000e+00 : f32
    %518 = vector.broadcast %cst_110 : f32 to vector<8x128xf32>
    %519 = arith.addf %518, %517 : vector<8x128xf32>
    %520 = arith.divf %518, %519 : vector<8x128xf32>
    %521 = arith.mulf %520, %8 : vector<8x128xf32>
    %522 = arith.addf %521, %11 : vector<8x128xf32>
    %523 = vector.extract_strided_slice %522 {offsets = [0, 0], sizes = [8, 32], strides = [1, 1]} : vector<8x128xf32> to vector<8x32xf32>
    %524 = vector.extract_strided_slice %522 {offsets = [0, 32], sizes = [8, 32], strides = [1, 1]} : vector<8x128xf32> to vector<8x32xf32>
    %525 = vector.extract_strided_slice %522 {offsets = [0, 64], sizes = [8, 32], strides = [1, 1]} : vector<8x128xf32> to vector<8x32xf32>
    %526 = vector.extract_strided_slice %522 {offsets = [0, 96], sizes = [8, 32], strides = [1, 1]} : vector<8x128xf32> to vector<8x32xf32>
    %527 = arith.mulf %524, %487 : vector<8x32xf32>
    %528 = arith.mulf %523, %525 : vector<8x32xf32>
    %529 = arith.addf %527, %528 : vector<8x32xf32>
    %530 = math.tanh %529 : vector<8x32xf32>
    %531 = arith.mulf %526, %530 : vector<8x32xf32>
    %c4_111 = arith.constant 4 : index
    %c0_112 = arith.constant 0 : index
    %c0_113 = arith.constant 0 : index
    %532 = vector.load %arg1[%c4_111, %c0_112, %c0_113] : memref<7x8x128xf32, #tpu.memory_space<vmem>>, vector<1x8x128xf32>
    %533 = vector.shape_cast %532 : vector<1x8x128xf32> to vector<8x128xf32>
    %cst_114 = arith.constant dense<0.000000e+00> : vector<8x128xf32>
    %534 = tpu.matmul %510, %18, %cst_114 {dimension_numbers = #tpu.dot_dimension_numbers<[1], [0], [0], [1], [0, 0, 1, 1], [], []>} : vector<8x32xf32>, vector<32x128xf32>, vector<8x128xf32> -> vector<8x128xf32>
    %535 = arith.addf %533, %534 : vector<8x128xf32>
    %536 = arith.mulf %535, %8 : vector<8x128xf32>
    %537 = arith.negf %536 : vector<8x128xf32>
    %538 = math.exp %537 : vector<8x128xf32>
    %cst_115 = arith.constant 1.000000e+00 : f32
    %539 = vector.broadcast %cst_115 : f32 to vector<8x128xf32>
    %540 = arith.addf %539, %538 : vector<8x128xf32>
    %541 = arith.divf %539, %540 : vector<8x128xf32>
    %542 = arith.mulf %541, %8 : vector<8x128xf32>
    %543 = arith.addf %542, %11 : vector<8x128xf32>
    %544 = vector.extract_strided_slice %543 {offsets = [0, 0], sizes = [8, 32], strides = [1, 1]} : vector<8x128xf32> to vector<8x32xf32>
    %545 = vector.extract_strided_slice %543 {offsets = [0, 32], sizes = [8, 32], strides = [1, 1]} : vector<8x128xf32> to vector<8x32xf32>
    %546 = vector.extract_strided_slice %543 {offsets = [0, 64], sizes = [8, 32], strides = [1, 1]} : vector<8x128xf32> to vector<8x32xf32>
    %547 = vector.extract_strided_slice %543 {offsets = [0, 96], sizes = [8, 32], strides = [1, 1]} : vector<8x128xf32> to vector<8x32xf32>
    %548 = arith.mulf %545, %508 : vector<8x32xf32>
    %549 = arith.mulf %544, %546 : vector<8x32xf32>
    %550 = arith.addf %548, %549 : vector<8x32xf32>
    %551 = math.tanh %550 : vector<8x32xf32>
    %552 = arith.mulf %547, %551 : vector<8x32xf32>
    %cst_116 = arith.constant dense<0.000000e+00> : vector<8x128xf32>
    %553 = tpu.matmul %552, %19, %cst_116 {dimension_numbers = #tpu.dot_dimension_numbers<[1], [0], [0], [1], [0, 0, 1, 1], [], []>} : vector<8x32xf32>, vector<32x128xf32>, vector<8x128xf32> -> vector<8x128xf32>
    %cst_117 = arith.constant dense<0.000000e+00> : vector<8x128xf32>
    %554 = tpu.matmul %531, %20, %cst_117 {dimension_numbers = #tpu.dot_dimension_numbers<[1], [0], [0], [1], [0, 0, 1, 1], [], []>} : vector<8x32xf32>, vector<32x128xf32>, vector<8x128xf32> -> vector<8x128xf32>
    %555 = arith.addf %553, %554 : vector<8x128xf32>
    %556 = arith.addf %555, %23 : vector<8x128xf32>
    %557 = arith.mulf %556, %8 : vector<8x128xf32>
    %558 = arith.negf %557 : vector<8x128xf32>
    %559 = math.exp %558 : vector<8x128xf32>
    %cst_118 = arith.constant 1.000000e+00 : f32
    %560 = vector.broadcast %cst_118 : f32 to vector<8x128xf32>
    %561 = arith.addf %560, %559 : vector<8x128xf32>
    %562 = arith.divf %560, %561 : vector<8x128xf32>
    %563 = arith.mulf %562, %8 : vector<8x128xf32>
    %564 = arith.addf %563, %11 : vector<8x128xf32>
    %565 = vector.extract_strided_slice %564 {offsets = [0, 0], sizes = [8, 32], strides = [1, 1]} : vector<8x128xf32> to vector<8x32xf32>
    %566 = vector.extract_strided_slice %564 {offsets = [0, 32], sizes = [8, 32], strides = [1, 1]} : vector<8x128xf32> to vector<8x32xf32>
    %567 = vector.extract_strided_slice %564 {offsets = [0, 64], sizes = [8, 32], strides = [1, 1]} : vector<8x128xf32> to vector<8x32xf32>
    %568 = vector.extract_strided_slice %564 {offsets = [0, 96], sizes = [8, 32], strides = [1, 1]} : vector<8x128xf32> to vector<8x32xf32>
    %569 = arith.mulf %566, %529 : vector<8x32xf32>
    %570 = arith.mulf %565, %567 : vector<8x32xf32>
    %571 = arith.addf %569, %570 : vector<8x32xf32>
    %572 = math.tanh %571 : vector<8x32xf32>
    %573 = arith.mulf %568, %572 : vector<8x32xf32>
    %c5_119 = arith.constant 5 : index
    %c0_120 = arith.constant 0 : index
    %c0_121 = arith.constant 0 : index
    %574 = vector.load %arg1[%c5_119, %c0_120, %c0_121] : memref<7x8x128xf32, #tpu.memory_space<vmem>>, vector<1x8x128xf32>
    %575 = vector.shape_cast %574 : vector<1x8x128xf32> to vector<8x128xf32>
    %cst_122 = arith.constant dense<0.000000e+00> : vector<8x128xf32>
    %576 = tpu.matmul %552, %18, %cst_122 {dimension_numbers = #tpu.dot_dimension_numbers<[1], [0], [0], [1], [0, 0, 1, 1], [], []>} : vector<8x32xf32>, vector<32x128xf32>, vector<8x128xf32> -> vector<8x128xf32>
    %577 = arith.addf %575, %576 : vector<8x128xf32>
    %578 = arith.mulf %577, %8 : vector<8x128xf32>
    %579 = arith.negf %578 : vector<8x128xf32>
    %580 = math.exp %579 : vector<8x128xf32>
    %cst_123 = arith.constant 1.000000e+00 : f32
    %581 = vector.broadcast %cst_123 : f32 to vector<8x128xf32>
    %582 = arith.addf %581, %580 : vector<8x128xf32>
    %583 = arith.divf %581, %582 : vector<8x128xf32>
    %584 = arith.mulf %583, %8 : vector<8x128xf32>
    %585 = arith.addf %584, %11 : vector<8x128xf32>
    %586 = vector.extract_strided_slice %585 {offsets = [0, 0], sizes = [8, 32], strides = [1, 1]} : vector<8x128xf32> to vector<8x32xf32>
    %587 = vector.extract_strided_slice %585 {offsets = [0, 32], sizes = [8, 32], strides = [1, 1]} : vector<8x128xf32> to vector<8x32xf32>
    %588 = vector.extract_strided_slice %585 {offsets = [0, 64], sizes = [8, 32], strides = [1, 1]} : vector<8x128xf32> to vector<8x32xf32>
    %589 = vector.extract_strided_slice %585 {offsets = [0, 96], sizes = [8, 32], strides = [1, 1]} : vector<8x128xf32> to vector<8x32xf32>
    %590 = arith.mulf %587, %550 : vector<8x32xf32>
    %591 = arith.mulf %586, %588 : vector<8x32xf32>
    %592 = arith.addf %590, %591 : vector<8x32xf32>
    %593 = math.tanh %592 : vector<8x32xf32>
    %594 = arith.mulf %589, %593 : vector<8x32xf32>
    %cst_124 = arith.constant dense<0.000000e+00> : vector<8x128xf32>
    %595 = tpu.matmul %594, %19, %cst_124 {dimension_numbers = #tpu.dot_dimension_numbers<[1], [0], [0], [1], [0, 0, 1, 1], [], []>} : vector<8x32xf32>, vector<32x128xf32>, vector<8x128xf32> -> vector<8x128xf32>
    %cst_125 = arith.constant dense<0.000000e+00> : vector<8x128xf32>
    %596 = tpu.matmul %573, %20, %cst_125 {dimension_numbers = #tpu.dot_dimension_numbers<[1], [0], [0], [1], [0, 0, 1, 1], [], []>} : vector<8x32xf32>, vector<32x128xf32>, vector<8x128xf32> -> vector<8x128xf32>
    %597 = arith.addf %595, %596 : vector<8x128xf32>
    %598 = arith.addf %597, %23 : vector<8x128xf32>
    %599 = arith.mulf %598, %8 : vector<8x128xf32>
    %600 = arith.negf %599 : vector<8x128xf32>
    %601 = math.exp %600 : vector<8x128xf32>
    %cst_126 = arith.constant 1.000000e+00 : f32
    %602 = vector.broadcast %cst_126 : f32 to vector<8x128xf32>
    %603 = arith.addf %602, %601 : vector<8x128xf32>
    %604 = arith.divf %602, %603 : vector<8x128xf32>
    %605 = arith.mulf %604, %8 : vector<8x128xf32>
    %606 = arith.addf %605, %11 : vector<8x128xf32>
    %607 = vector.extract_strided_slice %606 {offsets = [0, 0], sizes = [8, 32], strides = [1, 1]} : vector<8x128xf32> to vector<8x32xf32>
    %608 = vector.extract_strided_slice %606 {offsets = [0, 32], sizes = [8, 32], strides = [1, 1]} : vector<8x128xf32> to vector<8x32xf32>
    %609 = vector.extract_strided_slice %606 {offsets = [0, 64], sizes = [8, 32], strides = [1, 1]} : vector<8x128xf32> to vector<8x32xf32>
    %610 = vector.extract_strided_slice %606 {offsets = [0, 96], sizes = [8, 32], strides = [1, 1]} : vector<8x128xf32> to vector<8x32xf32>
    %611 = arith.mulf %608, %571 : vector<8x32xf32>
    %612 = arith.mulf %607, %609 : vector<8x32xf32>
    %613 = arith.addf %611, %612 : vector<8x32xf32>
    %614 = math.tanh %613 : vector<8x32xf32>
    %615 = arith.mulf %610, %614 : vector<8x32xf32>
    %c6_127 = arith.constant 6 : index
    %c0_128 = arith.constant 0 : index
    %c0_129 = arith.constant 0 : index
    %616 = vector.load %arg1[%c6_127, %c0_128, %c0_129] : memref<7x8x128xf32, #tpu.memory_space<vmem>>, vector<1x8x128xf32>
    %617 = vector.shape_cast %616 : vector<1x8x128xf32> to vector<8x128xf32>
    %cst_130 = arith.constant dense<0.000000e+00> : vector<8x128xf32>
    %618 = tpu.matmul %594, %18, %cst_130 {dimension_numbers = #tpu.dot_dimension_numbers<[1], [0], [0], [1], [0, 0, 1, 1], [], []>} : vector<8x32xf32>, vector<32x128xf32>, vector<8x128xf32> -> vector<8x128xf32>
    %619 = arith.addf %617, %618 : vector<8x128xf32>
    %620 = arith.mulf %619, %8 : vector<8x128xf32>
    %621 = arith.negf %620 : vector<8x128xf32>
    %622 = math.exp %621 : vector<8x128xf32>
    %cst_131 = arith.constant 1.000000e+00 : f32
    %623 = vector.broadcast %cst_131 : f32 to vector<8x128xf32>
    %624 = arith.addf %623, %622 : vector<8x128xf32>
    %625 = arith.divf %623, %624 : vector<8x128xf32>
    %626 = arith.mulf %625, %8 : vector<8x128xf32>
    %627 = arith.addf %626, %11 : vector<8x128xf32>
    %628 = vector.extract_strided_slice %627 {offsets = [0, 0], sizes = [8, 32], strides = [1, 1]} : vector<8x128xf32> to vector<8x32xf32>
    %629 = vector.extract_strided_slice %627 {offsets = [0, 32], sizes = [8, 32], strides = [1, 1]} : vector<8x128xf32> to vector<8x32xf32>
    %630 = vector.extract_strided_slice %627 {offsets = [0, 64], sizes = [8, 32], strides = [1, 1]} : vector<8x128xf32> to vector<8x32xf32>
    %631 = vector.extract_strided_slice %627 {offsets = [0, 96], sizes = [8, 32], strides = [1, 1]} : vector<8x128xf32> to vector<8x32xf32>
    %632 = arith.mulf %629, %592 : vector<8x32xf32>
    %633 = arith.mulf %628, %630 : vector<8x32xf32>
    %634 = arith.addf %632, %633 : vector<8x32xf32>
    %635 = math.tanh %634 : vector<8x32xf32>
    %636 = arith.mulf %631, %635 : vector<8x32xf32>
    %cst_132 = arith.constant dense<0.000000e+00> : vector<8x128xf32>
    %637 = tpu.matmul %636, %19, %cst_132 {dimension_numbers = #tpu.dot_dimension_numbers<[1], [0], [0], [1], [0, 0, 1, 1], [], []>} : vector<8x32xf32>, vector<32x128xf32>, vector<8x128xf32> -> vector<8x128xf32>
    %cst_133 = arith.constant dense<0.000000e+00> : vector<8x128xf32>
    %638 = tpu.matmul %615, %20, %cst_133 {dimension_numbers = #tpu.dot_dimension_numbers<[1], [0], [0], [1], [0, 0, 1, 1], [], []>} : vector<8x32xf32>, vector<32x128xf32>, vector<8x128xf32> -> vector<8x128xf32>
    %639 = arith.addf %637, %638 : vector<8x128xf32>
    %640 = arith.addf %639, %23 : vector<8x128xf32>
    %641 = arith.mulf %640, %8 : vector<8x128xf32>
    %642 = arith.negf %641 : vector<8x128xf32>
    %643 = math.exp %642 : vector<8x128xf32>
    %cst_134 = arith.constant 1.000000e+00 : f32
    %644 = vector.broadcast %cst_134 : f32 to vector<8x128xf32>
    %645 = arith.addf %644, %643 : vector<8x128xf32>
    %646 = arith.divf %644, %645 : vector<8x128xf32>
    %647 = arith.mulf %646, %8 : vector<8x128xf32>
    %648 = arith.addf %647, %11 : vector<8x128xf32>
    %649 = vector.extract_strided_slice %648 {offsets = [0, 0], sizes = [8, 32], strides = [1, 1]} : vector<8x128xf32> to vector<8x32xf32>
    %650 = vector.extract_strided_slice %648 {offsets = [0, 32], sizes = [8, 32], strides = [1, 1]} : vector<8x128xf32> to vector<8x32xf32>
    %651 = vector.extract_strided_slice %648 {offsets = [0, 64], sizes = [8, 32], strides = [1, 1]} : vector<8x128xf32> to vector<8x32xf32>
    %652 = vector.extract_strided_slice %648 {offsets = [0, 96], sizes = [8, 32], strides = [1, 1]} : vector<8x128xf32> to vector<8x32xf32>
    %653 = arith.mulf %650, %613 : vector<8x32xf32>
    %654 = arith.mulf %649, %651 : vector<8x32xf32>
    %655 = arith.addf %653, %654 : vector<8x32xf32>
    %656 = math.tanh %655 : vector<8x32xf32>
    %657 = arith.mulf %652, %656 : vector<8x32xf32>
    %658 = tpu.concatenate %405, %447, %489, %531, %573, %615, %657 in 0 : vector<8x32xf32>, vector<8x32xf32>, vector<8x32xf32>, vector<8x32xf32>, vector<8x32xf32>, vector<8x32xf32>, vector<8x32xf32> -> vector<56x32xf32>
    %c0_135 = arith.constant 0 : index
    %c0_136 = arith.constant 0 : index
    %659 = vector.load %arg10[%c0_135, %c0_136] : memref<32x128xf32, #tpu.memory_space<vmem>>, vector<32x128xf32>
    %cst_137 = arith.constant dense<0.000000e+00> : vector<56x128xf32>
    %660 = tpu.matmul %658, %659, %cst_137 {dimension_numbers = #tpu.dot_dimension_numbers<[1], [0], [0], [1], [0, 0, 1, 1], [], []>} : vector<56x32xf32>, vector<32x128xf32>, vector<56x128xf32> -> vector<56x128xf32>
    %c0_138 = arith.constant 0 : index
    %c0_139 = arith.constant 0 : index
    %661 = vector.load %arg11[%c0_138, %c0_139] : memref<1x128xf32, #tpu.memory_space<vmem>>, vector<1x128xf32>
    %662 = vector.broadcast %661 : vector<1x128xf32> to vector<56x128xf32>
    %663 = arith.addf %660, %662 : vector<56x128xf32>
    %c0_140 = arith.constant 0 : index
    %c0_141 = arith.constant 0 : index
    %664 = vector.load %arg12[%c0_140, %c0_141] : memref<56x128xf32, #tpu.memory_space<vmem>>, vector<56x128xf32>
    tpu.vector_store %arg12[%c0_140, %c0_141], %663 {strides = array<i32>} : memref<56x128xf32, #tpu.memory_space<vmem>>, vector<56x128xf32>,
    return
  }
}

</mosaic_0001>

<llo_original>
// kernel: seq2seq_forward.1
$region0: #{seq2seq_forward.1}
  #allocation0 [shape = 'u32[]', space=smem, size = 0x4, offset = 0x4, fixed_abs, tag = 'smem constant byte address 0x4 - core index']
  #allocation1 [shape = 'u32[72,128]{1,0:T(1,128)}', space=vmem, size = 0x9000, scoped, tag = 'internal scratch']
  %s0 = inlined_call_operand.vmem [shape: f32[8,8,128], index: 0, kind: input, shape index: {}]
  %s1 = inlined_call_operand.vmem [shape: f32[7,8,128], index: 1, kind: input, shape index: {}]
  %s2 = inlined_call_operand.vmem [shape: f32[32,128], index: 2, kind: input, shape index: {}]
  %s3 = inlined_call_operand.vmem [shape: f32[32,128], index: 3, kind: input, shape index: {}]
  %s4 = inlined_call_operand.vmem [shape: f32[32,128], index: 4, kind: input, shape index: {}]
  %s5 = inlined_call_operand.vmem [shape: f32[1,128], index: 5, kind: input, shape index: {}]
  %s6 = inlined_call_operand.vmem [shape: f32[32,128], index: 6, kind: input, shape index: {}]
  %s7 = inlined_call_operand.vmem [shape: f32[32,128], index: 7, kind: input, shape index: {}]
  %s8 = inlined_call_operand.vmem [shape: f32[32,128], index: 8, kind: input, shape index: {}]
  %s9 = inlined_call_operand.vmem [shape: f32[1,128], index: 9, kind: input, shape index: {}]
  %s10 = inlined_call_operand.vmem [shape: f32[32,128], index: 10, kind: input, shape index: {}]
  %s11 = inlined_call_operand.vmem [shape: f32[1,128], index: 11, kind: input, shape index: {}]
  %s12 = inlined_call_operand.vmem [shape: f32[56,128], index: 12, kind: output, shape index: {}]
  %s13 = sld [smem:[#allocation0]]
  $region58: #{seq2seq_forward.1} parent=0
    _
  %s15 = ssub.s32 1, %s13
  %s16 = scalar_select 0, %s15, %s13
  // Predicated region
  $region2: #{seq2seq_forward.1} parent=0 // pred_check
    _
  $region3: #{seq2seq_forward.1} parent=0 // pred_check_branch
    %18 = sbr.rel (0) target = $region5
  $region4: #{seq2seq_forward.1} parent=0 // pred_region
    _
  $region5: #{seq2seq_forward.1} parent=0 // pred_fallthru
    _
  // Predicated region
  $region6: #{seq2seq_forward.1} parent=0 // pred_check
    _
  $region7: #{seq2seq_forward.1} parent=0 // pred_check_branch
    %20 = sbr.rel (0) target = $region9
  $region8: #{seq2seq_forward.1} parent=0 // pred_region
    _
  $region9: #{seq2seq_forward.1} parent=0 // pred_fallthru
    _
  // Predicated region
  $region10: #{seq2seq_forward.1} parent=0 // pred_check
    _
  $region11: #{seq2seq_forward.1} parent=0 // pred_check_branch
    %22 = sbr.rel (0) target = $region13
  $region12: #{seq2seq_forward.1} parent=0 // pred_region
    _
  $region13: #{seq2seq_forward.1} parent=0 // pred_fallthru
    _
  // Predicated region
  $region14: #{seq2seq_forward.1} parent=0 // pred_check
    _
  $region15: #{seq2seq_forward.1} parent=0 // pred_check_branch
    %24 = sbr.rel (0) target = $region17
  $region16: #{seq2seq_forward.1} parent=0 // pred_region
    _
  $region17: #{seq2seq_forward.1} parent=0 // pred_fallthru
    _
  // Predicated region
  $region18: #{seq2seq_forward.1} parent=0 // pred_check
    _
  $region19: #{seq2seq_forward.1} parent=0 // pred_check_branch
    %26 = sbr.rel (0) target = $region21
  $region20: #{seq2seq_forward.1} parent=0 // pred_region
    _
  $region21: #{seq2seq_forward.1} parent=0 // pred_fallthru
    _
  // Predicated region
  $region22: #{seq2seq_forward.1} parent=0 // pred_check
    _
  $region23: #{seq2seq_forward.1} parent=0 // pred_check_branch
    %28 = sbr.rel (0) target = $region25
  $region24: #{seq2seq_forward.1} parent=0 // pred_region
    _
  $region25: #{seq2seq_forward.1} parent=0 // pred_fallthru
    _
  // Predicated region
  $region26: #{seq2seq_forward.1} parent=0 // pred_check
    _
  $region27: #{seq2seq_forward.1} parent=0 // pred_check_branch
    %30 = sbr.rel (0) target = $region29
  $region28: #{seq2seq_forward.1} parent=0 // pred_region
    _
  $region29: #{seq2seq_forward.1} parent=0 // pred_fallthru
    _
  // Predicated region
  $region30: #{seq2seq_forward.1} parent=0 // pred_check
    _
  $region31: #{seq2seq_forward.1} parent=0 // pred_check_branch
    %32 = sbr.rel (0) target = $region33
  $region32: #{seq2seq_forward.1} parent=0 // pred_region
    _
  $region33: #{seq2seq_forward.1} parent=0 // pred_fallthru
    _
  // Predicated region
  $region34: #{seq2seq_forward.1} parent=0 // pred_check
    _
  $region35: #{seq2seq_forward.1} parent=0 // pred_check_branch
    %34 = sbr.rel (0) target = $region37
  $region36: #{seq2seq_forward.1} parent=0 // pred_region
    _
  $region37: #{seq2seq_forward.1} parent=0 // pred_fallthru
    _
  // Predicated region
  $region38: #{seq2seq_forward.1} parent=0 // pred_check
    _
  $region39: #{seq2seq_forward.1} parent=0 // pred_check_branch
    %36 = sbr.rel (0) target = $region41
  $region40: #{seq2seq_forward.1} parent=0 // pred_region
    _
  $region41: #{seq2seq_forward.1} parent=0 // pred_fallthru
    _
  // Predicated region
  $region42: #{seq2seq_forward.1} parent=0 // pred_check
    _
  $region43: #{seq2seq_forward.1} parent=0 // pred_check_branch
    %38 = sbr.rel (0) target = $region45
  $region44: #{seq2seq_forward.1} parent=0 // pred_region
    _
  $region45: #{seq2seq_forward.1} parent=0 // pred_fallthru
    _
  // Predicated region
  $region46: #{seq2seq_forward.1} parent=0 // pred_check
    _
  $region47: #{seq2seq_forward.1} parent=0 // pred_check_branch
    %40 = sbr.rel (0) target = $region49
  $region48: #{seq2seq_forward.1} parent=0 // pred_region
    _
  $region49: #{seq2seq_forward.1} parent=0 // pred_fallthru
    _
  %v41 = vlaneseq
  %v42 = vand.u32 %v41, 127
  %vm43 = vcmp.ge.s32.totalorder %v42, 64
  %vm44 = vcmp.lt.s32.totalorder %v42, 96
  %vm45 = vmand %vm43, %vm44
  %v46 = vsel %vm45, 2.0, 1.0
  %v47 = vsel %vm45, -1.0, 0.0
  %v48 = vld [vmem:[%s2] sm:$0xff]
  %v49 = vld [vmem:[%s2 + $0x8] sm:$0xff]
  %v50 = vld [vmem:[%s2 + $0x10] sm:$0xff]
  %v51 = vld [vmem:[%s2 + $0x18] sm:$0xff]
  %v52 = vld [vmem:[%s3] sm:$0xff]
  %v53 = vld [vmem:[%s3 + $0x8] sm:$0xff]
  %v54 = vld [vmem:[%s3 + $0x10] sm:$0xff]
  %v55 = vld [vmem:[%s3 + $0x18] sm:$0xff]
  %v56 = vld [vmem:[%s4] sm:$0xff]
  %v57 = vld [vmem:[%s4 + $0x8] sm:$0xff]
  %v58 = vld [vmem:[%s4 + $0x10] sm:$0xff]
  %v59 = vld [vmem:[%s4 + $0x18] sm:$0xff]
  %v60 = vld [vmem:[%s5] sm:$0x1]
  %v62 = vperm.slane %v60, 0
  %v64 = vld [vmem:[%s6] sm:$0xff]
  %v65 = vld [vmem:[%s6 + $0x8] sm:$0xff]
  %v66 = vld [vmem:[%s6 + $0x10] sm:$0xff]
  %v67 = vld [vmem:[%s6 + $0x18] sm:$0xff]
  %v68 = vld [vmem:[%s7] sm:$0xff]
  %v69 = vld [vmem:[%s7 + $0x8] sm:$0xff]
  %v70 = vld [vmem:[%s7 + $0x10] sm:$0xff]
  %v71 = vld [vmem:[%s7 + $0x18] sm:$0xff]
  %v72 = vld [vmem:[%s8] sm:$0xff]
  %v73 = vld [vmem:[%s8 + $0x8] sm:$0xff]
  %v74 = vld [vmem:[%s8 + $0x10] sm:$0xff]
  %v75 = vld [vmem:[%s8 + $0x18] sm:$0xff]
  %v76 = vld [vmem:[%s9] sm:$0x1]
  %v78 = vperm.slane %v76, 0
  %v80 = vld [vmem:[%s0] sm:$0xff]
  %vm81 = vcmask 261120
  %v83 = vsel %vm81, 0.0, 0
  %85 = vmatpush.msra.mxu0 0.0
  %86 = vmatpush.msra.mxu0 0.0
  %87 = vmatpush.msra.mxu0 0.0
  %88 = vmatpush.msra.mxu0 0.0
  %89 = vmatpush.msra.mxu0 0.0
  %90 = vmatpush.msra.mxu0 0.0
  %91 = vmatpush.msra.mxu0 0.0
  %92 = vmatpush.msra.mxu0 0.0
  %93 = vmatpush.msra.mxu0 0.0
  %94 = vmatpush.msra.mxu0 0.0
  %95 = vmatpush.msra.mxu0 0.0
  %96 = vmatpush.msra.mxu0 0.0
  %97 = vmatpush.msra.mxu0 %v51
  %98 = vmatpush.msra.mxu0 %v50
  %99 = vmatpush.msra.mxu0 %v49
  %100 = vmatpush.msra.mxu0 %v48
  %101 = vmatmul.f32.gmra.mxu0 %v83
  %v102 = vpop.f32.mrf.mxu0
  %v103 = vadd.f32 0.0, %v102
  %104 = vdwg.mxu0
  %v105 = vadd.f32 %v80, %v103
  %v106 = vmul.f32 %v105, %v46
  %v107 = vxor.u32 %v106, 2147483648
  %v108 = vmul.f32 %v107, 1.442695
  %v109 = vpow.pop %v108
  %v110 = vadd.f32 %v109, 1.0
  %v111 = vrcp.pop %v110
  %v112 = vmul.f32 %v110, %v111
  %v113 = vsub.f32 1.0, %v112
  %v114 = vmul.f32 %v111, %v113
  %v115 = vadd.f32 %v111, %v114
  %vm116 = vweird.f32 %v110
  %vm117 = vweird.f32 %v111
  %vm118 = vmor %vm116, %vm117
  %v119 = vsel %vm118, %v111, %v115
  %v120 = vand.u32 2147483647, %v110
  %vm121 = vcmp.eq.f32.partialorder %v120, 8.507059e+37
  %v122 = vand.u32 %v110, 2147483648
  %v123 = vor.u32 1.1754944e-38, %v122
  %v124 = vsel %vm121, %v123, %v119
  %v125 = vmul.f32 1.0, %v124
  %v126 = vmul.f32 %v125, %v46
  %v127 = vadd.f32 %v126, %v47
  %v128 = vmul.f32 %v127, 0.0
  %130 = vrot.lane.b32.xlu0 %v127, 64
  %v131 = vpop.permute.xlu0 %130
  %v133 = vmul.f32 %v127, %v131
  %135 = vrot.lane.b32.xlu0 %v133, 32
  %v136 = vpop.permute.xlu0 %135
  %v138 = vadd.f32 %v128, %v136
  %v139 = vtanh.pop %v138
  %141 = vrot.lane.b32.xlu0 %v139, 64
  %v142 = vpop.permute.xlu0 %141
  %v144 = vmul.f32 %v127, %v142
  %145 = vmatpush.msra.mxu0 0.0
  %146 = vmatpush.msra.mxu0 0.0
  %147 = vmatpush.msra.mxu0 0.0
  %148 = vmatpush.msra.mxu0 0.0
  %149 = vmatpush.msra.mxu0 0.0
  %150 = vmatpush.msra.mxu0 0.0
  %151 = vmatpush.msra.mxu0 0.0
  %152 = vmatpush.msra.mxu0 0.0
  %153 = vmatpush.msra.mxu0 0.0
  %154 = vmatpush.msra.mxu0 0.0
  %155 = vmatpush.msra.mxu0 0.0
  %156 = vmatpush.msra.mxu0 0.0
  %157 = vmatpush.msra.mxu0 %v59
  %158 = vmatpush.msra.mxu0 %v58
  %159 = vmatpush.msra.mxu0 %v57
  %160 = vmatpush.msra.mxu0 %v56
  %161 = vmatmul.f32.gmra.mxu0 %v83
  %v162 = vpop.f32.mrf.mxu0
  %v163 = vadd.f32 0.0, %v162
  %164 = vdwg.mxu0
  %166 = vrot.lane.b32.xlu0 %v144, 32
  %v167 = vpop.permute.xlu0 %166
  %v168 = vsel %vm81, %v167, 0
  %170 = vmatpush.msra.mxu0 0.0
  %171 = vmatpush.msra.mxu0 0.0
  %172 = vmatpush.msra.mxu0 0.0
  %173 = vmatpush.msra.mxu0 0.0
  %174 = vmatpush.msra.mxu0 0.0
  %175 = vmatpush.msra.mxu0 0.0
  %176 = vmatpush.msra.mxu0 0.0
  %177 = vmatpush.msra.mxu0 0.0
  %178 = vmatpush.msra.mxu0 0.0
  %179 = vmatpush.msra.mxu0 0.0
  %180 = vmatpush.msra.mxu0 0.0
  %181 = vmatpush.msra.mxu0 0.0
  %182 = vmatpush.msra.mxu0 %v55
  %183 = vmatpush.msra.mxu0 %v54
  %184 = vmatpush.msra.mxu0 %v53
  %185 = vmatpush.msra.mxu0 %v52
  %186 = vmatmul.f32.gmra.mxu0 %v168
  %v187 = vpop.f32.mrf.mxu0
  %v188 = vadd.f32 %v163, %v187
  %189 = vdwg.mxu0
  %v190 = vadd.f32 %v188, %v62
  %v191 = vmul.f32 %v190, %v46
  %v192 = vxor.u32 %v191, 2147483648
  %v193 = vmul.f32 %v192, 1.442695
  %v194 = vpow.pop %v193
  %v195 = vadd.f32 %v194, 1.0
  %v196 = vrcp.pop %v195
  %v197 = vmul.f32 %v195, %v196
  %v198 = vsub.f32 1.0, %v197
  %v199 = vmul.f32 %v196, %v198
  %v200 = vadd.f32 %v196, %v199
  %vm201 = vweird.f32 %v195
  %vm202 = vweird.f32 %v196
  %vm203 = vmor %vm201, %vm202
  %v204 = vsel %vm203, %v196, %v200
  %v205 = vand.u32 2147483647, %v195
  %vm206 = vcmp.eq.f32.partialorder %v205, 8.507059e+37
  %v207 = vand.u32 %v195, 2147483648
  %v208 = vor.u32 1.1754944e-38, %v207
  %v209 = vsel %vm206, %v208, %v204
  %v210 = vmul.f32 1.0, %v209
  %v211 = vmul.f32 %v210, %v46
  %v212 = vadd.f32 %v211, %v47
  %v213 = vmul.f32 %v212, 0.0
  %215 = vrot.lane.b32.xlu0 %v212, 64
  %v216 = vpop.permute.xlu0 %215
  %v218 = vmul.f32 %v212, %v216
  %220 = vrot.lane.b32.xlu0 %v218, 32
  %v221 = vpop.permute.xlu0 %220
  %v223 = vadd.f32 %v213, %v221
  %v224 = vtanh.pop %v223
  %226 = vrot.lane.b32.xlu0 %v224, 64
  %v227 = vpop.permute.xlu0 %226
  %v229 = vmul.f32 %v212, %v227
  %s230 = scalar_lea.vmem %s0, 8
  %v231 = vld [vmem:[%s230] sm:$0xff]
  %232 = vmatpush.msra.mxu0 0.0
  %233 = vmatpush.msra.mxu0 0.0
  %234 = vmatpush.msra.mxu0 0.0
  %235 = vmatpush.msra.mxu0 0.0
  %236 = vmatpush.msra.mxu0 0.0
  %237 = vmatpush.msra.mxu0 0.0
  %238 = vmatpush.msra.mxu0 0.0
  %239 = vmatpush.msra.mxu0 0.0
  %240 = vmatpush.msra.mxu0 0.0
  %241 = vmatpush.msra.mxu0 0.0
  %242 = vmatpush.msra.mxu0 0.0
  %243 = vmatpush.msra.mxu0 0.0
  %244 = vmatpush.msra.mxu0 %v51
  %245 = vmatpush.msra.mxu0 %v50
  %246 = vmatpush.msra.mxu0 %v49
  %247 = vmatpush.msra.mxu0 %v48
  %248 = vmatmul.f32.gmra.mxu0 %v168
  %v249 = vpop.f32.mrf.mxu0
  %v250 = vadd.f32 0.0, %v249
  %251 = vdwg.mxu0
  %v252 = vadd.f32 %v231, %v250
  %v253 = vmul.f32 %v252, %v46
  %v254 = vxor.u32 %v253, 2147483648
  %v255 = vmul.f32 %v254, 1.442695
  %v256 = vpow.pop %v255
  %v257 = vadd.f32 %v256, 1.0
  %v258 = vrcp.pop %v257
  %v259 = vmul.f32 %v257, %v258
  %v260 = vsub.f32 1.0, %v259
  %v261 = vmul.f32 %v258, %v260
  %v262 = vadd.f32 %v258, %v261
  %vm263 = vweird.f32 %v257
  %vm264 = vweird.f32 %v258
  %vm265 = vmor %vm263, %vm264
  %v266 = vsel %vm265, %v258, %v262
  %v267 = vand.u32 2147483647, %v257
  %vm268 = vcmp.eq.f32.partialorder %v267, 8.507059e+37
  %v269 = vand.u32 %v257, 2147483648
  %v270 = vor.u32 1.1754944e-38, %v269
  %v271 = vsel %vm268, %v270, %v266
  %v272 = vmul.f32 1.0, %v271
  %v273 = vmul.f32 %v272, %v46
  %v274 = vadd.f32 %v273, %v47
  %v275 = vmul.f32 %v274, %v138
  %277 = vrot.lane.b32.xlu0 %v274, 64
  %v278 = vpop.permute.xlu0 %277
  %v280 = vmul.f32 %v274, %v278
  %282 = vrot.lane.b32.xlu0 %v280, 32
  %v283 = vpop.permute.xlu0 %282
  %v285 = vadd.f32 %v275, %v283
  %v286 = vtanh.pop %v285
  %288 = vrot.lane.b32.xlu0 %v286, 64
  %v289 = vpop.permute.xlu0 %288
  %v291 = vmul.f32 %v274, %v289
  %293 = vrot.lane.b32.xlu0 %v229, 32
  %v294 = vpop.permute.xlu0 %293
  %v295 = vsel %vm81, %v294, 0
  %297 = vmatpush.msra.mxu0 0.0
  %298 = vmatpush.msra.mxu0 0.0
  %299 = vmatpush.msra.mxu0 0.0
  %300 = vmatpush.msra.mxu0 0.0
  %301 = vmatpush.msra.mxu0 0.0
  %302 = vmatpush.msra.mxu0 0.0
  %303 = vmatpush.msra.mxu0 0.0
  %304 = vmatpush.msra.mxu0 0.0
  %305 = vmatpush.msra.mxu0 0.0
  %306 = vmatpush.msra.mxu0 0.0
  %307 = vmatpush.msra.mxu0 0.0
  %308 = vmatpush.msra.mxu0 0.0
  %309 = vmatpush.msra.mxu0 %v59
  %310 = vmatpush.msra.mxu0 %v58
  %311 = vmatpush.msra.mxu0 %v57
  %312 = vmatpush.msra.mxu0 %v56
  %313 = vmatmul.f32.gmra.mxu0 %v295
  %v314 = vpop.f32.mrf.mxu0
  %v315 = vadd.f32 0.0, %v314
  %316 = vdwg.mxu0
  %318 = vrot.lane.b32.xlu0 %v291, 32
  %v319 = vpop.permute.xlu0 %318
  %v320 = vsel %vm81, %v319, 0
  %322 = vmatpush.msra.mxu0 0.0
  %323 = vmatpush.msra.mxu0 0.0
  %324 = vmatpush.msra.mxu0 0.0
  %325 = vmatpush.msra.mxu0 0.0
  %326 = vmatpush.msra.mxu0 0.0
  %327 = vmatpush.msra.mxu0 0.0
  %328 = vmatpush.msra.mxu0 0.0
  %329 = vmatpush.msra.mxu0 0.0
  %330 = vmatpush.msra.mxu0 0.0
  %331 = vmatpush.msra.mxu0 0.0
  %332 = vmatpush.msra.mxu0 0.0
  %333 = vmatpush.msra.mxu0 0.0
  %334 = vmatpush.msra.mxu0 %v55
  %335 = vmatpush.msra.mxu0 %v54
  %336 = vmatpush.msra.mxu0 %v53
  %337 = vmatpush.msra.mxu0 %v52
  %338 = vmatmul.f32.gmra.mxu0 %v320
  %v339 = vpop.f32.mrf.mxu0
  %v340 = vadd.f32 %v315, %v339
  %341 = vdwg.mxu0
  %v342 = vadd.f32 %v340, %v62
  %v343 = vmul.f32 %v342, %v46
  %v344 = vxor.u32 %v343, 2147483648
  %v345 = vmul.f32 %v344, 1.442695
  %v346 = vpow.pop %v345
  %v347 = vadd.f32 %v346, 1.0
  %v348 = vrcp.pop %v347
  %v349 = vmul.f32 %v347, %v348
  %v350 = vsub.f32 1.0, %v349
  %v351 = vmul.f32 %v348, %v350
  %v352 = vadd.f32 %v348, %v351
  %vm353 = vweird.f32 %v347
  %vm354 = vweird.f32 %v348
  %vm355 = vmor %vm353, %vm354
  %v356 = vsel %vm355, %v348, %v352
  %v357 = vand.u32 2147483647, %v347
  %vm358 = vcmp.eq.f32.partialorder %v357, 8.507059e+37
  %v359 = vand.u32 %v347, 2147483648
  %v360 = vor.u32 1.1754944e-38, %v359
  %v361 = vsel %vm358, %v360, %v356
  %v362 = vmul.f32 1.0, %v361
  %v363 = vmul.f32 %v362, %v46
  %v364 = vadd.f32 %v363, %v47
  %v365 = vmul.f32 %v364, %v223
  %367 = vrot.lane.b32.xlu0 %v364, 64
  %v368 = vpop.permute.xlu0 %367
  %v370 = vmul.f32 %v364, %v368
  %372 = vrot.lane.b32.xlu0 %v370, 32
  %v373 = vpop.permute.xlu0 %372
  %v375 = vadd.f32 %v365, %v373
  %v376 = vtanh.pop %v375
  %378 = vrot.lane.b32.xlu0 %v376, 64
  %v379 = vpop.permute.xlu0 %378
  %v381 = vmul.f32 %v364, %v379
  %s382 = scalar_lea.vmem %s0, 16
  %v383 = vld [vmem:[%s382] sm:$0xff]
  %384 = vmatpush.msra.mxu0 0.0
  %385 = vmatpush.msra.mxu0 0.0
  %386 = vmatpush.msra.mxu0 0.0
  %387 = vmatpush.msra.mxu0 0.0
  %388 = vmatpush.msra.mxu0 0.0
  %389 = vmatpush.msra.mxu0 0.0
  %390 = vmatpush.msra.mxu0 0.0
  %391 = vmatpush.msra.mxu0 0.0
  %392 = vmatpush.msra.mxu0 0.0
  %393 = vmatpush.msra.mxu0 0.0
  %394 = vmatpush.msra.mxu0 0.0
  %395 = vmatpush.msra.mxu0 0.0
  %396 = vmatpush.msra.mxu0 %v51
  %397 = vmatpush.msra.mxu0 %v50
  %398 = vmatpush.msra.mxu0 %v49
  %399 = vmatpush.msra.mxu0 %v48
  %400 = vmatmul.f32.gmra.mxu0 %v320
  %v401 = vpop.f32.mrf.mxu0
  %v402 = vadd.f32 0.0, %v401
  %403 = vdwg.mxu0
  %v404 = vadd.f32 %v383, %v402
  %v405 = vmul.f32 %v404, %v46
  %v406 = vxor.u32 %v405, 2147483648
  %v407 = vmul.f32 %v406, 1.442695
  %v408 = vpow.pop %v407
  %v409 = vadd.f32 %v408, 1.0
  %v410 = vrcp.pop %v409
  %v411 = vmul.f32 %v409, %v410
  %v412 = vsub.f32 1.0, %v411
  %v413 = vmul.f32 %v410, %v412
  %v414 = vadd.f32 %v410, %v413
  %vm415 = vweird.f32 %v409
  %vm416 = vweird.f32 %v410
  %vm417 = vmor %vm415, %vm416
  %v418 = vsel %vm417, %v410, %v414
  %v419 = vand.u32 2147483647, %v409
  %vm420 = vcmp.eq.f32.partialorder %v419, 8.507059e+37
  %v421 = vand.u32 %v409, 2147483648
  %v422 = vor.u32 1.1754944e-38, %v421
  %v423 = vsel %vm420, %v422, %v418
  %v424 = vmul.f32 1.0, %v423
  %v425 = vmul.f32 %v424, %v46
  %v426 = vadd.f32 %v425, %v47
  %v427 = vmul.f32 %v426, %v285
  %429 = vrot.lane.b32.xlu0 %v426, 64
  %v430 = vpop.permute.xlu0 %429
  %v432 = vmul.f32 %v426, %v430
  %434 = vrot.lane.b32.xlu0 %v432, 32
  %v435 = vpop.permute.xlu0 %434
  %v437 = vadd.f32 %v427, %v435
  %v438 = vtanh.pop %v437
  %440 = vrot.lane.b32.xlu0 %v438, 64
  %v441 = vpop.permute.xlu0 %440
  %v443 = vmul.f32 %v426, %v441
  %445 = vrot.lane.b32.xlu0 %v381, 32
  %v446 = vpop.permute.xlu0 %445
  %v447 = vsel %vm81, %v446, 0
  %449 = vmatpush.msra.mxu0 0.0
  %450 = vmatpush.msra.mxu0 0.0
  %451 = vmatpush.msra.mxu0 0.0
  %452 = vmatpush.msra.mxu0 0.0
  %453 = vmatpush.msra.mxu0 0.0
  %454 = vmatpush.msra.mxu0 0.0
  %455 = vmatpush.msra.mxu0 0.0
  %456 = vmatpush.msra.mxu0 0.0
  %457 = vmatpush.msra.mxu0 0.0
  %458 = vmatpush.msra.mxu0 0.0
  %459 = vmatpush.msra.mxu0 0.0
  %460 = vmatpush.msra.mxu0 0.0
  %461 = vmatpush.msra.mxu0 %v59
  %462 = vmatpush.msra.mxu0 %v58
  %463 = vmatpush.msra.mxu0 %v57
  %464 = vmatpush.msra.mxu0 %v56
  %465 = vmatmul.f32.gmra.mxu0 %v447
  %v466 = vpop.f32.mrf.mxu0
  %v467 = vadd.f32 0.0, %v466
  %468 = vdwg.mxu0
  %470 = vrot.lane.b32.xlu0 %v443, 32
  %v471 = vpop.permute.xlu0 %470
  %v472 = vsel %vm81, %v471, 0
  %474 = vmatpush.msra.mxu0 0.0
  %475 = vmatpush.msra.mxu0 0.0
  %476 = vmatpush.msra.mxu0 0.0
  %477 = vmatpush.msra.mxu0 0.0
  %478 = vmatpush.msra.mxu0 0.0
  %479 = vmatpush.msra.mxu0 0.0
  %480 = vmatpush.msra.mxu0 0.0
  %481 = vmatpush.msra.mxu0 0.0
  %482 = vmatpush.msra.mxu0 0.0
  %483 = vmatpush.msra.mxu0 0.0
  %484 = vmatpush.msra.mxu0 0.0
  %485 = vmatpush.msra.mxu0 0.0
  %486 = vmatpush.msra.mxu0 %v55
  %487 = vmatpush.msra.mxu0 %v54
  %488 = vmatpush.msra.mxu0 %v53
  %489 = vmatpush.msra.mxu0 %v52
  %490 = vmatmul.f32.gmra.mxu0 %v472
  %v491 = vpop.f32.mrf.mxu0
  %v492 = vadd.f32 %v467, %v491
  %493 = vdwg.mxu0
  %v494 = vadd.f32 %v492, %v62
  %v495 = vmul.f32 %v494, %v46
  %v496 = vxor.u32 %v495, 2147483648
  %v497 = vmul.f32 %v496, 1.442695
  %v498 = vpow.pop %v497
  %v499 = vadd.f32 %v498, 1.0
  %v500 = vrcp.pop %v499
  %v501 = vmul.f32 %v499, %v500
  %v502 = vsub.f32 1.0, %v501
  %v503 = vmul.f32 %v500, %v502
  %v504 = vadd.f32 %v500, %v503
  %vm505 = vweird.f32 %v499
  %vm506 = vweird.f32 %v500
  %vm507 = vmor %vm505, %vm506
  %v508 = vsel %vm507, %v500, %v504
  %v509 = vand.u32 2147483647, %v499
  %vm510 = vcmp.eq.f32.partialorder %v509, 8.507059e+37
  %v511 = vand.u32 %v499, 2147483648
  %v512 = vor.u32 1.1754944e-38, %v511
  %v513 = vsel %vm510, %v512, %v508
  %v514 = vmul.f32 1.0, %v513
  %v515 = vmul.f32 %v514, %v46
  %v516 = vadd.f32 %v515, %v47
  %v517 = vmul.f32 %v516, %v375
  %519 = vrot.lane.b32.xlu0 %v516, 64
  %v520 = vpop.permute.xlu0 %519
  %v522 = vmul.f32 %v516, %v520
  %524 = vrot.lane.b32.xlu0 %v522, 32
  %v525 = vpop.permute.xlu0 %524
  %v527 = vadd.f32 %v517, %v525
  %v528 = vtanh.pop %v527
  %530 = vrot.lane.b32.xlu0 %v528, 64
  %v531 = vpop.permute.xlu0 %530
  %v533 = vmul.f32 %v516, %v531
  %s534 = scalar_lea.vmem %s0, 24
  %v535 = vld [vmem:[%s534] sm:$0xff]
  %536 = vmatpush.msra.mxu0 0.0
  %537 = vmatpush.msra.mxu0 0.0
  %538 = vmatpush.msra.mxu0 0.0
  %539 = vmatpush.msra.mxu0 0.0
  %540 = vmatpush.msra.mxu0 0.0
  %541 = vmatpush.msra.mxu0 0.0
  %542 = vmatpush.msra.mxu0 0.0
  %543 = vmatpush.msra.mxu0 0.0
  %544 = vmatpush.msra.mxu0 0.0
  %545 = vmatpush.msra.mxu0 0.0
  %546 = vmatpush.msra.mxu0 0.0
  %547 = vmatpush.msra.mxu0 0.0
  %548 = vmatpush.msra.mxu0 %v51
  %549 = vmatpush.msra.mxu0 %v50
  %550 = vmatpush.msra.mxu0 %v49
  %551 = vmatpush.msra.mxu0 %v48
  %552 = vmatmul.f32.gmra.mxu0 %v472
  %v553 = vpop.f32.mrf.mxu0
  %v554 = vadd.f32 0.0, %v553
  %555 = vdwg.mxu0
  %v556 = vadd.f32 %v535, %v554
  %v557 = vmul.f32 %v556, %v46
  %v558 = vxor.u32 %v557, 2147483648
  %v559 = vmul.f32 %v558, 1.442695
  %v560 = vpow.pop %v559
  %v561 = vadd.f32 %v560, 1.0
  %v562 = vrcp.pop %v561
  %v563 = vmul.f32 %v561, %v562
  %v564 = vsub.f32 1.0, %v563
  %v565 = vmul.f32 %v562, %v564
  %v566 = vadd.f32 %v562, %v565
  %vm567 = vweird.f32 %v561
  %vm568 = vweird.f32 %v562
  %vm569 = vmor %vm567, %vm568
  %v570 = vsel %vm569, %v562, %v566
  %v571 = vand.u32 2147483647, %v561
  %vm572 = vcmp.eq.f32.partialorder %v571, 8.507059e+37
  %v573 = vand.u32 %v561, 2147483648
  %v574 = vor.u32 1.1754944e-38, %v573
  %v575 = vsel %vm572, %v574, %v570
  %v576 = vmul.f32 1.0, %v575
  %v577 = vmul.f32 %v576, %v46
  %v578 = vadd.f32 %v577, %v47
  %v579 = vmul.f32 %v578, %v437
  %581 = vrot.lane.b32.xlu0 %v578, 64
  %v582 = vpop.permute.xlu0 %581
  %v584 = vmul.f32 %v578, %v582
  %586 = vrot.lane.b32.xlu0 %v584, 32
  %v587 = vpop.permute.xlu0 %586
  %v589 = vadd.f32 %v579, %v587
  %v590 = vtanh.pop %v589
  %592 = vrot.lane.b32.xlu0 %v590, 64
  %v593 = vpop.permute.xlu0 %592
  %v595 = vmul.f32 %v578, %v593
  %597 = vrot.lane.b32.xlu0 %v533, 32
  %v598 = vpop.permute.xlu0 %597
  %v599 = vsel %vm81, %v598, 0
  %601 = vmatpush.msra.mxu0 0.0
  %602 = vmatpush.msra.mxu0 0.0
  %603 = vmatpush.msra.mxu0 0.0
  %604 = vmatpush.msra.mxu0 0.0
  %605 = vmatpush.msra.mxu0 0.0
  %606 = vmatpush.msra.mxu0 0.0
  %607 = vmatpush.msra.mxu0 0.0
  %608 = vmatpush.msra.mxu0 0.0
  %609 = vmatpush.msra.mxu0 0.0
  %610 = vmatpush.msra.mxu0 0.0
  %611 = vmatpush.msra.mxu0 0.0
  %612 = vmatpush.msra.mxu0 0.0
  %613 = vmatpush.msra.mxu0 %v59
  %614 = vmatpush.msra.mxu0 %v58
  %615 = vmatpush.msra.mxu0 %v57
  %616 = vmatpush.msra.mxu0 %v56
  %617 = vmatmul.f32.gmra.mxu0 %v599
  %v618 = vpop.f32.mrf.mxu0
  %v619 = vadd.f32 0.0, %v618
  %620 = vdwg.mxu0
  %622 = vrot.lane.b32.xlu0 %v595, 32
  %v623 = vpop.permute.xlu0 %622
  %v624 = vsel %vm81, %v623, 0
  %626 = vmatpush.msra.mxu0 0.0
  %627 = vmatpush.msra.mxu0 0.0
  %628 = vmatpush.msra.mxu0 0.0
  %629 = vmatpush.msra.mxu0 0.0
  %630 = vmatpush.msra.mxu0 0.0
  %631 = vmatpush.msra.mxu0 0.0
  %632 = vmatpush.msra.mxu0 0.0
  %633 = vmatpush.msra.mxu0 0.0
  %634 = vmatpush.msra.mxu0 0.0
  %635 = vmatpush.msra.mxu0 0.0
  %636 = vmatpush.msra.mxu0 0.0
  %637 = vmatpush.msra.mxu0 0.0
  %638 = vmatpush.msra.mxu0 %v55
  %639 = vmatpush.msra.mxu0 %v54
  %640 = vmatpush.msra.mxu0 %v53
  %641 = vmatpush.msra.mxu0 %v52
  %642 = vmatmul.f32.gmra.mxu0 %v624
  %v643 = vpop.f32.mrf.mxu0
  %v644 = vadd.f32 %v619, %v643
  %645 = vdwg.mxu0
  %v646 = vadd.f32 %v644, %v62
  %v647 = vmul.f32 %v646, %v46
  %v648 = vxor.u32 %v647, 2147483648
  %v649 = vmul.f32 %v648, 1.442695
  %v650 = vpow.pop %v649
  %v651 = vadd.f32 %v650, 1.0
  %v652 = vrcp.pop %v651
  %v653 = vmul.f32 %v651, %v652
  %v654 = vsub.f32 1.0, %v653
  %v655 = vmul.f32 %v652, %v654
  %v656 = vadd.f32 %v652, %v655
  %vm657 = vweird.f32 %v651
  %vm658 = vweird.f32 %v652
  %vm659 = vmor %vm657, %vm658
  %v660 = vsel %vm659, %v652, %v656
  %v661 = vand.u32 2147483647, %v651
  %vm662 = vcmp.eq.f32.partialorder %v661, 8.507059e+37
  %v663 = vand.u32 %v651, 2147483648
  %v664 = vor.u32 1.1754944e-38, %v663
  %v665 = vsel %vm662, %v664, %v660
  %v666 = vmul.f32 1.0, %v665
  %v667 = vmul.f32 %v666, %v46
  %v668 = vadd.f32 %v667, %v47
  %v669 = vmul.f32 %v668, %v527
  %671 = vrot.lane.b32.xlu0 %v668, 64
  %v672 = vpop.permute.xlu0 %671
  %v674 = vmul.f32 %v668, %v672
  %676 = vrot.lane.b32.xlu0 %v674, 32
  %v677 = vpop.permute.xlu0 %676
  %v679 = vadd.f32 %v669, %v677
  %v680 = vtanh.pop %v679
  %682 = vrot.lane.b32.xlu0 %v680, 64
  %v683 = vpop.permute.xlu0 %682
  %v685 = vmul.f32 %v668, %v683
  %s686 = scalar_lea.vmem %s0, 32
  %v687 = vld [vmem:[%s686] sm:$0xff]
  %688 = vmatpush.msra.mxu0 0.0
  %689 = vmatpush.msra.mxu0 0.0
  %690 = vmatpush.msra.mxu0 0.0
  %691 = vmatpush.msra.mxu0 0.0
  %692 = vmatpush.msra.mxu0 0.0
  %693 = vmatpush.msra.mxu0 0.0
  %694 = vmatpush.msra.mxu0 0.0
  %695 = vmatpush.msra.mxu0 0.0
  %696 = vmatpush.msra.mxu0 0.0
  %697 = vmatpush.msra.mxu0 0.0
  %698 = vmatpush.msra.mxu0 0.0
  %699 = vmatpush.msra.mxu0 0.0
  %700 = vmatpush.msra.mxu0 %v51
  %701 = vmatpush.msra.mxu0 %v50
  %702 = vmatpush.msra.mxu0 %v49
  %703 = vmatpush.msra.mxu0 %v48
  %704 = vmatmul.f32.gmra.mxu0 %v624
  %v705 = vpop.f32.mrf.mxu0
  %v706 = vadd.f32 0.0, %v705
  %707 = vdwg.mxu0
  %v708 = vadd.f32 %v687, %v706
  %v709 = vmul.f32 %v708, %v46
  %v710 = vxor.u32 %v709, 2147483648
  %v711 = vmul.f32 %v710, 1.442695
  %v712 = vpow.pop %v711
  %v713 = vadd.f32 %v712, 1.0
  %v714 = vrcp.pop %v713
  %v715 = vmul.f32 %v713, %v714
  %v716 = vsub.f32 1.0, %v715
  %v717 = vmul.f32 %v714, %v716
  %v718 = vadd.f32 %v714, %v717
  %vm719 = vweird.f32 %v713
  %vm720 = vweird.f32 %v714
  %vm721 = vmor %vm719, %vm720
  %v722 = vsel %vm721, %v714, %v718
  %v723 = vand.u32 2147483647, %v713
  %vm724 = vcmp.eq.f32.partialorder %v723, 8.507059e+37
  %v725 = vand.u32 %v713, 2147483648
  %v726 = vor.u32 1.1754944e-38, %v725
  %v727 = vsel %vm724, %v726, %v722
  %v728 = vmul.f32 1.0, %v727
  %v729 = vmul.f32 %v728, %v46
  %v730 = vadd.f32 %v729, %v47
  %v731 = vmul.f32 %v730, %v589
  %733 = vrot.lane.b32.xlu0 %v730, 64
  %v734 = vpop.permute.xlu0 %733
  %v736 = vmul.f32 %v730, %v734
  %738 = vrot.lane.b32.xlu0 %v736, 32
  %v739 = vpop.permute.xlu0 %738
  %v741 = vadd.f32 %v731, %v739
  %v742 = vtanh.pop %v741
  %744 = vrot.lane.b32.xlu0 %v742, 64
  %v745 = vpop.permute.xlu0 %744
  %v747 = vmul.f32 %v730, %v745
  %749 = vrot.lane.b32.xlu0 %v685, 32
  %v750 = vpop.permute.xlu0 %749
  %v751 = vsel %vm81, %v750, 0
  %753 = vmatpush.msra.mxu0 0.0
  %754 = vmatpush.msra.mxu0 0.0
  %755 = vmatpush.msra.mxu0 0.0
  %756 = vmatpush.msra.mxu0 0.0
  %757 = vmatpush.msra.mxu0 0.0
  %758 = vmatpush.msra.mxu0 0.0
  %759 = vmatpush.msra.mxu0 0.0
  %760 = vmatpush.msra.mxu0 0.0
  %761 = vmatpush.msra.mxu0 0.0
  %762 = vmatpush.msra.mxu0 0.0
  %763 = vmatpush.msra.mxu0 0.0
  %764 = vmatpush.msra.mxu0 0.0
  %765 = vmatpush.msra.mxu0 %v59
  %766 = vmatpush.msra.mxu0 %v58
  %767 = vmatpush.msra.mxu0 %v57
  %768 = vmatpush.msra.mxu0 %v56
  %769 = vmatmul.f32.gmra.mxu0 %v751
  %v770 = vpop.f32.mrf.mxu0
  %v771 = vadd.f32 0.0, %v770
  %772 = vdwg.mxu0
  %774 = vrot.lane.b32.xlu0 %v747, 32
  %v775 = vpop.permute.xlu0 %774
  %v776 = vsel %vm81, %v775, 0
  %778 = vmatpush.msra.mxu0 0.0
  %779 = vmatpush.msra.mxu0 0.0
  %780 = vmatpush.msra.mxu0 0.0
  %781 = vmatpush.msra.mxu0 0.0
  %782 = vmatpush.msra.mxu0 0.0
  %783 = vmatpush.msra.mxu0 0.0
  %784 = vmatpush.msra.mxu0 0.0
  %785 = vmatpush.msra.mxu0 0.0
  %786 = vmatpush.msra.mxu0 0.0
  %787 = vmatpush.msra.mxu0 0.0
  %788 = vmatpush.msra.mxu0 0.0
  %789 = vmatpush.msra.mxu0 0.0
  %790 = vmatpush.msra.mxu0 %v55
  %791 = vmatpush.msra.mxu0 %v54
  %792 = vmatpush.msra.mxu0 %v53
  %793 = vmatpush.msra.mxu0 %v52
  %794 = vmatmul.f32.gmra.mxu0 %v776
  %v795 = vpop.f32.mrf.mxu0
  %v796 = vadd.f32 %v771, %v795
  %797 = vdwg.mxu0
  %v798 = vadd.f32 %v796, %v62
  %v799 = vmul.f32 %v798, %v46
  %v800 = vxor.u32 %v799, 2147483648
  %v801 = vmul.f32 %v800, 1.442695
  %v802 = vpow.pop %v801
  %v803 = vadd.f32 %v802, 1.0
  %v804 = vrcp.pop %v803
  %v805 = vmul.f32 %v803, %v804
  %v806 = vsub.f32 1.0, %v805
  %v807 = vmul.f32 %v804, %v806
  %v808 = vadd.f32 %v804, %v807
  %vm809 = vweird.f32 %v803
  %vm810 = vweird.f32 %v804
  %vm811 = vmor %vm809, %vm810
  %v812 = vsel %vm811, %v804, %v808
  %v813 = vand.u32 2147483647, %v803
  %vm814 = vcmp.eq.f32.partialorder %v813, 8.507059e+37
  %v815 = vand.u32 %v803, 2147483648
  %v816 = vor.u32 1.1754944e-38, %v815
  %v817 = vsel %vm814, %v816, %v812
  %v818 = vmul.f32 1.0, %v817
  %v819 = vmul.f32 %v818, %v46
  %v820 = vadd.f32 %v819, %v47
  %v821 = vmul.f32 %v820, %v679
  %823 = vrot.lane.b32.xlu0 %v820, 64
  %v824 = vpop.permute.xlu0 %823
  %v826 = vmul.f32 %v820, %v824
  %828 = vrot.lane.b32.xlu0 %v826, 32
  %v829 = vpop.permute.xlu0 %828
  %v831 = vadd.f32 %v821, %v829
  %v832 = vtanh.pop %v831
  %834 = vrot.lane.b32.xlu0 %v832, 64
  %v835 = vpop.permute.xlu0 %834
  %v837 = vmul.f32 %v820, %v835
  %s838 = scalar_lea.vmem %s0, 40
  %v839 = vld [vmem:[%s838] sm:$0xff]
  %840 = vmatpush.msra.mxu0 0.0
  %841 = vmatpush.msra.mxu0 0.0
  %842 = vmatpush.msra.mxu0 0.0
  %843 = vmatpush.msra.mxu0 0.0
  %844 = vmatpush.msra.mxu0 0.0
  %845 = vmatpush.msra.mxu0 0.0
  %846 = vmatpush.msra.mxu0 0.0
  %847 = vmatpush.msra.mxu0 0.0
  %848 = vmatpush.msra.mxu0 0.0
  %849 = vmatpush.msra.mxu0 0.0
  %850 = vmatpush.msra.mxu0 0.0
  %851 = vmatpush.msra.mxu0 0.0
  %852 = vmatpush.msra.mxu0 %v51
  %853 = vmatpush.msra.mxu0 %v50
  %854 = vmatpush.msra.mxu0 %v49
  %855 = vmatpush.msra.mxu0 %v48
  %856 = vmatmul.f32.gmra.mxu0 %v776
  %v857 = vpop.f32.mrf.mxu0
  %v858 = vadd.f32 0.0, %v857
  %859 = vdwg.mxu0
  %v860 = vadd.f32 %v839, %v858
  %v861 = vmul.f32 %v860, %v46
  %v862 = vxor.u32 %v861, 2147483648
  %v863 = vmul.f32 %v862, 1.442695
  %v864 = vpow.pop %v863
  %v865 = vadd.f32 %v864, 1.0
  %v866 = vrcp.pop %v865
  %v867 = vmul.f32 %v865, %v866
  %v868 = vsub.f32 1.0, %v867
  %v869 = vmul.f32 %v866, %v868
  %v870 = vadd.f32 %v866, %v869
  %vm871 = vweird.f32 %v865
  %vm872 = vweird.f32 %v866
  %vm873 = vmor %vm871, %vm872
  %v874 = vsel %vm873, %v866, %v870
  %v875 = vand.u32 2147483647, %v865
  %vm876 = vcmp.eq.f32.partialorder %v875, 8.507059e+37
  %v877 = vand.u32 %v865, 2147483648
  %v878 = vor.u32 1.1754944e-38, %v877
  %v879 = vsel %vm876, %v878, %v874
  %v880 = vmul.f32 1.0, %v879
  %v881 = vmul.f32 %v880, %v46
  %v882 = vadd.f32 %v881, %v47
  %v883 = vmul.f32 %v882, %v741
  %885 = vrot.lane.b32.xlu0 %v882, 64
  %v886 = vpop.permute.xlu0 %885
  %v888 = vmul.f32 %v882, %v886
  %890 = vrot.lane.b32.xlu0 %v888, 32
  %v891 = vpop.permute.xlu0 %890
  %v893 = vadd.f32 %v883, %v891
  %v894 = vtanh.pop %v893
  %896 = vrot.lane.b32.xlu0 %v894, 64
  %v897 = vpop.permute.xlu0 %896
  %v899 = vmul.f32 %v882, %v897
  %901 = vrot.lane.b32.xlu0 %v837, 32
  %v902 = vpop.permute.xlu0 %901
  %v903 = vsel %vm81, %v902, 0
  %905 = vmatpush.msra.mxu0 0.0
  %906 = vmatpush.msra.mxu0 0.0
  %907 = vmatpush.msra.mxu0 0.0
  %908 = vmatpush.msra.mxu0 0.0
  %909 = vmatpush.msra.mxu0 0.0
  %910 = vmatpush.msra.mxu0 0.0
  %911 = vmatpush.msra.mxu0 0.0
  %912 = vmatpush.msra.mxu0 0.0
  %913 = vmatpush.msra.mxu0 0.0
  %914 = vmatpush.msra.mxu0 0.0
  %915 = vmatpush.msra.mxu0 0.0
  %916 = vmatpush.msra.mxu0 0.0
  %917 = vmatpush.msra.mxu0 %v59
  %918 = vmatpush.msra.mxu0 %v58
  %919 = vmatpush.msra.mxu0 %v57
  %920 = vmatpush.msra.mxu0 %v56
  %921 = vmatmul.f32.gmra.mxu0 %v903
  %v922 = vpop.f32.mrf.mxu0
  %v923 = vadd.f32 0.0, %v922
  %924 = vdwg.mxu0
  %926 = vrot.lane.b32.xlu0 %v899, 32
  %v927 = vpop.permute.xlu0 %926
  %v928 = vsel %vm81, %v927, 0
  %930 = vmatpush.msra.mxu0 0.0
  %931 = vmatpush.msra.mxu0 0.0
  %932 = vmatpush.msra.mxu0 0.0
  %933 = vmatpush.msra.mxu0 0.0
  %934 = vmatpush.msra.mxu0 0.0
  %935 = vmatpush.msra.mxu0 0.0
  %936 = vmatpush.msra.mxu0 0.0
  %937 = vmatpush.msra.mxu0 0.0
  %938 = vmatpush.msra.mxu0 0.0
  %939 = vmatpush.msra.mxu0 0.0
  %940 = vmatpush.msra.mxu0 0.0
  %941 = vmatpush.msra.mxu0 0.0
  %942 = vmatpush.msra.mxu0 %v55
  %943 = vmatpush.msra.mxu0 %v54
  %944 = vmatpush.msra.mxu0 %v53
  %945 = vmatpush.msra.mxu0 %v52
  %946 = vmatmul.f32.gmra.mxu0 %v928
  %v947 = vpop.f32.mrf.mxu0
  %v948 = vadd.f32 %v923, %v947
  %949 = vdwg.mxu0
  %v950 = vadd.f32 %v948, %v62
  %v951 = vmul.f32 %v950, %v46
  %v952 = vxor.u32 %v951, 2147483648
  %v953 = vmul.f32 %v952, 1.442695
  %v954 = vpow.pop %v953
  %v955 = vadd.f32 %v954, 1.0
  %v956 = vrcp.pop %v955
  %v957 = vmul.f32 %v955, %v956
  %v958 = vsub.f32 1.0, %v957
  %v959 = vmul.f32 %v956, %v958
  %v960 = vadd.f32 %v956, %v959
  %vm961 = vweird.f32 %v955
  %vm962 = vweird.f32 %v956
  %vm963 = vmor %vm961, %vm962
  %v964 = vsel %vm963, %v956, %v960
  %v965 = vand.u32 2147483647, %v955
  %vm966 = vcmp.eq.f32.partialorder %v965, 8.507059e+37
  %v967 = vand.u32 %v955, 2147483648
  %v968 = vor.u32 1.1754944e-38, %v967
  %v969 = vsel %vm966, %v968, %v964
  %v970 = vmul.f32 1.0, %v969
  %v971 = vmul.f32 %v970, %v46
  %v972 = vadd.f32 %v971, %v47
  %v973 = vmul.f32 %v972, %v831
  %975 = vrot.lane.b32.xlu0 %v972, 64
  %v976 = vpop.permute.xlu0 %975
  %v978 = vmul.f32 %v972, %v976
  %980 = vrot.lane.b32.xlu0 %v978, 32
  %v981 = vpop.permute.xlu0 %980
  %v983 = vadd.f32 %v973, %v981
  %v984 = vtanh.pop %v983
  %986 = vrot.lane.b32.xlu0 %v984, 64
  %v987 = vpop.permute.xlu0 %986
  %v989 = vmul.f32 %v972, %v987
  %s990 = scalar_lea.vmem %s0, 48
  %v991 = vld [vmem:[%s990] sm:$0xff]
  %992 = vmatpush.msra.mxu0 0.0
  %993 = vmatpush.msra.mxu0 0.0
  %994 = vmatpush.msra.mxu0 0.0
  %995 = vmatpush.msra.mxu0 0.0
  %996 = vmatpush.msra.mxu0 0.0
  %997 = vmatpush.msra.mxu0 0.0
  %998 = vmatpush.msra.mxu0 0.0
  %999 = vmatpush.msra.mxu0 0.0
  %1000 = vmatpush.msra.mxu0 0.0
  %1001 = vmatpush.msra.mxu0 0.0
  %1002 = vmatpush.msra.mxu0 0.0
  %1003 = vmatpush.msra.mxu0 0.0
  %1004 = vmatpush.msra.mxu0 %v51
  %1005 = vmatpush.msra.mxu0 %v50
  %1006 = vmatpush.msra.mxu0 %v49
  %1007 = vmatpush.msra.mxu0 %v48
  %1008 = vmatmul.f32.gmra.mxu0 %v928
  %v1009 = vpop.f32.mrf.mxu0
  %v1010 = vadd.f32 0.0, %v1009
  %1011 = vdwg.mxu0
  %v1012 = vadd.f32 %v991, %v1010
  %v1013 = vmul.f32 %v1012, %v46
  %v1014 = vxor.u32 %v1013, 2147483648
  %v1015 = vmul.f32 %v1014, 1.442695
  %v1016 = vpow.pop %v1015
  %v1017 = vadd.f32 %v1016, 1.0
  %v1018 = vrcp.pop %v1017
  %v1019 = vmul.f32 %v1017, %v1018
  %v1020 = vsub.f32 1.0, %v1019
  %v1021 = vmul.f32 %v1018, %v1020
  %v1022 = vadd.f32 %v1018, %v1021
  %vm1023 = vweird.f32 %v1017
  %vm1024 = vweird.f32 %v1018
  %vm1025 = vmor %vm1023, %vm1024
  %v1026 = vsel %vm1025, %v1018, %v1022
  %v1027 = vand.u32 2147483647, %v1017
  %vm1028 = vcmp.eq.f32.partialorder %v1027, 8.507059e+37
  %v1029 = vand.u32 %v1017, 2147483648
  %v1030 = vor.u32 1.1754944e-38, %v1029
  %v1031 = vsel %vm1028, %v1030, %v1026
  %v1032 = vmul.f32 1.0, %v1031
  %v1033 = vmul.f32 %v1032, %v46
  %v1034 = vadd.f32 %v1033, %v47
  %v1035 = vmul.f32 %v1034, %v893
  %1037 = vrot.lane.b32.xlu0 %v1034, 64
  %v1038 = vpop.permute.xlu0 %1037
  %v1040 = vmul.f32 %v1034, %v1038
  %1042 = vrot.lane.b32.xlu0 %v1040, 32
  %v1043 = vpop.permute.xlu0 %1042
  %v1045 = vadd.f32 %v1035, %v1043
  %v1046 = vtanh.pop %v1045
  %1048 = vrot.lane.b32.xlu0 %v1046, 64
  %v1049 = vpop.permute.xlu0 %1048
  %v1051 = vmul.f32 %v1034, %v1049
  %1053 = vrot.lane.b32.xlu0 %v989, 32
  %v1054 = vpop.permute.xlu0 %1053
  %v1055 = vsel %vm81, %v1054, 0
  %1057 = vmatpush.msra.mxu0 0.0
  %1058 = vmatpush.msra.mxu0 0.0
  %1059 = vmatpush.msra.mxu0 0.0
  %1060 = vmatpush.msra.mxu0 0.0
  %1061 = vmatpush.msra.mxu0 0.0
  %1062 = vmatpush.msra.mxu0 0.0
  %1063 = vmatpush.msra.mxu0 0.0
  %1064 = vmatpush.msra.mxu0 0.0
  %1065 = vmatpush.msra.mxu0 0.0
  %1066 = vmatpush.msra.mxu0 0.0
  %1067 = vmatpush.msra.mxu0 0.0
  %1068 = vmatpush.msra.mxu0 0.0
  %1069 = vmatpush.msra.mxu0 %v59
  %1070 = vmatpush.msra.mxu0 %v58
  %1071 = vmatpush.msra.mxu0 %v57
  %1072 = vmatpush.msra.mxu0 %v56
  %1073 = vmatmul.f32.gmra.mxu0 %v1055
  %v1074 = vpop.f32.mrf.mxu0
  %v1075 = vadd.f32 0.0, %v1074
  %1076 = vdwg.mxu0
  %1078 = vrot.lane.b32.xlu0 %v1051, 32
  %v1079 = vpop.permute.xlu0 %1078
  %v1080 = vsel %vm81, %v1079, 0
  %1082 = vmatpush.msra.mxu0 0.0
  %1083 = vmatpush.msra.mxu0 0.0
  %1084 = vmatpush.msra.mxu0 0.0
  %1085 = vmatpush.msra.mxu0 0.0
  %1086 = vmatpush.msra.mxu0 0.0
  %1087 = vmatpush.msra.mxu0 0.0
  %1088 = vmatpush.msra.mxu0 0.0
  %1089 = vmatpush.msra.mxu0 0.0
  %1090 = vmatpush.msra.mxu0 0.0
  %1091 = vmatpush.msra.mxu0 0.0
  %1092 = vmatpush.msra.mxu0 0.0
  %1093 = vmatpush.msra.mxu0 0.0
  %1094 = vmatpush.msra.mxu0 %v55
  %1095 = vmatpush.msra.mxu0 %v54
  %1096 = vmatpush.msra.mxu0 %v53
  %1097 = vmatpush.msra.mxu0 %v52
  %1098 = vmatmul.f32.gmra.mxu0 %v1080
  %v1099 = vpop.f32.mrf.mxu0
  %v1100 = vadd.f32 %v1075, %v1099
  %1101 = vdwg.mxu0
  %v1102 = vadd.f32 %v1100, %v62
  %v1103 = vmul.f32 %v1102, %v46
  %v1104 = vxor.u32 %v1103, 2147483648
  %v1105 = vmul.f32 %v1104, 1.442695
  %v1106 = vpow.pop %v1105
  %v1107 = vadd.f32 %v1106, 1.0
  %v1108 = vrcp.pop %v1107
  %v1109 = vmul.f32 %v1107, %v1108
  %v1110 = vsub.f32 1.0, %v1109
  %v1111 = vmul.f32 %v1108, %v1110
  %v1112 = vadd.f32 %v1108, %v1111
  %vm1113 = vweird.f32 %v1107
  %vm1114 = vweird.f32 %v1108
  %vm1115 = vmor %vm1113, %vm1114
  %v1116 = vsel %vm1115, %v1108, %v1112
  %v1117 = vand.u32 2147483647, %v1107
  %vm1118 = vcmp.eq.f32.partialorder %v1117, 8.507059e+37
  %v1119 = vand.u32 %v1107, 2147483648
  %v1120 = vor.u32 1.1754944e-38, %v1119
  %v1121 = vsel %vm1118, %v1120, %v1116
  %v1122 = vmul.f32 1.0, %v1121
  %v1123 = vmul.f32 %v1122, %v46
  %v1124 = vadd.f32 %v1123, %v47
  %v1125 = vmul.f32 %v1124, %v983
  %1127 = vrot.lane.b32.xlu0 %v1124, 64
  %v1128 = vpop.permute.xlu0 %1127
  %v1130 = vmul.f32 %v1124, %v1128
  %1132 = vrot.lane.b32.xlu0 %v1130, 32
  %v1133 = vpop.permute.xlu0 %1132
  %v1135 = vadd.f32 %v1125, %v1133
  %v1136 = vtanh.pop %v1135
  %1138 = vrot.lane.b32.xlu0 %v1136, 64
  %v1139 = vpop.permute.xlu0 %1138
  %v1141 = vmul.f32 %v1124, %v1139
  %s1142 = scalar_lea.vmem %s0, 56
  %v1143 = vld [vmem:[%s1142] sm:$0xff]
  %1144 = vmatpush.msra.mxu0 0.0
  %1145 = vmatpush.msra.mxu0 0.0
  %1146 = vmatpush.msra.mxu0 0.0
  %1147 = vmatpush.msra.mxu0 0.0
  %1148 = vmatpush.msra.mxu0 0.0
  %1149 = vmatpush.msra.mxu0 0.0
  %1150 = vmatpush.msra.mxu0 0.0
  %1151 = vmatpush.msra.mxu0 0.0
  %1152 = vmatpush.msra.mxu0 0.0
  %1153 = vmatpush.msra.mxu0 0.0
  %1154 = vmatpush.msra.mxu0 0.0
  %1155 = vmatpush.msra.mxu0 0.0
  %1156 = vmatpush.msra.mxu0 %v51
  %1157 = vmatpush.msra.mxu0 %v50
  %1158 = vmatpush.msra.mxu0 %v49
  %1159 = vmatpush.msra.mxu0 %v48
  %1160 = vmatmul.f32.gmra.mxu0 %v1080
  %v1161 = vpop.f32.mrf.mxu0
  %v1162 = vadd.f32 0.0, %v1161
  %1163 = vdwg.mxu0
  %v1164 = vadd.f32 %v1143, %v1162
  %v1165 = vmul.f32 %v1164, %v46
  %v1166 = vxor.u32 %v1165, 2147483648
  %v1167 = vmul.f32 %v1166, 1.442695
  %v1168 = vpow.pop %v1167
  %v1169 = vadd.f32 %v1168, 1.0
  %v1170 = vrcp.pop %v1169
  %v1171 = vmul.f32 %v1169, %v1170
  %v1172 = vsub.f32 1.0, %v1171
  %v1173 = vmul.f32 %v1170, %v1172
  %v1174 = vadd.f32 %v1170, %v1173
  %vm1175 = vweird.f32 %v1169
  %vm1176 = vweird.f32 %v1170
  %vm1177 = vmor %vm1175, %vm1176
  %v1178 = vsel %vm1177, %v1170, %v1174
  %v1179 = vand.u32 2147483647, %v1169
  %vm1180 = vcmp.eq.f32.partialorder %v1179, 8.507059e+37
  %v1181 = vand.u32 %v1169, 2147483648
  %v1182 = vor.u32 1.1754944e-38, %v1181
  %v1183 = vsel %vm1180, %v1182, %v1178
  %v1184 = vmul.f32 1.0, %v1183
  %v1185 = vmul.f32 %v1184, %v46
  %v1186 = vadd.f32 %v1185, %v47
  %v1187 = vmul.f32 %v1186, %v1045
  %1189 = vrot.lane.b32.xlu0 %v1186, 64
  %v1190 = vpop.permute.xlu0 %1189
  %v1192 = vmul.f32 %v1186, %v1190
  %1194 = vrot.lane.b32.xlu0 %v1192, 32
  %v1195 = vpop.permute.xlu0 %1194
  %v1197 = vadd.f32 %v1187, %v1195
  %v1198 = vtanh.pop %v1197
  %1200 = vrot.lane.b32.xlu0 %v1198, 64
  %v1201 = vpop.permute.xlu0 %1200
  %v1203 = vmul.f32 %v1186, %v1201
  %1205 = vrot.lane.b32.xlu0 %v1141, 32
  %v1206 = vpop.permute.xlu0 %1205
  %v1207 = vsel %vm81, %v1206, 0
  %1209 = vmatpush.msra.mxu0 0.0
  %1210 = vmatpush.msra.mxu0 0.0
  %1211 = vmatpush.msra.mxu0 0.0
  %1212 = vmatpush.msra.mxu0 0.0
  %1213 = vmatpush.msra.mxu0 0.0
  %1214 = vmatpush.msra.mxu0 0.0
  %1215 = vmatpush.msra.mxu0 0.0
  %1216 = vmatpush.msra.mxu0 0.0
  %1217 = vmatpush.msra.mxu0 0.0
  %1218 = vmatpush.msra.mxu0 0.0
  %1219 = vmatpush.msra.mxu0 0.0
  %1220 = vmatpush.msra.mxu0 0.0
  %1221 = vmatpush.msra.mxu0 %v59
  %1222 = vmatpush.msra.mxu0 %v58
  %1223 = vmatpush.msra.mxu0 %v57
  %1224 = vmatpush.msra.mxu0 %v56
  %1225 = vmatmul.f32.gmra.mxu0 %v1207
  %v1226 = vpop.f32.mrf.mxu0
  %v1227 = vadd.f32 0.0, %v1226
  %1228 = vdwg.mxu0
  %1230 = vrot.lane.b32.xlu0 %v1203, 32
  %v1231 = vpop.permute.xlu0 %1230
  %v1232 = vsel %vm81, %v1231, 0
  %1234 = vmatpush.msra.mxu0 0.0
  %1235 = vmatpush.msra.mxu0 0.0
  %1236 = vmatpush.msra.mxu0 0.0
  %1237 = vmatpush.msra.mxu0 0.0
  %1238 = vmatpush.msra.mxu0 0.0
  %1239 = vmatpush.msra.mxu0 0.0
  %1240 = vmatpush.msra.mxu0 0.0
  %1241 = vmatpush.msra.mxu0 0.0
  %1242 = vmatpush.msra.mxu0 0.0
  %1243 = vmatpush.msra.mxu0 0.0
  %1244 = vmatpush.msra.mxu0 0.0
  %1245 = vmatpush.msra.mxu0 0.0
  %1246 = vmatpush.msra.mxu0 %v55
  %1247 = vmatpush.msra.mxu0 %v54
  %1248 = vmatpush.msra.mxu0 %v53
  %1249 = vmatpush.msra.mxu0 %v52
  %1250 = vmatmul.f32.gmra.mxu0 %v1232
  %v1251 = vpop.f32.mrf.mxu0
  %v1252 = vadd.f32 %v1227, %v1251
  %1253 = vdwg.mxu0
  %v1254 = vadd.f32 %v1252, %v62
  %v1255 = vmul.f32 %v1254, %v46
  %v1256 = vxor.u32 %v1255, 2147483648
  %v1257 = vmul.f32 %v1256, 1.442695
  %v1258 = vpow.pop %v1257
  %v1259 = vadd.f32 %v1258, 1.0
  %v1260 = vrcp.pop %v1259
  %v1261 = vmul.f32 %v1259, %v1260
  %v1262 = vsub.f32 1.0, %v1261
  %v1263 = vmul.f32 %v1260, %v1262
  %v1264 = vadd.f32 %v1260, %v1263
  %vm1265 = vweird.f32 %v1259
  %vm1266 = vweird.f32 %v1260
  %vm1267 = vmor %vm1265, %vm1266
  %v1268 = vsel %vm1267, %v1260, %v1264
  %v1269 = vand.u32 2147483647, %v1259
  %vm1270 = vcmp.eq.f32.partialorder %v1269, 8.507059e+37
  %v1271 = vand.u32 %v1259, 2147483648
  %v1272 = vor.u32 1.1754944e-38, %v1271
  %v1273 = vsel %vm1270, %v1272, %v1268
  %v1274 = vmul.f32 1.0, %v1273
  %v1275 = vmul.f32 %v1274, %v46
  %v1276 = vadd.f32 %v1275, %v47
  %v1277 = vmul.f32 %v1276, %v1135
  %1279 = vrot.lane.b32.xlu0 %v1276, 64
  %v1280 = vpop.permute.xlu0 %1279
  %v1282 = vmul.f32 %v1276, %v1280
  %1284 = vrot.lane.b32.xlu0 %v1282, 32
  %v1285 = vpop.permute.xlu0 %1284
  %v1287 = vadd.f32 %v1277, %v1285
  %v1288 = vtanh.pop %v1287
  %1290 = vrot.lane.b32.xlu0 %v1288, 64
  %v1291 = vpop.permute.xlu0 %1290
  %v1293 = vmul.f32 %v1276, %v1291
  %v1294 = vld [vmem:[%s1] sm:$0xff]
  %1295 = vmatpush.msra.mxu0 0.0
  %1296 = vmatpush.msra.mxu0 0.0
  %1297 = vmatpush.msra.mxu0 0.0
  %1298 = vmatpush.msra.mxu0 0.0
  %1299 = vmatpush.msra.mxu0 0.0
  %1300 = vmatpush.msra.mxu0 0.0
  %1301 = vmatpush.msra.mxu0 0.0
  %1302 = vmatpush.msra.mxu0 0.0
  %1303 = vmatpush.msra.mxu0 0.0
  %1304 = vmatpush.msra.mxu0 0.0
  %1305 = vmatpush.msra.mxu0 0.0
  %1306 = vmatpush.msra.mxu0 0.0
  %1307 = vmatpush.msra.mxu0 %v67
  %1308 = vmatpush.msra.mxu0 %v66
  %1309 = vmatpush.msra.mxu0 %v65
  %1310 = vmatpush.msra.mxu0 %v64
  %1311 = vmatmul.f32.gmra.mxu0 %v1232
  %v1312 = vpop.f32.mrf.mxu0
  %v1313 = vadd.f32 0.0, %v1312
  %1314 = vdwg.mxu0
  %v1315 = vadd.f32 %v1294, %v1313
  %v1316 = vmul.f32 %v1315, %v46
  %v1317 = vxor.u32 %v1316, 2147483648
  %v1318 = vmul.f32 %v1317, 1.442695
  %v1319 = vpow.pop %v1318
  %v1320 = vadd.f32 %v1319, 1.0
  %v1321 = vrcp.pop %v1320
  %v1322 = vmul.f32 %v1320, %v1321
  %v1323 = vsub.f32 1.0, %v1322
  %v1324 = vmul.f32 %v1321, %v1323
  %v1325 = vadd.f32 %v1321, %v1324
  %vm1326 = vweird.f32 %v1320
  %vm1327 = vweird.f32 %v1321
  %vm1328 = vmor %vm1326, %vm1327
  %v1329 = vsel %vm1328, %v1321, %v1325
  %v1330 = vand.u32 2147483647, %v1320
  %vm1331 = vcmp.eq.f32.partialorder %v1330, 8.507059e+37
  %v1332 = vand.u32 %v1320, 2147483648
  %v1333 = vor.u32 1.1754944e-38, %v1332
  %v1334 = vsel %vm1331, %v1333, %v1329
  %v1335 = vmul.f32 1.0, %v1334
  %v1336 = vmul.f32 %v1335, %v46
  %v1337 = vadd.f32 %v1336, %v47
  %v1338 = vmul.f32 %v1337, %v1197
  %1340 = vrot.lane.b32.xlu0 %v1337, 64
  %v1341 = vpop.permute.xlu0 %1340
  %v1343 = vmul.f32 %v1337, %v1341
  %1345 = vrot.lane.b32.xlu0 %v1343, 32
  %v1346 = vpop.permute.xlu0 %1345
  %v1348 = vadd.f32 %v1338, %v1346
  %v1349 = vtanh.pop %v1348
  %1351 = vrot.lane.b32.xlu0 %v1349, 64
  %v1352 = vpop.permute.xlu0 %1351
  %v1354 = vmul.f32 %v1337, %v1352
  %1356 = vrot.lane.b32.xlu0 %v1293, 32
  %v1357 = vpop.permute.xlu0 %1356
  %v1358 = vsel %vm81, %v1357, 0
  %1360 = vmatpush.msra.mxu0 0.0
  %1361 = vmatpush.msra.mxu0 0.0
  %1362 = vmatpush.msra.mxu0 0.0
  %1363 = vmatpush.msra.mxu0 0.0
  %1364 = vmatpush.msra.mxu0 0.0
  %1365 = vmatpush.msra.mxu0 0.0
  %1366 = vmatpush.msra.mxu0 0.0
  %1367 = vmatpush.msra.mxu0 0.0
  %1368 = vmatpush.msra.mxu0 0.0
  %1369 = vmatpush.msra.mxu0 0.0
  %1370 = vmatpush.msra.mxu0 0.0
  %1371 = vmatpush.msra.mxu0 0.0
  %1372 = vmatpush.msra.mxu0 %v75
  %1373 = vmatpush.msra.mxu0 %v74
  %1374 = vmatpush.msra.mxu0 %v73
  %1375 = vmatpush.msra.mxu0 %v72
  %1376 = vmatmul.f32.gmra.mxu0 %v1358
  %v1377 = vpop.f32.mrf.mxu0
  %v1378 = vadd.f32 0.0, %v1377
  %1379 = vdwg.mxu0
  %1381 = vrot.lane.b32.xlu0 %v1354, 32
  %v1382 = vpop.permute.xlu0 %1381
  %v1383 = vsel %vm81, %v1382, 0
  %1385 = vmatpush.msra.mxu0 0.0
  %1386 = vmatpush.msra.mxu0 0.0
  %1387 = vmatpush.msra.mxu0 0.0
  %1388 = vmatpush.msra.mxu0 0.0
  %1389 = vmatpush.msra.mxu0 0.0
  %1390 = vmatpush.msra.mxu0 0.0
  %1391 = vmatpush.msra.mxu0 0.0
  %1392 = vmatpush.msra.mxu0 0.0
  %1393 = vmatpush.msra.mxu0 0.0
  %1394 = vmatpush.msra.mxu0 0.0
  %1395 = vmatpush.msra.mxu0 0.0
  %1396 = vmatpush.msra.mxu0 0.0
  %1397 = vmatpush.msra.mxu0 %v71
  %1398 = vmatpush.msra.mxu0 %v70
  %1399 = vmatpush.msra.mxu0 %v69
  %1400 = vmatpush.msra.mxu0 %v68
  %1401 = vmatmul.f32.gmra.mxu0 %v1383
  %v1402 = vpop.f32.mrf.mxu0
  %v1403 = vadd.f32 %v1378, %v1402
  %1404 = vdwg.mxu0
  %v1405 = vadd.f32 %v1403, %v78
  %v1406 = vmul.f32 %v1405, %v46
  %v1407 = vxor.u32 %v1406, 2147483648
  %v1408 = vmul.f32 %v1407, 1.442695
  %v1409 = vpow.pop %v1408
  %v1410 = vadd.f32 %v1409, 1.0
  %v1411 = vrcp.pop %v1410
  %v1412 = vmul.f32 %v1410, %v1411
  %v1413 = vsub.f32 1.0, %v1412
  %v1414 = vmul.f32 %v1411, %v1413
  %v1415 = vadd.f32 %v1411, %v1414
  %vm1416 = vweird.f32 %v1410
  %vm1417 = vweird.f32 %v1411
  %vm1418 = vmor %vm1416, %vm1417
  %v1419 = vsel %vm1418, %v1411, %v1415
  %v1420 = vand.u32 2147483647, %v1410
  %vm1421 = vcmp.eq.f32.partialorder %v1420, 8.507059e+37
  %v1422 = vand.u32 %v1410, 2147483648
  %v1423 = vor.u32 1.1754944e-38, %v1422
  %v1424 = vsel %vm1421, %v1423, %v1419
  %v1425 = vmul.f32 1.0, %v1424
  %v1426 = vmul.f32 %v1425, %v46
  %v1427 = vadd.f32 %v1426, %v47
  %v1428 = vmul.f32 %v1427, %v1287
  %1430 = vrot.lane.b32.xlu0 %v1427, 64
  %v1431 = vpop.permute.xlu0 %1430
  %v1433 = vmul.f32 %v1427, %v1431
  %1435 = vrot.lane.b32.xlu0 %v1433, 32
  %v1436 = vpop.permute.xlu0 %1435
  %v1438 = vadd.f32 %v1428, %v1436
  %v1439 = vtanh.pop %v1438
  %1441 = vrot.lane.b32.xlu0 %v1439, 64
  %v1442 = vpop.permute.xlu0 %1441
  %v1444 = vmul.f32 %v1427, %v1442
  %s1445 = scalar_lea.vmem %s1, 8
  %v1446 = vld [vmem:[%s1445] sm:$0xff]
  %1447 = vmatpush.msra.mxu0 0.0
  %1448 = vmatpush.msra.mxu0 0.0
  %1449 = vmatpush.msra.mxu0 0.0
  %1450 = vmatpush.msra.mxu0 0.0
  %1451 = vmatpush.msra.mxu0 0.0
  %1452 = vmatpush.msra.mxu0 0.0
  %1453 = vmatpush.msra.mxu0 0.0
  %1454 = vmatpush.msra.mxu0 0.0
  %1455 = vmatpush.msra.mxu0 0.0
  %1456 = vmatpush.msra.mxu0 0.0
  %1457 = vmatpush.msra.mxu0 0.0
  %1458 = vmatpush.msra.mxu0 0.0
  %1459 = vmatpush.msra.mxu0 %v67
  %1460 = vmatpush.msra.mxu0 %v66
  %1461 = vmatpush.msra.mxu0 %v65
  %1462 = vmatpush.msra.mxu0 %v64
  %1463 = vmatmul.f32.gmra.mxu0 %v1383
  %v1464 = vpop.f32.mrf.mxu0
  %v1465 = vadd.f32 0.0, %v1464
  %1466 = vdwg.mxu0
  %v1467 = vadd.f32 %v1446, %v1465
  %v1468 = vmul.f32 %v1467, %v46
  %v1469 = vxor.u32 %v1468, 2147483648
  %v1470 = vmul.f32 %v1469, 1.442695
  %v1471 = vpow.pop %v1470
  %v1472 = vadd.f32 %v1471, 1.0
  %v1473 = vrcp.pop %v1472
  %v1474 = vmul.f32 %v1472, %v1473
  %v1475 = vsub.f32 1.0, %v1474
  %v1476 = vmul.f32 %v1473, %v1475
  %v1477 = vadd.f32 %v1473, %v1476
  %vm1478 = vweird.f32 %v1472
  %vm1479 = vweird.f32 %v1473
  %vm1480 = vmor %vm1478, %vm1479
  %v1481 = vsel %vm1480, %v1473, %v1477
  %v1482 = vand.u32 2147483647, %v1472
  %vm1483 = vcmp.eq.f32.partialorder %v1482, 8.507059e+37
  %v1484 = vand.u32 %v1472, 2147483648
  %v1485 = vor.u32 1.1754944e-38, %v1484
  %v1486 = vsel %vm1483, %v1485, %v1481
  %v1487 = vmul.f32 1.0, %v1486
  %v1488 = vmul.f32 %v1487, %v46
  %v1489 = vadd.f32 %v1488, %v47
  %v1490 = vmul.f32 %v1489, %v1348
  %1492 = vrot.lane.b32.xlu0 %v1489, 64
  %v1493 = vpop.permute.xlu0 %1492
  %v1495 = vmul.f32 %v1489, %v1493
  %1497 = vrot.lane.b32.xlu0 %v1495, 32
  %v1498 = vpop.permute.xlu0 %1497
  %v1500 = vadd.f32 %v1490, %v1498
  %v1501 = vtanh.pop %v1500
  %1503 = vrot.lane.b32.xlu0 %v1501, 64
  %v1504 = vpop.permute.xlu0 %1503
  %v1506 = vmul.f32 %v1489, %v1504
  %1508 = vrot.lane.b32.xlu0 %v1444, 32
  %v1509 = vpop.permute.xlu0 %1508
  %v1510 = vsel %vm81, %v1509, 0
  %1512 = vmatpush.msra.mxu0 0.0
  %1513 = vmatpush.msra.mxu0 0.0
  %1514 = vmatpush.msra.mxu0 0.0
  %1515 = vmatpush.msra.mxu0 0.0
  %1516 = vmatpush.msra.mxu0 0.0
  %1517 = vmatpush.msra.mxu0 0.0
  %1518 = vmatpush.msra.mxu0 0.0
  %1519 = vmatpush.msra.mxu0 0.0
  %1520 = vmatpush.msra.mxu0 0.0
  %1521 = vmatpush.msra.mxu0 0.0
  %1522 = vmatpush.msra.mxu0 0.0
  %1523 = vmatpush.msra.mxu0 0.0
  %1524 = vmatpush.msra.mxu0 %v75
  %1525 = vmatpush.msra.mxu0 %v74
  %1526 = vmatpush.msra.mxu0 %v73
  %1527 = vmatpush.msra.mxu0 %v72
  %1528 = vmatmul.f32.gmra.mxu0 %v1510
  %v1529 = vpop.f32.mrf.mxu0
  %v1530 = vadd.f32 0.0, %v1529
  %1531 = vdwg.mxu0
  %1533 = vrot.lane.b32.xlu0 %v1506, 32
  %v1534 = vpop.permute.xlu0 %1533
  %v1535 = vsel %vm81, %v1534, 0
  %1537 = vmatpush.msra.mxu0 0.0
  %1538 = vmatpush.msra.mxu0 0.0
  %1539 = vmatpush.msra.mxu0 0.0
  %1540 = vmatpush.msra.mxu0 0.0
  %1541 = vmatpush.msra.mxu0 0.0
  %1542 = vmatpush.msra.mxu0 0.0
  %1543 = vmatpush.msra.mxu0 0.0
  %1544 = vmatpush.msra.mxu0 0.0
  %1545 = vmatpush.msra.mxu0 0.0
  %1546 = vmatpush.msra.mxu0 0.0
  %1547 = vmatpush.msra.mxu0 0.0
  %1548 = vmatpush.msra.mxu0 0.0
  %1549 = vmatpush.msra.mxu0 %v71
  %1550 = vmatpush.msra.mxu0 %v70
  %1551 = vmatpush.msra.mxu0 %v69
  %1552 = vmatpush.msra.mxu0 %v68
  %1553 = vmatmul.f32.gmra.mxu0 %v1535
  %v1554 = vpop.f32.mrf.mxu0
  %v1555 = vadd.f32 %v1530, %v1554
  %1556 = vdwg.mxu0
  %v1557 = vadd.f32 %v1555, %v78
  %v1558 = vmul.f32 %v1557, %v46
  %v1559 = vxor.u32 %v1558, 2147483648
  %v1560 = vmul.f32 %v1559, 1.442695
  %v1561 = vpow.pop %v1560
  %v1562 = vadd.f32 %v1561, 1.0
  %v1563 = vrcp.pop %v1562
  %v1564 = vmul.f32 %v1562, %v1563
  %v1565 = vsub.f32 1.0, %v1564
  %v1566 = vmul.f32 %v1563, %v1565
  %v1567 = vadd.f32 %v1563, %v1566
  %vm1568 = vweird.f32 %v1562
  %vm1569 = vweird.f32 %v1563
  %vm1570 = vmor %vm1568, %vm1569
  %v1571 = vsel %vm1570, %v1563, %v1567
  %v1572 = vand.u32 2147483647, %v1562
  %vm1573 = vcmp.eq.f32.partialorder %v1572, 8.507059e+37
  %v1574 = vand.u32 %v1562, 2147483648
  %v1575 = vor.u32 1.1754944e-38, %v1574
  %v1576 = vsel %vm1573, %v1575, %v1571
  %v1577 = vmul.f32 1.0, %v1576
  %v1578 = vmul.f32 %v1577, %v46
  %v1579 = vadd.f32 %v1578, %v47
  %v1580 = vmul.f32 %v1579, %v1438
  %1582 = vrot.lane.b32.xlu0 %v1579, 64
  %v1583 = vpop.permute.xlu0 %1582
  %v1585 = vmul.f32 %v1579, %v1583
  %1587 = vrot.lane.b32.xlu0 %v1585, 32
  %v1588 = vpop.permute.xlu0 %1587
  %v1590 = vadd.f32 %v1580, %v1588
  %v1591 = vtanh.pop %v1590
  %1593 = vrot.lane.b32.xlu0 %v1591, 64
  %v1594 = vpop.permute.xlu0 %1593
  %v1596 = vmul.f32 %v1579, %v1594
  %s1597 = scalar_lea.vmem %s1, 16
  %v1598 = vld [vmem:[%s1597] sm:$0xff]
  %1599 = vmatpush.msra.mxu0 0.0
  %1600 = vmatpush.msra.mxu0 0.0
  %1601 = vmatpush.msra.mxu0 0.0
  %1602 = vmatpush.msra.mxu0 0.0
  %1603 = vmatpush.msra.mxu0 0.0
  %1604 = vmatpush.msra.mxu0 0.0
  %1605 = vmatpush.msra.mxu0 0.0
  %1606 = vmatpush.msra.mxu0 0.0
  %1607 = vmatpush.msra.mxu0 0.0
  %1608 = vmatpush.msra.mxu0 0.0
  %1609 = vmatpush.msra.mxu0 0.0
  %1610 = vmatpush.msra.mxu0 0.0
  %1611 = vmatpush.msra.mxu0 %v67
  %1612 = vmatpush.msra.mxu0 %v66
  %1613 = vmatpush.msra.mxu0 %v65
  %1614 = vmatpush.msra.mxu0 %v64
  %1615 = vmatmul.f32.gmra.mxu0 %v1535
  %v1616 = vpop.f32.mrf.mxu0
  %v1617 = vadd.f32 0.0, %v1616
  %1618 = vdwg.mxu0
  %v1619 = vadd.f32 %v1598, %v1617
  %v1620 = vmul.f32 %v1619, %v46
  %v1621 = vxor.u32 %v1620, 2147483648
  %v1622 = vmul.f32 %v1621, 1.442695
  %v1623 = vpow.pop %v1622
  %v1624 = vadd.f32 %v1623, 1.0
  %v1625 = vrcp.pop %v1624
  %v1626 = vmul.f32 %v1624, %v1625
  %v1627 = vsub.f32 1.0, %v1626
  %v1628 = vmul.f32 %v1625, %v1627
  %v1629 = vadd.f32 %v1625, %v1628
  %vm1630 = vweird.f32 %v1624
  %vm1631 = vweird.f32 %v1625
  %vm1632 = vmor %vm1630, %vm1631
  %v1633 = vsel %vm1632, %v1625, %v1629
  %v1634 = vand.u32 2147483647, %v1624
  %vm1635 = vcmp.eq.f32.partialorder %v1634, 8.507059e+37
  %v1636 = vand.u32 %v1624, 2147483648
  %v1637 = vor.u32 1.1754944e-38, %v1636
  %v1638 = vsel %vm1635, %v1637, %v1633
  %v1639 = vmul.f32 1.0, %v1638
  %v1640 = vmul.f32 %v1639, %v46
  %v1641 = vadd.f32 %v1640, %v47
  %v1642 = vmul.f32 %v1641, %v1500
  %1644 = vrot.lane.b32.xlu0 %v1641, 64
  %v1645 = vpop.permute.xlu0 %1644
  %v1647 = vmul.f32 %v1641, %v1645
  %1649 = vrot.lane.b32.xlu0 %v1647, 32
  %v1650 = vpop.permute.xlu0 %1649
  %v1652 = vadd.f32 %v1642, %v1650
  %v1653 = vtanh.pop %v1652
  %1655 = vrot.lane.b32.xlu0 %v1653, 64
  %v1656 = vpop.permute.xlu0 %1655
  %v1658 = vmul.f32 %v1641, %v1656
  %1660 = vrot.lane.b32.xlu0 %v1596, 32
  %v1661 = vpop.permute.xlu0 %1660
  %v1662 = vsel %vm81, %v1661, 0
  %1664 = vmatpush.msra.mxu0 0.0
  %1665 = vmatpush.msra.mxu0 0.0
  %1666 = vmatpush.msra.mxu0 0.0
  %1667 = vmatpush.msra.mxu0 0.0
  %1668 = vmatpush.msra.mxu0 0.0
  %1669 = vmatpush.msra.mxu0 0.0
  %1670 = vmatpush.msra.mxu0 0.0
  %1671 = vmatpush.msra.mxu0 0.0
  %1672 = vmatpush.msra.mxu0 0.0
  %1673 = vmatpush.msra.mxu0 0.0
  %1674 = vmatpush.msra.mxu0 0.0
  %1675 = vmatpush.msra.mxu0 0.0
  %1676 = vmatpush.msra.mxu0 %v75
  %1677 = vmatpush.msra.mxu0 %v74
  %1678 = vmatpush.msra.mxu0 %v73
  %1679 = vmatpush.msra.mxu0 %v72
  %1680 = vmatmul.f32.gmra.mxu0 %v1662
  %v1681 = vpop.f32.mrf.mxu0
  %v1682 = vadd.f32 0.0, %v1681
  %1683 = vdwg.mxu0
  %1685 = vrot.lane.b32.xlu0 %v1658, 32
  %v1686 = vpop.permute.xlu0 %1685
  %v1687 = vsel %vm81, %v1686, 0
  %1689 = vmatpush.msra.mxu0 0.0
  %1690 = vmatpush.msra.mxu0 0.0
  %1691 = vmatpush.msra.mxu0 0.0
  %1692 = vmatpush.msra.mxu0 0.0
  %1693 = vmatpush.msra.mxu0 0.0
  %1694 = vmatpush.msra.mxu0 0.0
  %1695 = vmatpush.msra.mxu0 0.0
  %1696 = vmatpush.msra.mxu0 0.0
  %1697 = vmatpush.msra.mxu0 0.0
  %1698 = vmatpush.msra.mxu0 0.0
  %1699 = vmatpush.msra.mxu0 0.0
  %1700 = vmatpush.msra.mxu0 0.0
  %1701 = vmatpush.msra.mxu0 %v71
  %1702 = vmatpush.msra.mxu0 %v70
  %1703 = vmatpush.msra.mxu0 %v69
  %1704 = vmatpush.msra.mxu0 %v68
  %1705 = vmatmul.f32.gmra.mxu0 %v1687
  %v1706 = vpop.f32.mrf.mxu0
  %v1707 = vadd.f32 %v1682, %v1706
  %1708 = vdwg.mxu0
  %v1709 = vadd.f32 %v1707, %v78
  %v1710 = vmul.f32 %v1709, %v46
  %v1711 = vxor.u32 %v1710, 2147483648
  %v1712 = vmul.f32 %v1711, 1.442695
  %v1713 = vpow.pop %v1712
  %v1714 = vadd.f32 %v1713, 1.0
  %v1715 = vrcp.pop %v1714
  %v1716 = vmul.f32 %v1714, %v1715
  %v1717 = vsub.f32 1.0, %v1716
  %v1718 = vmul.f32 %v1715, %v1717
  %v1719 = vadd.f32 %v1715, %v1718
  %vm1720 = vweird.f32 %v1714
  %vm1721 = vweird.f32 %v1715
  %vm1722 = vmor %vm1720, %vm1721
  %v1723 = vsel %vm1722, %v1715, %v1719
  %v1724 = vand.u32 2147483647, %v1714
  %vm1725 = vcmp.eq.f32.partialorder %v1724, 8.507059e+37
  %v1726 = vand.u32 %v1714, 2147483648
  %v1727 = vor.u32 1.1754944e-38, %v1726
  %v1728 = vsel %vm1725, %v1727, %v1723
  %v1729 = vmul.f32 1.0, %v1728
  %v1730 = vmul.f32 %v1729, %v46
  %v1731 = vadd.f32 %v1730, %v47
  %v1732 = vmul.f32 %v1731, %v1590
  %1734 = vrot.lane.b32.xlu0 %v1731, 64
  %v1735 = vpop.permute.xlu0 %1734
  %v1737 = vmul.f32 %v1731, %v1735
  %1739 = vrot.lane.b32.xlu0 %v1737, 32
  %v1740 = vpop.permute.xlu0 %1739
  %v1742 = vadd.f32 %v1732, %v1740
  %v1743 = vtanh.pop %v1742
  %1745 = vrot.lane.b32.xlu0 %v1743, 64
  %v1746 = vpop.permute.xlu0 %1745
  %v1748 = vmul.f32 %v1731, %v1746
  %s1749 = scalar_lea.vmem %s1, 24
  %v1750 = vld [vmem:[%s1749] sm:$0xff]
  %1751 = vmatpush.msra.mxu0 0.0
  %1752 = vmatpush.msra.mxu0 0.0
  %1753 = vmatpush.msra.mxu0 0.0
  %1754 = vmatpush.msra.mxu0 0.0
  %1755 = vmatpush.msra.mxu0 0.0
  %1756 = vmatpush.msra.mxu0 0.0
  %1757 = vmatpush.msra.mxu0 0.0
  %1758 = vmatpush.msra.mxu0 0.0
  %1759 = vmatpush.msra.mxu0 0.0
  %1760 = vmatpush.msra.mxu0 0.0
  %1761 = vmatpush.msra.mxu0 0.0
  %1762 = vmatpush.msra.mxu0 0.0
  %1763 = vmatpush.msra.mxu0 %v67
  %1764 = vmatpush.msra.mxu0 %v66
  %1765 = vmatpush.msra.mxu0 %v65
  %1766 = vmatpush.msra.mxu0 %v64
  %1767 = vmatmul.f32.gmra.mxu0 %v1687
  %v1768 = vpop.f32.mrf.mxu0
  %v1769 = vadd.f32 0.0, %v1768
  %1770 = vdwg.mxu0
  %v1771 = vadd.f32 %v1750, %v1769
  %v1772 = vmul.f32 %v1771, %v46
  %v1773 = vxor.u32 %v1772, 2147483648
  %v1774 = vmul.f32 %v1773, 1.442695
  %v1775 = vpow.pop %v1774
  %v1776 = vadd.f32 %v1775, 1.0
  %v1777 = vrcp.pop %v1776
  %v1778 = vmul.f32 %v1776, %v1777
  %v1779 = vsub.f32 1.0, %v1778
  %v1780 = vmul.f32 %v1777, %v1779
  %v1781 = vadd.f32 %v1777, %v1780
  %vm1782 = vweird.f32 %v1776
  %vm1783 = vweird.f32 %v1777
  %vm1784 = vmor %vm1782, %vm1783
  %v1785 = vsel %vm1784, %v1777, %v1781
  %v1786 = vand.u32 2147483647, %v1776
  %vm1787 = vcmp.eq.f32.partialorder %v1786, 8.507059e+37
  %v1788 = vand.u32 %v1776, 2147483648
  %v1789 = vor.u32 1.1754944e-38, %v1788
  %v1790 = vsel %vm1787, %v1789, %v1785
  %v1791 = vmul.f32 1.0, %v1790
  %v1792 = vmul.f32 %v1791, %v46
  %v1793 = vadd.f32 %v1792, %v47
  %v1794 = vmul.f32 %v1793, %v1652
  %1796 = vrot.lane.b32.xlu0 %v1793, 64
  %v1797 = vpop.permute.xlu0 %1796
  %v1799 = vmul.f32 %v1793, %v1797
  %1801 = vrot.lane.b32.xlu0 %v1799, 32
  %v1802 = vpop.permute.xlu0 %1801
  %v1804 = vadd.f32 %v1794, %v1802
  %v1805 = vtanh.pop %v1804
  %1807 = vrot.lane.b32.xlu0 %v1805, 64
  %v1808 = vpop.permute.xlu0 %1807
  %v1810 = vmul.f32 %v1793, %v1808
  %1812 = vrot.lane.b32.xlu0 %v1748, 32
  %v1813 = vpop.permute.xlu0 %1812
  %v1814 = vsel %vm81, %v1813, 0
  %1816 = vmatpush.msra.mxu0 0.0
  %1817 = vmatpush.msra.mxu0 0.0
  %1818 = vmatpush.msra.mxu0 0.0
  %1819 = vmatpush.msra.mxu0 0.0
  %1820 = vmatpush.msra.mxu0 0.0
  %1821 = vmatpush.msra.mxu0 0.0
  %1822 = vmatpush.msra.mxu0 0.0
  %1823 = vmatpush.msra.mxu0 0.0
  %1824 = vmatpush.msra.mxu0 0.0
  %1825 = vmatpush.msra.mxu0 0.0
  %1826 = vmatpush.msra.mxu0 0.0
  %1827 = vmatpush.msra.mxu0 0.0
  %1828 = vmatpush.msra.mxu0 %v75
  %1829 = vmatpush.msra.mxu0 %v74
  %1830 = vmatpush.msra.mxu0 %v73
  %1831 = vmatpush.msra.mxu0 %v72
  %1832 = vmatmul.f32.gmra.mxu0 %v1814
  %v1833 = vpop.f32.mrf.mxu0
  %v1834 = vadd.f32 0.0, %v1833
  %1835 = vdwg.mxu0
  %1837 = vrot.lane.b32.xlu0 %v1810, 32
  %v1838 = vpop.permute.xlu0 %1837
  %v1839 = vsel %vm81, %v1838, 0
  %1841 = vmatpush.msra.mxu0 0.0
  %1842 = vmatpush.msra.mxu0 0.0
  %1843 = vmatpush.msra.mxu0 0.0
  %1844 = vmatpush.msra.mxu0 0.0
  %1845 = vmatpush.msra.mxu0 0.0
  %1846 = vmatpush.msra.mxu0 0.0
  %1847 = vmatpush.msra.mxu0 0.0
  %1848 = vmatpush.msra.mxu0 0.0
  %1849 = vmatpush.msra.mxu0 0.0
  %1850 = vmatpush.msra.mxu0 0.0
  %1851 = vmatpush.msra.mxu0 0.0
  %1852 = vmatpush.msra.mxu0 0.0
  %1853 = vmatpush.msra.mxu0 %v71
  %1854 = vmatpush.msra.mxu0 %v70
  %1855 = vmatpush.msra.mxu0 %v69
  %1856 = vmatpush.msra.mxu0 %v68
  %1857 = vmatmul.f32.gmra.mxu0 %v1839
  %v1858 = vpop.f32.mrf.mxu0
  %v1859 = vadd.f32 %v1834, %v1858
  %1860 = vdwg.mxu0
  %v1861 = vadd.f32 %v1859, %v78
  %v1862 = vmul.f32 %v1861, %v46
  %v1863 = vxor.u32 %v1862, 2147483648
  %v1864 = vmul.f32 %v1863, 1.442695
  %v1865 = vpow.pop %v1864
  %v1866 = vadd.f32 %v1865, 1.0
  %v1867 = vrcp.pop %v1866
  %v1868 = vmul.f32 %v1866, %v1867
  %v1869 = vsub.f32 1.0, %v1868
  %v1870 = vmul.f32 %v1867, %v1869
  %v1871 = vadd.f32 %v1867, %v1870
  %vm1872 = vweird.f32 %v1866
  %vm1873 = vweird.f32 %v1867
  %vm1874 = vmor %vm1872, %vm1873
  %v1875 = vsel %vm1874, %v1867, %v1871
  %v1876 = vand.u32 2147483647, %v1866
  %vm1877 = vcmp.eq.f32.partialorder %v1876, 8.507059e+37
  %v1878 = vand.u32 %v1866, 2147483648
  %v1879 = vor.u32 1.1754944e-38, %v1878
  %v1880 = vsel %vm1877, %v1879, %v1875
  %v1881 = vmul.f32 1.0, %v1880
  %v1882 = vmul.f32 %v1881, %v46
  %v1883 = vadd.f32 %v1882, %v47
  %v1884 = vmul.f32 %v1883, %v1742
  %1886 = vrot.lane.b32.xlu0 %v1883, 64
  %v1887 = vpop.permute.xlu0 %1886
  %v1889 = vmul.f32 %v1883, %v1887
  %1891 = vrot.lane.b32.xlu0 %v1889, 32
  %v1892 = vpop.permute.xlu0 %1891
  %v1894 = vadd.f32 %v1884, %v1892
  %v1895 = vtanh.pop %v1894
  %1897 = vrot.lane.b32.xlu0 %v1895, 64
  %v1898 = vpop.permute.xlu0 %1897
  %v1900 = vmul.f32 %v1883, %v1898
  %s1901 = scalar_lea.vmem %s1, 32
  %v1902 = vld [vmem:[%s1901] sm:$0xff]
  %1903 = vmatpush.msra.mxu0 0.0
  %1904 = vmatpush.msra.mxu0 0.0
  %1905 = vmatpush.msra.mxu0 0.0
  %1906 = vmatpush.msra.mxu0 0.0
  %1907 = vmatpush.msra.mxu0 0.0
  %1908 = vmatpush.msra.mxu0 0.0
  %1909 = vmatpush.msra.mxu0 0.0
  %1910 = vmatpush.msra.mxu0 0.0
  %1911 = vmatpush.msra.mxu0 0.0
  %1912 = vmatpush.msra.mxu0 0.0
  %1913 = vmatpush.msra.mxu0 0.0
  %1914 = vmatpush.msra.mxu0 0.0
  %1915 = vmatpush.msra.mxu0 %v67
  %1916 = vmatpush.msra.mxu0 %v66
  %1917 = vmatpush.msra.mxu0 %v65
  %1918 = vmatpush.msra.mxu0 %v64
  %1919 = vmatmul.f32.gmra.mxu0 %v1839
  %v1920 = vpop.f32.mrf.mxu0
  %v1921 = vadd.f32 0.0, %v1920
  %1922 = vdwg.mxu0
  %v1923 = vadd.f32 %v1902, %v1921
  %v1924 = vmul.f32 %v1923, %v46
  %v1925 = vxor.u32 %v1924, 2147483648
  %v1926 = vmul.f32 %v1925, 1.442695
  %v1927 = vpow.pop %v1926
  %v1928 = vadd.f32 %v1927, 1.0
  %v1929 = vrcp.pop %v1928
  %v1930 = vmul.f32 %v1928, %v1929
  %v1931 = vsub.f32 1.0, %v1930
  %v1932 = vmul.f32 %v1929, %v1931
  %v1933 = vadd.f32 %v1929, %v1932
  %vm1934 = vweird.f32 %v1928
  %vm1935 = vweird.f32 %v1929
  %vm1936 = vmor %vm1934, %vm1935
  %v1937 = vsel %vm1936, %v1929, %v1933
  %v1938 = vand.u32 2147483647, %v1928
  %vm1939 = vcmp.eq.f32.partialorder %v1938, 8.507059e+37
  %v1940 = vand.u32 %v1928, 2147483648
  %v1941 = vor.u32 1.1754944e-38, %v1940
  %v1942 = vsel %vm1939, %v1941, %v1937
  %v1943 = vmul.f32 1.0, %v1942
  %v1944 = vmul.f32 %v1943, %v46
  %v1945 = vadd.f32 %v1944, %v47
  %v1946 = vmul.f32 %v1945, %v1804
  %1948 = vrot.lane.b32.xlu0 %v1945, 64
  %v1949 = vpop.permute.xlu0 %1948
  %v1951 = vmul.f32 %v1945, %v1949
  %1953 = vrot.lane.b32.xlu0 %v1951, 32
  %v1954 = vpop.permute.xlu0 %1953
  %v1956 = vadd.f32 %v1946, %v1954
  %v1957 = vtanh.pop %v1956
  %1959 = vrot.lane.b32.xlu0 %v1957, 64
  %v1960 = vpop.permute.xlu0 %1959
  %v1962 = vmul.f32 %v1945, %v1960
  %1964 = vrot.lane.b32.xlu0 %v1900, 32
  %v1965 = vpop.permute.xlu0 %1964
  %v1966 = vsel %vm81, %v1965, 0
  %1968 = vmatpush.msra.mxu0 0.0
  %1969 = vmatpush.msra.mxu0 0.0
  %1970 = vmatpush.msra.mxu0 0.0
  %1971 = vmatpush.msra.mxu0 0.0
  %1972 = vmatpush.msra.mxu0 0.0
  %1973 = vmatpush.msra.mxu0 0.0
  %1974 = vmatpush.msra.mxu0 0.0
  %1975 = vmatpush.msra.mxu0 0.0
  %1976 = vmatpush.msra.mxu0 0.0
  %1977 = vmatpush.msra.mxu0 0.0
  %1978 = vmatpush.msra.mxu0 0.0
  %1979 = vmatpush.msra.mxu0 0.0
  %1980 = vmatpush.msra.mxu0 %v75
  %1981 = vmatpush.msra.mxu0 %v74
  %1982 = vmatpush.msra.mxu0 %v73
  %1983 = vmatpush.msra.mxu0 %v72
  %1984 = vmatmul.f32.gmra.mxu0 %v1966
  %v1985 = vpop.f32.mrf.mxu0
  %v1986 = vadd.f32 0.0, %v1985
  %1987 = vdwg.mxu0
  %1989 = vrot.lane.b32.xlu0 %v1962, 32
  %v1990 = vpop.permute.xlu0 %1989
  %v1991 = vsel %vm81, %v1990, 0
  %1993 = vmatpush.msra.mxu0 0.0
  %1994 = vmatpush.msra.mxu0 0.0
  %1995 = vmatpush.msra.mxu0 0.0
  %1996 = vmatpush.msra.mxu0 0.0
  %1997 = vmatpush.msra.mxu0 0.0
  %1998 = vmatpush.msra.mxu0 0.0
  %1999 = vmatpush.msra.mxu0 0.0
  %2000 = vmatpush.msra.mxu0 0.0
  %2001 = vmatpush.msra.mxu0 0.0
  %2002 = vmatpush.msra.mxu0 0.0
  %2003 = vmatpush.msra.mxu0 0.0
  %2004 = vmatpush.msra.mxu0 0.0
  %2005 = vmatpush.msra.mxu0 %v71
  %2006 = vmatpush.msra.mxu0 %v70
  %2007 = vmatpush.msra.mxu0 %v69
  %2008 = vmatpush.msra.mxu0 %v68
  %2009 = vmatmul.f32.gmra.mxu0 %v1991
  %v2010 = vpop.f32.mrf.mxu0
  %v2011 = vadd.f32 %v1986, %v2010
  %2012 = vdwg.mxu0
  %v2013 = vadd.f32 %v2011, %v78
  %v2014 = vmul.f32 %v2013, %v46
  %v2015 = vxor.u32 %v2014, 2147483648
  %v2016 = vmul.f32 %v2015, 1.442695
  %v2017 = vpow.pop %v2016
  %v2018 = vadd.f32 %v2017, 1.0
  %v2019 = vrcp.pop %v2018
  %v2020 = vmul.f32 %v2018, %v2019
  %v2021 = vsub.f32 1.0, %v2020
  %v2022 = vmul.f32 %v2019, %v2021
  %v2023 = vadd.f32 %v2019, %v2022
  %vm2024 = vweird.f32 %v2018
  %vm2025 = vweird.f32 %v2019
  %vm2026 = vmor %vm2024, %vm2025
  %v2027 = vsel %vm2026, %v2019, %v2023
  %v2028 = vand.u32 2147483647, %v2018
  %vm2029 = vcmp.eq.f32.partialorder %v2028, 8.507059e+37
  %v2030 = vand.u32 %v2018, 2147483648
  %v2031 = vor.u32 1.1754944e-38, %v2030
  %v2032 = vsel %vm2029, %v2031, %v2027
  %v2033 = vmul.f32 1.0, %v2032
  %v2034 = vmul.f32 %v2033, %v46
  %v2035 = vadd.f32 %v2034, %v47
  %v2036 = vmul.f32 %v2035, %v1894
  %2038 = vrot.lane.b32.xlu0 %v2035, 64
  %v2039 = vpop.permute.xlu0 %2038
  %v2041 = vmul.f32 %v2035, %v2039
  %2043 = vrot.lane.b32.xlu0 %v2041, 32
  %v2044 = vpop.permute.xlu0 %2043
  %v2046 = vadd.f32 %v2036, %v2044
  %v2047 = vtanh.pop %v2046
  %2049 = vrot.lane.b32.xlu0 %v2047, 64
  %v2050 = vpop.permute.xlu0 %2049
  %v2052 = vmul.f32 %v2035, %v2050
  %s2053 = scalar_lea.vmem %s1, 40
  %v2054 = vld [vmem:[%s2053] sm:$0xff]
  %2055 = vmatpush.msra.mxu0 0.0
  %2056 = vmatpush.msra.mxu0 0.0
  %2057 = vmatpush.msra.mxu0 0.0
  %2058 = vmatpush.msra.mxu0 0.0
  %2059 = vmatpush.msra.mxu0 0.0
  %2060 = vmatpush.msra.mxu0 0.0
  %2061 = vmatpush.msra.mxu0 0.0
  %2062 = vmatpush.msra.mxu0 0.0
  %2063 = vmatpush.msra.mxu0 0.0
  %2064 = vmatpush.msra.mxu0 0.0
  %2065 = vmatpush.msra.mxu0 0.0
  %2066 = vmatpush.msra.mxu0 0.0
  %2067 = vmatpush.msra.mxu0 %v67
  %2068 = vmatpush.msra.mxu0 %v66
  %2069 = vmatpush.msra.mxu0 %v65
  %2070 = vmatpush.msra.mxu0 %v64
  %2071 = vmatmul.f32.gmra.mxu0 %v1991
  %v2072 = vpop.f32.mrf.mxu0
  %v2073 = vadd.f32 0.0, %v2072
  %2074 = vdwg.mxu0
  %v2075 = vadd.f32 %v2054, %v2073
  %v2076 = vmul.f32 %v2075, %v46
  %v2077 = vxor.u32 %v2076, 2147483648
  %v2078 = vmul.f32 %v2077, 1.442695
  %v2079 = vpow.pop %v2078
  %v2080 = vadd.f32 %v2079, 1.0
  %v2081 = vrcp.pop %v2080
  %v2082 = vmul.f32 %v2080, %v2081
  %v2083 = vsub.f32 1.0, %v2082
  %v2084 = vmul.f32 %v2081, %v2083
  %v2085 = vadd.f32 %v2081, %v2084
  %vm2086 = vweird.f32 %v2080
  %vm2087 = vweird.f32 %v2081
  %vm2088 = vmor %vm2086, %vm2087
  %v2089 = vsel %vm2088, %v2081, %v2085
  %v2090 = vand.u32 2147483647, %v2080
  %vm2091 = vcmp.eq.f32.partialorder %v2090, 8.507059e+37
  %v2092 = vand.u32 %v2080, 2147483648
  %v2093 = vor.u32 1.1754944e-38, %v2092
  %v2094 = vsel %vm2091, %v2093, %v2089
  %v2095 = vmul.f32 1.0, %v2094
  %v2096 = vmul.f32 %v2095, %v46
  %v2097 = vadd.f32 %v2096, %v47
  %v2098 = vmul.f32 %v2097, %v1956
  %2100 = vrot.lane.b32.xlu0 %v2097, 64
  %v2101 = vpop.permute.xlu0 %2100
  %v2103 = vmul.f32 %v2097, %v2101
  %2105 = vrot.lane.b32.xlu0 %v2103, 32
  %v2106 = vpop.permute.xlu0 %2105
  %v2108 = vadd.f32 %v2098, %v2106
  %v2109 = vtanh.pop %v2108
  %2111 = vrot.lane.b32.xlu0 %v2109, 64
  %v2112 = vpop.permute.xlu0 %2111
  %v2114 = vmul.f32 %v2097, %v2112
  %2116 = vrot.lane.b32.xlu0 %v2052, 32
  %v2117 = vpop.permute.xlu0 %2116
  %v2118 = vsel %vm81, %v2117, 0
  %2120 = vmatpush.msra.mxu0 0.0
  %2121 = vmatpush.msra.mxu0 0.0
  %2122 = vmatpush.msra.mxu0 0.0
  %2123 = vmatpush.msra.mxu0 0.0
  %2124 = vmatpush.msra.mxu0 0.0
  %2125 = vmatpush.msra.mxu0 0.0
  %2126 = vmatpush.msra.mxu0 0.0
  %2127 = vmatpush.msra.mxu0 0.0
  %2128 = vmatpush.msra.mxu0 0.0
  %2129 = vmatpush.msra.mxu0 0.0
  %2130 = vmatpush.msra.mxu0 0.0
  %2131 = vmatpush.msra.mxu0 0.0
  %2132 = vmatpush.msra.mxu0 %v75
  %2133 = vmatpush.msra.mxu0 %v74
  %2134 = vmatpush.msra.mxu0 %v73
  %2135 = vmatpush.msra.mxu0 %v72
  %2136 = vmatmul.f32.gmra.mxu0 %v2118
  %v2137 = vpop.f32.mrf.mxu0
  %v2138 = vadd.f32 0.0, %v2137
  %2139 = vdwg.mxu0
  %2141 = vrot.lane.b32.xlu0 %v2114, 32
  %v2142 = vpop.permute.xlu0 %2141
  %v2143 = vsel %vm81, %v2142, 0
  %2145 = vmatpush.msra.mxu0 0.0
  %2146 = vmatpush.msra.mxu0 0.0
  %2147 = vmatpush.msra.mxu0 0.0
  %2148 = vmatpush.msra.mxu0 0.0
  %2149 = vmatpush.msra.mxu0 0.0
  %2150 = vmatpush.msra.mxu0 0.0
  %2151 = vmatpush.msra.mxu0 0.0
  %2152 = vmatpush.msra.mxu0 0.0
  %2153 = vmatpush.msra.mxu0 0.0
  %2154 = vmatpush.msra.mxu0 0.0
  %2155 = vmatpush.msra.mxu0 0.0
  %2156 = vmatpush.msra.mxu0 0.0
  %2157 = vmatpush.msra.mxu0 %v71
  %2158 = vmatpush.msra.mxu0 %v70
  %2159 = vmatpush.msra.mxu0 %v69
  %2160 = vmatpush.msra.mxu0 %v68
  %2161 = vmatmul.f32.gmra.mxu0 %v2143
  %v2162 = vpop.f32.mrf.mxu0
  %v2163 = vadd.f32 %v2138, %v2162
  %2164 = vdwg.mxu0
  %v2165 = vadd.f32 %v2163, %v78
  %v2166 = vmul.f32 %v2165, %v46
  %v2167 = vxor.u32 %v2166, 2147483648
  %v2168 = vmul.f32 %v2167, 1.442695
  %v2169 = vpow.pop %v2168
  %v2170 = vadd.f32 %v2169, 1.0
  %v2171 = vrcp.pop %v2170
  %v2172 = vmul.f32 %v2170, %v2171
  %v2173 = vsub.f32 1.0, %v2172
  %v2174 = vmul.f32 %v2171, %v2173
  %v2175 = vadd.f32 %v2171, %v2174
  %vm2176 = vweird.f32 %v2170
  %vm2177 = vweird.f32 %v2171
  %vm2178 = vmor %vm2176, %vm2177
  %v2179 = vsel %vm2178, %v2171, %v2175
  %v2180 = vand.u32 2147483647, %v2170
  %vm2181 = vcmp.eq.f32.partialorder %v2180, 8.507059e+37
  %v2182 = vand.u32 %v2170, 2147483648
  %v2183 = vor.u32 1.1754944e-38, %v2182
  %v2184 = vsel %vm2181, %v2183, %v2179
  %v2185 = vmul.f32 1.0, %v2184
  %v2186 = vmul.f32 %v2185, %v46
  %v2187 = vadd.f32 %v2186, %v47
  %v2188 = vmul.f32 %v2187, %v2046
  %2190 = vrot.lane.b32.xlu0 %v2187, 64
  %v2191 = vpop.permute.xlu0 %2190
  %v2193 = vmul.f32 %v2187, %v2191
  %2195 = vrot.lane.b32.xlu0 %v2193, 32
  %v2196 = vpop.permute.xlu0 %2195
  %v2198 = vadd.f32 %v2188, %v2196
  %v2199 = vtanh.pop %v2198
  %2201 = vrot.lane.b32.xlu0 %v2199, 64
  %v2202 = vpop.permute.xlu0 %2201
  %v2204 = vmul.f32 %v2187, %v2202
  %s2205 = scalar_lea.vmem %s1, 48
  %v2206 = vld [vmem:[%s2205] sm:$0xff]
  %2207 = vmatpush.msra.mxu0 0.0
  %2208 = vmatpush.msra.mxu0 0.0
  %2209 = vmatpush.msra.mxu0 0.0
  %2210 = vmatpush.msra.mxu0 0.0
  %2211 = vmatpush.msra.mxu0 0.0
  %2212 = vmatpush.msra.mxu0 0.0
  %2213 = vmatpush.msra.mxu0 0.0
  %2214 = vmatpush.msra.mxu0 0.0
  %2215 = vmatpush.msra.mxu0 0.0
  %2216 = vmatpush.msra.mxu0 0.0
  %2217 = vmatpush.msra.mxu0 0.0
  %2218 = vmatpush.msra.mxu0 0.0
  %2219 = vmatpush.msra.mxu0 %v67
  %2220 = vmatpush.msra.mxu0 %v66
  %2221 = vmatpush.msra.mxu0 %v65
  %2222 = vmatpush.msra.mxu0 %v64
  %2223 = vmatmul.f32.gmra.mxu0 %v2143
  %v2224 = vpop.f32.mrf.mxu0
  %v2225 = vadd.f32 0.0, %v2224
  %2226 = vdwg.mxu0
  %v2227 = vadd.f32 %v2206, %v2225
  %v2228 = vmul.f32 %v2227, %v46
  %v2229 = vxor.u32 %v2228, 2147483648
  %v2230 = vmul.f32 %v2229, 1.442695
  %v2231 = vpow.pop %v2230
  %v2232 = vadd.f32 %v2231, 1.0
  %v2233 = vrcp.pop %v2232
  %v2234 = vmul.f32 %v2232, %v2233
  %v2235 = vsub.f32 1.0, %v2234
  %v2236 = vmul.f32 %v2233, %v2235
  %v2237 = vadd.f32 %v2233, %v2236
  %vm2238 = vweird.f32 %v2232
  %vm2239 = vweird.f32 %v2233
  %vm2240 = vmor %vm2238, %vm2239
  %v2241 = vsel %vm2240, %v2233, %v2237
  %v2242 = vand.u32 2147483647, %v2232
  %vm2243 = vcmp.eq.f32.partialorder %v2242, 8.507059e+37
  %v2244 = vand.u32 %v2232, 2147483648
  %v2245 = vor.u32 1.1754944e-38, %v2244
  %v2246 = vsel %vm2243, %v2245, %v2241
  %v2247 = vmul.f32 1.0, %v2246
  %v2248 = vmul.f32 %v2247, %v46
  %v2249 = vadd.f32 %v2248, %v47
  %v2250 = vmul.f32 %v2249, %v2108
  %2252 = vrot.lane.b32.xlu0 %v2249, 64
  %v2253 = vpop.permute.xlu0 %2252
  %v2255 = vmul.f32 %v2249, %v2253
  %2257 = vrot.lane.b32.xlu0 %v2255, 32
  %v2258 = vpop.permute.xlu0 %2257
  %v2260 = vadd.f32 %v2250, %v2258
  %v2261 = vtanh.pop %v2260
  %2263 = vrot.lane.b32.xlu0 %v2261, 64
  %v2264 = vpop.permute.xlu0 %2263
  %v2266 = vmul.f32 %v2249, %v2264
  %2268 = vrot.lane.b32.xlu0 %v2204, 32
  %v2269 = vpop.permute.xlu0 %2268
  %v2270 = vsel %vm81, %v2269, 0
  %2272 = vmatpush.msra.mxu0 0.0
  %2273 = vmatpush.msra.mxu0 0.0
  %2274 = vmatpush.msra.mxu0 0.0
  %2275 = vmatpush.msra.mxu0 0.0
  %2276 = vmatpush.msra.mxu0 0.0
  %2277 = vmatpush.msra.mxu0 0.0
  %2278 = vmatpush.msra.mxu0 0.0
  %2279 = vmatpush.msra.mxu0 0.0
  %2280 = vmatpush.msra.mxu0 0.0
  %2281 = vmatpush.msra.mxu0 0.0
  %2282 = vmatpush.msra.mxu0 0.0
  %2283 = vmatpush.msra.mxu0 0.0
  %2284 = vmatpush.msra.mxu0 %v75
  %2285 = vmatpush.msra.mxu0 %v74
  %2286 = vmatpush.msra.mxu0 %v73
  %2287 = vmatpush.msra.mxu0 %v72
  %2288 = vmatmul.f32.gmra.mxu0 %v2270
  %v2289 = vpop.f32.mrf.mxu0
  %v2290 = vadd.f32 0.0, %v2289
  %2291 = vdwg.mxu0
  %2293 = vrot.lane.b32.xlu0 %v2266, 32
  %v2294 = vpop.permute.xlu0 %2293
  %v2295 = vsel %vm81, %v2294, 0
  %2297 = vmatpush.msra.mxu0 0.0
  %2298 = vmatpush.msra.mxu0 0.0
  %2299 = vmatpush.msra.mxu0 0.0
  %2300 = vmatpush.msra.mxu0 0.0
  %2301 = vmatpush.msra.mxu0 0.0
  %2302 = vmatpush.msra.mxu0 0.0
  %2303 = vmatpush.msra.mxu0 0.0
  %2304 = vmatpush.msra.mxu0 0.0
  %2305 = vmatpush.msra.mxu0 0.0
  %2306 = vmatpush.msra.mxu0 0.0
  %2307 = vmatpush.msra.mxu0 0.0
  %2308 = vmatpush.msra.mxu0 0.0
  %2309 = vmatpush.msra.mxu0 %v71
  %2310 = vmatpush.msra.mxu0 %v70
  %2311 = vmatpush.msra.mxu0 %v69
  %2312 = vmatpush.msra.mxu0 %v68
  %2313 = vmatmul.f32.gmra.mxu0 %v2295
  %v2314 = vpop.f32.mrf.mxu0
  %v2315 = vadd.f32 %v2290, %v2314
  %2316 = vdwg.mxu0
  %v2317 = vadd.f32 %v2315, %v78
  %v2318 = vmul.f32 %v2317, %v46
  %v2319 = vxor.u32 %v2318, 2147483648
  %v2320 = vmul.f32 %v2319, 1.442695
  %v2321 = vpow.pop %v2320
  %v2322 = vadd.f32 %v2321, 1.0
  %v2323 = vrcp.pop %v2322
  %v2324 = vmul.f32 %v2322, %v2323
  %v2325 = vsub.f32 1.0, %v2324
  %v2326 = vmul.f32 %v2323, %v2325
  %v2327 = vadd.f32 %v2323, %v2326
  %vm2328 = vweird.f32 %v2322
  %vm2329 = vweird.f32 %v2323
  %vm2330 = vmor %vm2328, %vm2329
  %v2331 = vsel %vm2330, %v2323, %v2327
  %v2332 = vand.u32 2147483647, %v2322
  %vm2333 = vcmp.eq.f32.partialorder %v2332, 8.507059e+37
  %v2334 = vand.u32 %v2322, 2147483648
  %v2335 = vor.u32 1.1754944e-38, %v2334
  %v2336 = vsel %vm2333, %v2335, %v2331
  %v2337 = vmul.f32 1.0, %v2336
  %v2338 = vmul.f32 %v2337, %v46
  %v2339 = vadd.f32 %v2338, %v47
  %v2340 = vmul.f32 %v2339, %v2198
  %2342 = vrot.lane.b32.xlu0 %v2339, 64
  %v2343 = vpop.permute.xlu0 %2342
  %v2345 = vmul.f32 %v2339, %v2343
  %2347 = vrot.lane.b32.xlu0 %v2345, 32
  %v2348 = vpop.permute.xlu0 %2347
  %v2350 = vadd.f32 %v2340, %v2348
  %v2351 = vtanh.pop %v2350
  %2353 = vrot.lane.b32.xlu0 %v2351, 64
  %v2354 = vpop.permute.xlu0 %2353
  %v2356 = vmul.f32 %v2339, %v2354
  %v2357 = vld [vmem:[%s10] sm:$0xff]
  %v2358 = vld [vmem:[%s10 + $0x8] sm:$0xff]
  %v2359 = vld [vmem:[%s10 + $0x10] sm:$0xff]
  %v2360 = vld [vmem:[%s10 + $0x18] sm:$0xff]
  %v2361 = vld [vmem:[%s11] sm:$0x1]
  %v2363 = vperm.slane %v2361, 0
  %2366 = vrot.lane.b32.xlu0 %v2356, 32
  %v2367 = vpop.permute.xlu0 %2366
  %v2368 = vsel %vm81, %v2367, 0
  %2370 = vmatpush.msra.mxu0 0.0
  %2371 = vmatpush.msra.mxu0 0.0
  %2372 = vmatpush.msra.mxu0 0.0
  %2373 = vmatpush.msra.mxu0 0.0
  %2374 = vmatpush.msra.mxu0 0.0
  %2375 = vmatpush.msra.mxu0 0.0
  %2376 = vmatpush.msra.mxu0 0.0
  %2377 = vmatpush.msra.mxu0 0.0
  %2378 = vmatpush.msra.mxu0 0.0
  %2379 = vmatpush.msra.mxu0 0.0
  %2380 = vmatpush.msra.mxu0 0.0
  %2381 = vmatpush.msra.mxu0 0.0
  %2382 = vmatpush.msra.mxu0 %v2360
  %2383 = vmatpush.msra.mxu0 %v2359
  %2384 = vmatpush.msra.mxu0 %v2358
  %2385 = vmatpush.msra.mxu0 %v2357
  %2386 = vmatmul.f32.gmra.mxu0 %v1510
  %v2387 = vpop.f32.mrf.mxu0
  %v2388 = vadd.f32 %v2363, %v2387
  %2389 = vmatmul.f32.gmra.mxu0 %v1662
  %v2390 = vpop.f32.mrf.mxu0
  %v2391 = vadd.f32 %v2363, %v2390
  %2392 = vmatmul.f32.gmra.mxu0 %v1814
  %v2393 = vpop.f32.mrf.mxu0
  %v2394 = vadd.f32 %v2363, %v2393
  %2395 = vmatmul.f32.gmra.mxu0 %v1966
  %v2396 = vpop.f32.mrf.mxu0
  %v2397 = vadd.f32 %v2363, %v2396
  %2398 = vmatmul.f32.gmra.mxu0 %v2118
  %v2399 = vpop.f32.mrf.mxu0
  %v2400 = vadd.f32 %v2363, %v2399
  %2401 = vmatmul.f32.gmra.mxu0 %v2270
  %v2402 = vpop.f32.mrf.mxu0
  %v2403 = vadd.f32 %v2363, %v2402
  %2404 = vmatmul.f32.gmra.mxu0 %v2368
  %v2405 = vpop.f32.mrf.mxu0
  %v2406 = vadd.f32 %v2363, %v2405
  %2407 = vdwg.mxu0
  %2408 = vst [vmem:[%s12] sm:$0xff] %v2388
  %2409 = vst [vmem:[%s12 + $0x8] sm:$0xff] %v2391
  %2410 = vst [vmem:[%s12 + $0x10] sm:$0xff] %v2394
  %2411 = vst [vmem:[%s12 + $0x18] sm:$0xff] %v2397
  %2412 = vst [vmem:[%s12 + $0x20] sm:$0xff] %v2400
  %2413 = vst [vmem:[%s12 + $0x28] sm:$0xff] %v2403
  %2414 = vst [vmem:[%s12 + $0x30] sm:$0xff] %v2406
  // Predicated region
  $region50: #{seq2seq_forward.1} parent=0 // pred_check
    _
  $region51: #{seq2seq_forward.1} parent=0 // pred_check_branch
    %2416 = sbr.rel (0) target = $region53
  $region52: #{seq2seq_forward.1} parent=0 // pred_region
    _
  $region53: #{seq2seq_forward.1} parent=0 // pred_fallthru
    _
  // Predicated region
  $region54: #{seq2seq_forward.1} parent=0 // pred_check
    _
  $region55: #{seq2seq_forward.1} parent=0 // pred_check_branch
    %2418 = sbr.rel (0) target = $region57
  $region56: #{seq2seq_forward.1} parent=0 // pred_region
    _
  $region57: #{seq2seq_forward.1} parent=0 // pred_fallthru
    _

</llo_original>
